<compile_context>
chip_gen: v7x
topology: tpu7x:2x2x1
jax: 0.10.0
libtpu: 0.0.40
codegen_flags: <defaults>
</compile_context>

<pallas_src>
import functools

import jax
import jax.numpy as jnp
import numpy as np
from jax.experimental import pallas as pl
from jax.experimental.pallas import tpu as pltpu

K = 7
PAD = (K - 1) // 2
BN_EPS = 1e-5
LANE = 128


def _attention_gate_kernel(x_ref, mask_ref, w_ref, bn_ref, o_ref, *,
                           wp, n_valid, n_batch):
    """Single invocation: ZPool -> shift-composed 7x7 conv -> BN -> sigmoid gate."""
    mask = mask_ref[...]                        # (1, LPAD), 1.0 on valid pixels
    lpad = mask.shape[-1]

    def conv7x7(z_max, z_mean):
        # Horizontal taps first: 7 lane-rolled copies per channel, combined per
        # kernel-row with the 49 scalar taps on the VPU; then 7 row-shifts
        # (rolls by multiples of wp) finish the 2-D stencil.  Wrapped lanes read
        # only the zero border / zero tail, so this reproduces zero-padded
        # 'same' convolution exactly on the valid pixels.
        def hrolls(plane):
            out = []
            for kw in range(K):
                sh = (PAD - kw) % lpad          # static shift
                out.append(plane if sh == 0 else pltpu.roll(plane, sh, axis=1))
            return out

        hmax = hrolls(z_max)                    # channel 0 = max
        hmean = hrolls(z_mean)                  # channel 1 = mean
        acc = None
        for kh in range(K):
            row = None
            for kw in range(K):
                t = (hmax[kw] * w_ref[kh * K + kw]
                     + hmean[kw] * w_ref[K * K + kh * K + kw])
                row = t if row is None else row + t
            sh = ((PAD - kh) * wp) % lpad
            rowr = row if sh == 0 else pltpu.roll(row, sh, axis=1)
            acc = rowr if acc is None else acc + rowr
        return acc                              # (1, LPAD)

    # Pass 1: ZPool + conv per batch element (computed once, kept live).
    convs = []
    total = jnp.float32(0.0)
    for n in range(n_batch):
        xn = x_ref[n].astype(jnp.float32)                   # (C, LPAD)
        z_max = jnp.max(xn, axis=0, keepdims=True)          # (1, LPAD)
        z_mean = jnp.mean(xn, axis=0, keepdims=True)        # (1, LPAD)
        acc = conv7x7(z_max, z_mean)
        convs.append(acc)
        total = total + jnp.sum(acc * mask)

    inv_m = jnp.float32(1.0 / n_valid)
    mu = total * inv_m

    # Pass 2: two-pass (numerically stable) biased batch variance over valid pixels.
    sq = jnp.float32(0.0)
    for n in range(n_batch):
        d = (convs[n] - mu) * mask
        sq = sq + jnp.sum(d * d)
    var = sq * inv_m
    inv_std = jax.lax.rsqrt(var + BN_EPS)
    g = inv_std * bn_ref[0]                     # fold gamma into the scale
    b = bn_ref[1]

    # Pass 3: sigmoid gate and full-width lane-dense output stores.
    for n in range(n_batch):
        scale = jax.nn.sigmoid((convs[n] - mu) * g + b)     # (1, LPAD)
        xn = x_ref[n].astype(jnp.float32)                   # cheap VMEM re-read
        o_ref[n] = (xn * scale).astype(o_ref.dtype)


def _pad_to_lanes(a, h, w):
    """Zero-pad (..., h, w) -> (h+PAD, w+PAD), flatten spatial, then pad the tail
    (with at least PAD extra zero lanes so cyclic-roll wrap-around lands on
    zeros) up to a 128-lane multiple."""
    hp, wp = h + PAD, w + PAD
    l = hp * wp
    lpad = ((l + PAD + LANE - 1) // LANE) * LANE
    lead = a.shape[:-2]
    ap = jnp.pad(a, [(0, 0)] * len(lead) + [(0, PAD), (0, PAD)])
    af = ap.reshape(*lead, l)
    return jnp.pad(af, [(0, 0)] * len(lead) + [(0, lpad - l)]), lpad


def attention_gate(x, conv_w, bn_params):
    """x: (N, C, H, W) f32; conv_w: (1, 2, 7, 7) f32; bn_params: (2,) = [gamma, beta]."""
    N, C, H, W = x.shape
    hp, wp = H + PAD, W + PAD

    xp, lpad = _pad_to_lanes(x.astype(jnp.float32), H, W)               # (N, C, LPAD)
    mask, _ = _pad_to_lanes(jnp.ones((1, H, W), jnp.float32), H, W)     # (1, LPAD)

    kernel = functools.partial(_attention_gate_kernel, wp=wp,
                               n_valid=N * H * W, n_batch=N)

    out_flat = pl.pallas_call(
        kernel,
        out_shape=jax.ShapeDtypeStruct((N, C, lpad), x.dtype),
        grid_spec=pltpu.PrefetchScalarGridSpec(
            num_scalar_prefetch=0,
            grid=(1,),                                       # whole problem in one step
            in_specs=[
                pl.BlockSpec((N, C, lpad), lambda i: (0, 0, 0)),      # x, lane-dense
                pl.BlockSpec((1, lpad), lambda i: (0, 0)),            # valid-pixel mask
                pl.BlockSpec(memory_space=pltpu.MemorySpace.SMEM),    # conv taps (98,)
                pl.BlockSpec(memory_space=pltpu.MemorySpace.SMEM),    # [gamma, beta]
            ],
            out_specs=pl.BlockSpec((N, C, lpad), lambda i: (0, 0, 0)),
        ),
        compiler_params=pltpu.CompilerParams(
            dimension_semantics=("arbitrary",),
        ),
    )(xp, mask, conv_w.reshape(-1), bn_params)

    out = out_flat[:, :, :hp * wp].reshape(N, C, hp, wp)[:, :, :H, :W]
    return out


def attention_gate_reference(x, conv_w, bn_params):
    """Pure-JAX reference with identical semantics (for validation)."""
    x_max = jnp.max(x, axis=1, keepdims=True)
    x_mean = jnp.mean(x, axis=1, keepdims=True)
    zp = jnp.concatenate([x_max, x_mean], axis=1)
    out = jax.lax.conv_general_dilated(
        zp, conv_w, window_strides=(1, 1), padding=[(PAD, PAD), (PAD, PAD)],
        dimension_numbers=("NCHW", "OIHW", "NCHW"))
    mu = jnp.mean(out)
    var = jnp.mean((out - mu) ** 2)
    y = (out - mu) / jnp.sqrt(var + BN_EPS) * bn_params[0] + bn_params[1]
    return x * jax.nn.sigmoid(y)


if __name__ == "__main__":
    key = jax.random.PRNGKey(0)
    kx, kw = jax.random.split(key)

    N, C, H, W = 2, 4, 16, 16
    x = jax.random.normal(kx, (N, C, H, W), jnp.float32)

    # Deterministic Conv2d(2, 1, 7, bias=False) init (kaiming-uniform-style bound).
    fan_in = 2 * K * K
    bound = float(1.0 / np.sqrt(fan_in))
    conv_w = jax.random.uniform(kw, (1, 2, K, K), jnp.float32, -bound, bound)

    # BatchNorm2d default affine init: gamma=1, beta=0.
    bn_params = jnp.array([1.0, 0.0], jnp.float32)

    out = attention_gate(x, conv_w, bn_params)
    out = jax.block_until_ready(out)

    ref = attention_gate_reference(x, conv_w, bn_params)
    np.testing.assert_allclose(np.asarray(out), np.asarray(ref), rtol=1e-5, atol=1e-5)

    print("KERNEL_OK")
</pallas_src>

<mosaic_0001>
module attributes {stable_mosaic.version = 11 : i64} {
  func.func @_attention_gate_kernel(%arg0: i32, %arg1: memref<2x4x384xf32, #tpu.memory_space<vmem>>, %arg2: memref<1x384xf32, #tpu.memory_space<vmem>>, %arg3: memref<98xf32, #tpu.memory_space<smem>>, %arg4: memref<2xf32, #tpu.memory_space<smem>>, %arg5: memref<2x4x384xf32, #tpu.memory_space<vmem>>) attributes {dimension_semantics = [#tpu.dimension_semantics<arbitrary>], iteration_bounds = array<i64: 1>, scalar_prefetch = 0 : i64, scratch_operands = 0 : i64, tpu.core_type = #tpu.core_type<tc>, window_params = [{pipeline_mode = #tpu.pipeline_mode<synchronous>, transform_indices = @transform_0, window_bounds = array<i64: 2, 4, 384>}, {pipeline_mode = #tpu.pipeline_mode<synchronous>, transform_indices = @transform_1, window_bounds = array<i64: 1, 384>}, {transform_indices = @transform_2, window_bounds = array<i64: 98>}, {transform_indices = @transform_3, window_bounds = array<i64: 2>}, {pipeline_mode = #tpu.pipeline_mode<synchronous>, transform_indices = @transform_4, window_bounds = array<i64: 2, 4, 384>}]} {
    %c0 = arith.constant 0 : index
    %c0_0 = arith.constant 0 : index
    %0 = vector.load %arg2[%c0, %c0_0] : memref<1x384xf32, #tpu.memory_space<vmem>>, vector<1x384xf32>
    %c0_1 = arith.constant 0 : index
    %c0_2 = arith.constant 0 : index
    %c0_3 = arith.constant 0 : index
    %1 = vector.load %arg1[%c0_1, %c0_2, %c0_3] : memref<2x4x384xf32, #tpu.memory_space<vmem>>, vector<1x4x384xf32>
    %2 = vector.shape_cast %1 : vector<1x4x384xf32> to vector<4x384xf32>
    %cst = arith.constant dense<0xFF800000> : vector<384xf32>
    %3 = vector.multi_reduction <maximumf>, %2, %cst [0] : vector<4x384xf32> to vector<384xf32>
    %4 = vector.shape_cast %3 : vector<384xf32> to vector<1x384xf32>
    %cst_4 = arith.constant dense<0.000000e+00> : vector<384xf32>
    %5 = vector.multi_reduction <add>, %2, %cst_4 [0] : vector<4x384xf32> to vector<384xf32>
    %6 = vector.shape_cast %5 : vector<384xf32> to vector<1x384xf32>
    %cst_5 = arith.constant 4.000000e+00 : f32
    %7 = vector.broadcast %cst_5 : f32 to vector<1x384xf32>
    %8 = arith.divf %6, %7 : vector<1x384xf32>
    %c3_i32 = arith.constant 3 : i32
    %9 = tpu.dynamic_rotate %4 by %c3_i32 dim 1 : vector<1x384xf32>, i32 -> vector<1x384xf32>
    %c2_i32 = arith.constant 2 : i32
    %10 = tpu.dynamic_rotate %4 by %c2_i32 dim 1 : vector<1x384xf32>, i32 -> vector<1x384xf32>
    %c1_i32 = arith.constant 1 : i32
    %11 = tpu.dynamic_rotate %4 by %c1_i32 dim 1 : vector<1x384xf32>, i32 -> vector<1x384xf32>
    %c383_i32 = arith.constant 383 : i32
    %12 = tpu.dynamic_rotate %4 by %c383_i32 dim 1 : vector<1x384xf32>, i32 -> vector<1x384xf32>
    %c382_i32 = arith.constant 382 : i32
    %13 = tpu.dynamic_rotate %4 by %c382_i32 dim 1 : vector<1x384xf32>, i32 -> vector<1x384xf32>
    %c381_i32 = arith.constant 381 : i32
    %14 = tpu.dynamic_rotate %4 by %c381_i32 dim 1 : vector<1x384xf32>, i32 -> vector<1x384xf32>
    %c3_i32_6 = arith.constant 3 : i32
    %15 = tpu.dynamic_rotate %8 by %c3_i32_6 dim 1 : vector<1x384xf32>, i32 -> vector<1x384xf32>
    %c2_i32_7 = arith.constant 2 : i32
    %16 = tpu.dynamic_rotate %8 by %c2_i32_7 dim 1 : vector<1x384xf32>, i32 -> vector<1x384xf32>
    %c1_i32_8 = arith.constant 1 : i32
    %17 = tpu.dynamic_rotate %8 by %c1_i32_8 dim 1 : vector<1x384xf32>, i32 -> vector<1x384xf32>
    %c383_i32_9 = arith.constant 383 : i32
    %18 = tpu.dynamic_rotate %8 by %c383_i32_9 dim 1 : vector<1x384xf32>, i32 -> vector<1x384xf32>
    %c382_i32_10 = arith.constant 382 : i32
    %19 = tpu.dynamic_rotate %8 by %c382_i32_10 dim 1 : vector<1x384xf32>, i32 -> vector<1x384xf32>
    %c381_i32_11 = arith.constant 381 : i32
    %20 = tpu.dynamic_rotate %8 by %c381_i32_11 dim 1 : vector<1x384xf32>, i32 -> vector<1x384xf32>
    %c0_12 = arith.constant 0 : index
    %21 = memref.load %arg3[%c0_12] : memref<98xf32, #tpu.memory_space<smem>>
    %22 = vector.broadcast %21 : f32 to vector<1x384xf32>
    %23 = arith.mulf %9, %22 : vector<1x384xf32>
    %c49 = arith.constant 49 : index
    %24 = memref.load %arg3[%c49] : memref<98xf32, #tpu.memory_space<smem>>
    %25 = vector.broadcast %24 : f32 to vector<1x384xf32>
    %26 = arith.mulf %15, %25 : vector<1x384xf32>
    %27 = arith.addf %23, %26 : vector<1x384xf32>
    %c1 = arith.constant 1 : index
    %28 = memref.load %arg3[%c1] : memref<98xf32, #tpu.memory_space<smem>>
    %29 = vector.broadcast %28 : f32 to vector<1x384xf32>
    %30 = arith.mulf %10, %29 : vector<1x384xf32>
    %c50 = arith.constant 50 : index
    %31 = memref.load %arg3[%c50] : memref<98xf32, #tpu.memory_space<smem>>
    %32 = vector.broadcast %31 : f32 to vector<1x384xf32>
    %33 = arith.mulf %16, %32 : vector<1x384xf32>
    %34 = arith.addf %30, %33 : vector<1x384xf32>
    %35 = arith.addf %27, %34 : vector<1x384xf32>
    %c2 = arith.constant 2 : index
    %36 = memref.load %arg3[%c2] : memref<98xf32, #tpu.memory_space<smem>>
    %37 = vector.broadcast %36 : f32 to vector<1x384xf32>
    %38 = arith.mulf %11, %37 : vector<1x384xf32>
    %c51 = arith.constant 51 : index
    %39 = memref.load %arg3[%c51] : memref<98xf32, #tpu.memory_space<smem>>
    %40 = vector.broadcast %39 : f32 to vector<1x384xf32>
    %41 = arith.mulf %17, %40 : vector<1x384xf32>
    %42 = arith.addf %38, %41 : vector<1x384xf32>
    %43 = arith.addf %35, %42 : vector<1x384xf32>
    %c3 = arith.constant 3 : index
    %44 = memref.load %arg3[%c3] : memref<98xf32, #tpu.memory_space<smem>>
    %45 = vector.broadcast %44 : f32 to vector<1x384xf32>
    %46 = arith.mulf %4, %45 : vector<1x384xf32>
    %c52 = arith.constant 52 : index
    %47 = memref.load %arg3[%c52] : memref<98xf32, #tpu.memory_space<smem>>
    %48 = vector.broadcast %47 : f32 to vector<1x384xf32>
    %49 = arith.mulf %8, %48 : vector<1x384xf32>
    %50 = arith.addf %46, %49 : vector<1x384xf32>
    %51 = arith.addf %43, %50 : vector<1x384xf32>
    %c4 = arith.constant 4 : index
    %52 = memref.load %arg3[%c4] : memref<98xf32, #tpu.memory_space<smem>>
    %53 = vector.broadcast %52 : f32 to vector<1x384xf32>
    %54 = arith.mulf %12, %53 : vector<1x384xf32>
    %c53 = arith.constant 53 : index
    %55 = memref.load %arg3[%c53] : memref<98xf32, #tpu.memory_space<smem>>
    %56 = vector.broadcast %55 : f32 to vector<1x384xf32>
    %57 = arith.mulf %18, %56 : vector<1x384xf32>
    %58 = arith.addf %54, %57 : vector<1x384xf32>
    %59 = arith.addf %51, %58 : vector<1x384xf32>
    %c5 = arith.constant 5 : index
    %60 = memref.load %arg3[%c5] : memref<98xf32, #tpu.memory_space<smem>>
    %61 = vector.broadcast %60 : f32 to vector<1x384xf32>
    %62 = arith.mulf %13, %61 : vector<1x384xf32>
    %c54 = arith.constant 54 : index
    %63 = memref.load %arg3[%c54] : memref<98xf32, #tpu.memory_space<smem>>
    %64 = vector.broadcast %63 : f32 to vector<1x384xf32>
    %65 = arith.mulf %19, %64 : vector<1x384xf32>
    %66 = arith.addf %62, %65 : vector<1x384xf32>
    %67 = arith.addf %59, %66 : vector<1x384xf32>
    %c6 = arith.constant 6 : index
    %68 = memref.load %arg3[%c6] : memref<98xf32, #tpu.memory_space<smem>>
    %69 = vector.broadcast %68 : f32 to vector<1x384xf32>
    %70 = arith.mulf %14, %69 : vector<1x384xf32>
    %c55 = arith.constant 55 : index
    %71 = memref.load %arg3[%c55] : memref<98xf32, #tpu.memory_space<smem>>
    %72 = vector.broadcast %71 : f32 to vector<1x384xf32>
    %73 = arith.mulf %20, %72 : vector<1x384xf32>
    %74 = arith.addf %70, %73 : vector<1x384xf32>
    %75 = arith.addf %67, %74 : vector<1x384xf32>
    %c57_i32 = arith.constant 57 : i32
    %76 = tpu.dynamic_rotate %75 by %c57_i32 dim 1 : vector<1x384xf32>, i32 -> vector<1x384xf32>
    %c7 = arith.constant 7 : index
    %77 = memref.load %arg3[%c7] : memref<98xf32, #tpu.memory_space<smem>>
    %78 = vector.broadcast %77 : f32 to vector<1x384xf32>
    %79 = arith.mulf %9, %78 : vector<1x384xf32>
    %c56 = arith.constant 56 : index
    %80 = memref.load %arg3[%c56] : memref<98xf32, #tpu.memory_space<smem>>
    %81 = vector.broadcast %80 : f32 to vector<1x384xf32>
    %82 = arith.mulf %15, %81 : vector<1x384xf32>
    %83 = arith.addf %79, %82 : vector<1x384xf32>
    %c8 = arith.constant 8 : index
    %84 = memref.load %arg3[%c8] : memref<98xf32, #tpu.memory_space<smem>>
    %85 = vector.broadcast %84 : f32 to vector<1x384xf32>
    %86 = arith.mulf %10, %85 : vector<1x384xf32>
    %c57 = arith.constant 57 : index
    %87 = memref.load %arg3[%c57] : memref<98xf32, #tpu.memory_space<smem>>
    %88 = vector.broadcast %87 : f32 to vector<1x384xf32>
    %89 = arith.mulf %16, %88 : vector<1x384xf32>
    %90 = arith.addf %86, %89 : vector<1x384xf32>
    %91 = arith.addf %83, %90 : vector<1x384xf32>
    %c9 = arith.constant 9 : index
    %92 = memref.load %arg3[%c9] : memref<98xf32, #tpu.memory_space<smem>>
    %93 = vector.broadcast %92 : f32 to vector<1x384xf32>
    %94 = arith.mulf %11, %93 : vector<1x384xf32>
    %c58 = arith.constant 58 : index
    %95 = memref.load %arg3[%c58] : memref<98xf32, #tpu.memory_space<smem>>
    %96 = vector.broadcast %95 : f32 to vector<1x384xf32>
    %97 = arith.mulf %17, %96 : vector<1x384xf32>
    %98 = arith.addf %94, %97 : vector<1x384xf32>
    %99 = arith.addf %91, %98 : vector<1x384xf32>
    %c10 = arith.constant 10 : index
    %100 = memref.load %arg3[%c10] : memref<98xf32, #tpu.memory_space<smem>>
    %101 = vector.broadcast %100 : f32 to vector<1x384xf32>
    %102 = arith.mulf %4, %101 : vector<1x384xf32>
    %c59 = arith.constant 59 : index
    %103 = memref.load %arg3[%c59] : memref<98xf32, #tpu.memory_space<smem>>
    %104 = vector.broadcast %103 : f32 to vector<1x384xf32>
    %105 = arith.mulf %8, %104 : vector<1x384xf32>
    %106 = arith.addf %102, %105 : vector<1x384xf32>
    %107 = arith.addf %99, %106 : vector<1x384xf32>
    %c11 = arith.constant 11 : index
    %108 = memref.load %arg3[%c11] : memref<98xf32, #tpu.memory_space<smem>>
    %109 = vector.broadcast %108 : f32 to vector<1x384xf32>
    %110 = arith.mulf %12, %109 : vector<1x384xf32>
    %c60 = arith.constant 60 : index
    %111 = memref.load %arg3[%c60] : memref<98xf32, #tpu.memory_space<smem>>
    %112 = vector.broadcast %111 : f32 to vector<1x384xf32>
    %113 = arith.mulf %18, %112 : vector<1x384xf32>
    %114 = arith.addf %110, %113 : vector<1x384xf32>
    %115 = arith.addf %107, %114 : vector<1x384xf32>
    %c12 = arith.constant 12 : index
    %116 = memref.load %arg3[%c12] : memref<98xf32, #tpu.memory_space<smem>>
    %117 = vector.broadcast %116 : f32 to vector<1x384xf32>
    %118 = arith.mulf %13, %117 : vector<1x384xf32>
    %c61 = arith.constant 61 : index
    %119 = memref.load %arg3[%c61] : memref<98xf32, #tpu.memory_space<smem>>
    %120 = vector.broadcast %119 : f32 to vector<1x384xf32>
    %121 = arith.mulf %19, %120 : vector<1x384xf32>
    %122 = arith.addf %118, %121 : vector<1x384xf32>
    %123 = arith.addf %115, %122 : vector<1x384xf32>
    %c13 = arith.constant 13 : index
    %124 = memref.load %arg3[%c13] : memref<98xf32, #tpu.memory_space<smem>>
    %125 = vector.broadcast %124 : f32 to vector<1x384xf32>
    %126 = arith.mulf %14, %125 : vector<1x384xf32>
    %c62 = arith.constant 62 : index
    %127 = memref.load %arg3[%c62] : memref<98xf32, #tpu.memory_space<smem>>
    %128 = vector.broadcast %127 : f32 to vector<1x384xf32>
    %129 = arith.mulf %20, %128 : vector<1x384xf32>
    %130 = arith.addf %126, %129 : vector<1x384xf32>
    %131 = arith.addf %123, %130 : vector<1x384xf32>
    %c38_i32 = arith.constant 38 : i32
    %132 = tpu.dynamic_rotate %131 by %c38_i32 dim 1 : vector<1x384xf32>, i32 -> vector<1x384xf32>
    %133 = arith.addf %76, %132 : vector<1x384xf32>
    %c14 = arith.constant 14 : index
    %134 = memref.load %arg3[%c14] : memref<98xf32, #tpu.memory_space<smem>>
    %135 = vector.broadcast %134 : f32 to vector<1x384xf32>
    %136 = arith.mulf %9, %135 : vector<1x384xf32>
    %c63 = arith.constant 63 : index
    %137 = memref.load %arg3[%c63] : memref<98xf32, #tpu.memory_space<smem>>
    %138 = vector.broadcast %137 : f32 to vector<1x384xf32>
    %139 = arith.mulf %15, %138 : vector<1x384xf32>
    %140 = arith.addf %136, %139 : vector<1x384xf32>
    %c15 = arith.constant 15 : index
    %141 = memref.load %arg3[%c15] : memref<98xf32, #tpu.memory_space<smem>>
    %142 = vector.broadcast %141 : f32 to vector<1x384xf32>
    %143 = arith.mulf %10, %142 : vector<1x384xf32>
    %c64 = arith.constant 64 : index
    %144 = memref.load %arg3[%c64] : memref<98xf32, #tpu.memory_space<smem>>
    %145 = vector.broadcast %144 : f32 to vector<1x384xf32>
    %146 = arith.mulf %16, %145 : vector<1x384xf32>
    %147 = arith.addf %143, %146 : vector<1x384xf32>
    %148 = arith.addf %140, %147 : vector<1x384xf32>
    %c16 = arith.constant 16 : index
    %149 = memref.load %arg3[%c16] : memref<98xf32, #tpu.memory_space<smem>>
    %150 = vector.broadcast %149 : f32 to vector<1x384xf32>
    %151 = arith.mulf %11, %150 : vector<1x384xf32>
    %c65 = arith.constant 65 : index
    %152 = memref.load %arg3[%c65] : memref<98xf32, #tpu.memory_space<smem>>
    %153 = vector.broadcast %152 : f32 to vector<1x384xf32>
    %154 = arith.mulf %17, %153 : vector<1x384xf32>
    %155 = arith.addf %151, %154 : vector<1x384xf32>
    %156 = arith.addf %148, %155 : vector<1x384xf32>
    %c17 = arith.constant 17 : index
    %157 = memref.load %arg3[%c17] : memref<98xf32, #tpu.memory_space<smem>>
    %158 = vector.broadcast %157 : f32 to vector<1x384xf32>
    %159 = arith.mulf %4, %158 : vector<1x384xf32>
    %c66 = arith.constant 66 : index
    %160 = memref.load %arg3[%c66] : memref<98xf32, #tpu.memory_space<smem>>
    %161 = vector.broadcast %160 : f32 to vector<1x384xf32>
    %162 = arith.mulf %8, %161 : vector<1x384xf32>
    %163 = arith.addf %159, %162 : vector<1x384xf32>
    %164 = arith.addf %156, %163 : vector<1x384xf32>
    %c18 = arith.constant 18 : index
    %165 = memref.load %arg3[%c18] : memref<98xf32, #tpu.memory_space<smem>>
    %166 = vector.broadcast %165 : f32 to vector<1x384xf32>
    %167 = arith.mulf %12, %166 : vector<1x384xf32>
    %c67 = arith.constant 67 : index
    %168 = memref.load %arg3[%c67] : memref<98xf32, #tpu.memory_space<smem>>
    %169 = vector.broadcast %168 : f32 to vector<1x384xf32>
    %170 = arith.mulf %18, %169 : vector<1x384xf32>
    %171 = arith.addf %167, %170 : vector<1x384xf32>
    %172 = arith.addf %164, %171 : vector<1x384xf32>
    %c19 = arith.constant 19 : index
    %173 = memref.load %arg3[%c19] : memref<98xf32, #tpu.memory_space<smem>>
    %174 = vector.broadcast %173 : f32 to vector<1x384xf32>
    %175 = arith.mulf %13, %174 : vector<1x384xf32>
    %c68 = arith.constant 68 : index
    %176 = memref.load %arg3[%c68] : memref<98xf32, #tpu.memory_space<smem>>
    %177 = vector.broadcast %176 : f32 to vector<1x384xf32>
    %178 = arith.mulf %19, %177 : vector<1x384xf32>
    %179 = arith.addf %175, %178 : vector<1x384xf32>
    %180 = arith.addf %172, %179 : vector<1x384xf32>
    %c20 = arith.constant 20 : index
    %181 = memref.load %arg3[%c20] : memref<98xf32, #tpu.memory_space<smem>>
    %182 = vector.broadcast %181 : f32 to vector<1x384xf32>
    %183 = arith.mulf %14, %182 : vector<1x384xf32>
    %c69 = arith.constant 69 : index
    %184 = memref.load %arg3[%c69] : memref<98xf32, #tpu.memory_space<smem>>
    %185 = vector.broadcast %184 : f32 to vector<1x384xf32>
    %186 = arith.mulf %20, %185 : vector<1x384xf32>
    %187 = arith.addf %183, %186 : vector<1x384xf32>
    %188 = arith.addf %180, %187 : vector<1x384xf32>
    %c19_i32 = arith.constant 19 : i32
    %189 = tpu.dynamic_rotate %188 by %c19_i32 dim 1 : vector<1x384xf32>, i32 -> vector<1x384xf32>
    %190 = arith.addf %133, %189 : vector<1x384xf32>
    %c21 = arith.constant 21 : index
    %191 = memref.load %arg3[%c21] : memref<98xf32, #tpu.memory_space<smem>>
    %192 = vector.broadcast %191 : f32 to vector<1x384xf32>
    %193 = arith.mulf %9, %192 : vector<1x384xf32>
    %c70 = arith.constant 70 : index
    %194 = memref.load %arg3[%c70] : memref<98xf32, #tpu.memory_space<smem>>
    %195 = vector.broadcast %194 : f32 to vector<1x384xf32>
    %196 = arith.mulf %15, %195 : vector<1x384xf32>
    %197 = arith.addf %193, %196 : vector<1x384xf32>
    %c22 = arith.constant 22 : index
    %198 = memref.load %arg3[%c22] : memref<98xf32, #tpu.memory_space<smem>>
    %199 = vector.broadcast %198 : f32 to vector<1x384xf32>
    %200 = arith.mulf %10, %199 : vector<1x384xf32>
    %c71 = arith.constant 71 : index
    %201 = memref.load %arg3[%c71] : memref<98xf32, #tpu.memory_space<smem>>
    %202 = vector.broadcast %201 : f32 to vector<1x384xf32>
    %203 = arith.mulf %16, %202 : vector<1x384xf32>
    %204 = arith.addf %200, %203 : vector<1x384xf32>
    %205 = arith.addf %197, %204 : vector<1x384xf32>
    %c23 = arith.constant 23 : index
    %206 = memref.load %arg3[%c23] : memref<98xf32, #tpu.memory_space<smem>>
    %207 = vector.broadcast %206 : f32 to vector<1x384xf32>
    %208 = arith.mulf %11, %207 : vector<1x384xf32>
    %c72 = arith.constant 72 : index
    %209 = memref.load %arg3[%c72] : memref<98xf32, #tpu.memory_space<smem>>
    %210 = vector.broadcast %209 : f32 to vector<1x384xf32>
    %211 = arith.mulf %17, %210 : vector<1x384xf32>
    %212 = arith.addf %208, %211 : vector<1x384xf32>
    %213 = arith.addf %205, %212 : vector<1x384xf32>
    %c24 = arith.constant 24 : index
    %214 = memref.load %arg3[%c24] : memref<98xf32, #tpu.memory_space<smem>>
    %215 = vector.broadcast %214 : f32 to vector<1x384xf32>
    %216 = arith.mulf %4, %215 : vector<1x384xf32>
    %c73 = arith.constant 73 : index
    %217 = memref.load %arg3[%c73] : memref<98xf32, #tpu.memory_space<smem>>
    %218 = vector.broadcast %217 : f32 to vector<1x384xf32>
    %219 = arith.mulf %8, %218 : vector<1x384xf32>
    %220 = arith.addf %216, %219 : vector<1x384xf32>
    %221 = arith.addf %213, %220 : vector<1x384xf32>
    %c25 = arith.constant 25 : index
    %222 = memref.load %arg3[%c25] : memref<98xf32, #tpu.memory_space<smem>>
    %223 = vector.broadcast %222 : f32 to vector<1x384xf32>
    %224 = arith.mulf %12, %223 : vector<1x384xf32>
    %c74 = arith.constant 74 : index
    %225 = memref.load %arg3[%c74] : memref<98xf32, #tpu.memory_space<smem>>
    %226 = vector.broadcast %225 : f32 to vector<1x384xf32>
    %227 = arith.mulf %18, %226 : vector<1x384xf32>
    %228 = arith.addf %224, %227 : vector<1x384xf32>
    %229 = arith.addf %221, %228 : vector<1x384xf32>
    %c26 = arith.constant 26 : index
    %230 = memref.load %arg3[%c26] : memref<98xf32, #tpu.memory_space<smem>>
    %231 = vector.broadcast %230 : f32 to vector<1x384xf32>
    %232 = arith.mulf %13, %231 : vector<1x384xf32>
    %c75 = arith.constant 75 : index
    %233 = memref.load %arg3[%c75] : memref<98xf32, #tpu.memory_space<smem>>
    %234 = vector.broadcast %233 : f32 to vector<1x384xf32>
    %235 = arith.mulf %19, %234 : vector<1x384xf32>
    %236 = arith.addf %232, %235 : vector<1x384xf32>
    %237 = arith.addf %229, %236 : vector<1x384xf32>
    %c27 = arith.constant 27 : index
    %238 = memref.load %arg3[%c27] : memref<98xf32, #tpu.memory_space<smem>>
    %239 = vector.broadcast %238 : f32 to vector<1x384xf32>
    %240 = arith.mulf %14, %239 : vector<1x384xf32>
    %c76 = arith.constant 76 : index
    %241 = memref.load %arg3[%c76] : memref<98xf32, #tpu.memory_space<smem>>
    %242 = vector.broadcast %241 : f32 to vector<1x384xf32>
    %243 = arith.mulf %20, %242 : vector<1x384xf32>
    %244 = arith.addf %240, %243 : vector<1x384xf32>
    %245 = arith.addf %237, %244 : vector<1x384xf32>
    %246 = arith.addf %190, %245 : vector<1x384xf32>
    %c28 = arith.constant 28 : index
    %247 = memref.load %arg3[%c28] : memref<98xf32, #tpu.memory_space<smem>>
    %248 = vector.broadcast %247 : f32 to vector<1x384xf32>
    %249 = arith.mulf %9, %248 : vector<1x384xf32>
    %c77 = arith.constant 77 : index
    %250 = memref.load %arg3[%c77] : memref<98xf32, #tpu.memory_space<smem>>
    %251 = vector.broadcast %250 : f32 to vector<1x384xf32>
    %252 = arith.mulf %15, %251 : vector<1x384xf32>
    %253 = arith.addf %249, %252 : vector<1x384xf32>
    %c29 = arith.constant 29 : index
    %254 = memref.load %arg3[%c29] : memref<98xf32, #tpu.memory_space<smem>>
    %255 = vector.broadcast %254 : f32 to vector<1x384xf32>
    %256 = arith.mulf %10, %255 : vector<1x384xf32>
    %c78 = arith.constant 78 : index
    %257 = memref.load %arg3[%c78] : memref<98xf32, #tpu.memory_space<smem>>
    %258 = vector.broadcast %257 : f32 to vector<1x384xf32>
    %259 = arith.mulf %16, %258 : vector<1x384xf32>
    %260 = arith.addf %256, %259 : vector<1x384xf32>
    %261 = arith.addf %253, %260 : vector<1x384xf32>
    %c30 = arith.constant 30 : index
    %262 = memref.load %arg3[%c30] : memref<98xf32, #tpu.memory_space<smem>>
    %263 = vector.broadcast %262 : f32 to vector<1x384xf32>
    %264 = arith.mulf %11, %263 : vector<1x384xf32>
    %c79 = arith.constant 79 : index
    %265 = memref.load %arg3[%c79] : memref<98xf32, #tpu.memory_space<smem>>
    %266 = vector.broadcast %265 : f32 to vector<1x384xf32>
    %267 = arith.mulf %17, %266 : vector<1x384xf32>
    %268 = arith.addf %264, %267 : vector<1x384xf32>
    %269 = arith.addf %261, %268 : vector<1x384xf32>
    %c31 = arith.constant 31 : index
    %270 = memref.load %arg3[%c31] : memref<98xf32, #tpu.memory_space<smem>>
    %271 = vector.broadcast %270 : f32 to vector<1x384xf32>
    %272 = arith.mulf %4, %271 : vector<1x384xf32>
    %c80 = arith.constant 80 : index
    %273 = memref.load %arg3[%c80] : memref<98xf32, #tpu.memory_space<smem>>
    %274 = vector.broadcast %273 : f32 to vector<1x384xf32>
    %275 = arith.mulf %8, %274 : vector<1x384xf32>
    %276 = arith.addf %272, %275 : vector<1x384xf32>
    %277 = arith.addf %269, %276 : vector<1x384xf32>
    %c32 = arith.constant 32 : index
    %278 = memref.load %arg3[%c32] : memref<98xf32, #tpu.memory_space<smem>>
    %279 = vector.broadcast %278 : f32 to vector<1x384xf32>
    %280 = arith.mulf %12, %279 : vector<1x384xf32>
    %c81 = arith.constant 81 : index
    %281 = memref.load %arg3[%c81] : memref<98xf32, #tpu.memory_space<smem>>
    %282 = vector.broadcast %281 : f32 to vector<1x384xf32>
    %283 = arith.mulf %18, %282 : vector<1x384xf32>
    %284 = arith.addf %280, %283 : vector<1x384xf32>
    %285 = arith.addf %277, %284 : vector<1x384xf32>
    %c33 = arith.constant 33 : index
    %286 = memref.load %arg3[%c33] : memref<98xf32, #tpu.memory_space<smem>>
    %287 = vector.broadcast %286 : f32 to vector<1x384xf32>
    %288 = arith.mulf %13, %287 : vector<1x384xf32>
    %c82 = arith.constant 82 : index
    %289 = memref.load %arg3[%c82] : memref<98xf32, #tpu.memory_space<smem>>
    %290 = vector.broadcast %289 : f32 to vector<1x384xf32>
    %291 = arith.mulf %19, %290 : vector<1x384xf32>
    %292 = arith.addf %288, %291 : vector<1x384xf32>
    %293 = arith.addf %285, %292 : vector<1x384xf32>
    %c34 = arith.constant 34 : index
    %294 = memref.load %arg3[%c34] : memref<98xf32, #tpu.memory_space<smem>>
    %295 = vector.broadcast %294 : f32 to vector<1x384xf32>
    %296 = arith.mulf %14, %295 : vector<1x384xf32>
    %c83 = arith.constant 83 : index
    %297 = memref.load %arg3[%c83] : memref<98xf32, #tpu.memory_space<smem>>
    %298 = vector.broadcast %297 : f32 to vector<1x384xf32>
    %299 = arith.mulf %20, %298 : vector<1x384xf32>
    %300 = arith.addf %296, %299 : vector<1x384xf32>
    %301 = arith.addf %293, %300 : vector<1x384xf32>
    %c365_i32 = arith.constant 365 : i32
    %302 = tpu.dynamic_rotate %301 by %c365_i32 dim 1 : vector<1x384xf32>, i32 -> vector<1x384xf32>
    %303 = arith.addf %246, %302 : vector<1x384xf32>
    %c35 = arith.constant 35 : index
    %304 = memref.load %arg3[%c35] : memref<98xf32, #tpu.memory_space<smem>>
    %305 = vector.broadcast %304 : f32 to vector<1x384xf32>
    %306 = arith.mulf %9, %305 : vector<1x384xf32>
    %c84 = arith.constant 84 : index
    %307 = memref.load %arg3[%c84] : memref<98xf32, #tpu.memory_space<smem>>
    %308 = vector.broadcast %307 : f32 to vector<1x384xf32>
    %309 = arith.mulf %15, %308 : vector<1x384xf32>
    %310 = arith.addf %306, %309 : vector<1x384xf32>
    %c36 = arith.constant 36 : index
    %311 = memref.load %arg3[%c36] : memref<98xf32, #tpu.memory_space<smem>>
    %312 = vector.broadcast %311 : f32 to vector<1x384xf32>
    %313 = arith.mulf %10, %312 : vector<1x384xf32>
    %c85 = arith.constant 85 : index
    %314 = memref.load %arg3[%c85] : memref<98xf32, #tpu.memory_space<smem>>
    %315 = vector.broadcast %314 : f32 to vector<1x384xf32>
    %316 = arith.mulf %16, %315 : vector<1x384xf32>
    %317 = arith.addf %313, %316 : vector<1x384xf32>
    %318 = arith.addf %310, %317 : vector<1x384xf32>
    %c37 = arith.constant 37 : index
    %319 = memref.load %arg3[%c37] : memref<98xf32, #tpu.memory_space<smem>>
    %320 = vector.broadcast %319 : f32 to vector<1x384xf32>
    %321 = arith.mulf %11, %320 : vector<1x384xf32>
    %c86 = arith.constant 86 : index
    %322 = memref.load %arg3[%c86] : memref<98xf32, #tpu.memory_space<smem>>
    %323 = vector.broadcast %322 : f32 to vector<1x384xf32>
    %324 = arith.mulf %17, %323 : vector<1x384xf32>
    %325 = arith.addf %321, %324 : vector<1x384xf32>
    %326 = arith.addf %318, %325 : vector<1x384xf32>
    %c38 = arith.constant 38 : index
    %327 = memref.load %arg3[%c38] : memref<98xf32, #tpu.memory_space<smem>>
    %328 = vector.broadcast %327 : f32 to vector<1x384xf32>
    %329 = arith.mulf %4, %328 : vector<1x384xf32>
    %c87 = arith.constant 87 : index
    %330 = memref.load %arg3[%c87] : memref<98xf32, #tpu.memory_space<smem>>
    %331 = vector.broadcast %330 : f32 to vector<1x384xf32>
    %332 = arith.mulf %8, %331 : vector<1x384xf32>
    %333 = arith.addf %329, %332 : vector<1x384xf32>
    %334 = arith.addf %326, %333 : vector<1x384xf32>
    %c39 = arith.constant 39 : index
    %335 = memref.load %arg3[%c39] : memref<98xf32, #tpu.memory_space<smem>>
    %336 = vector.broadcast %335 : f32 to vector<1x384xf32>
    %337 = arith.mulf %12, %336 : vector<1x384xf32>
    %c88 = arith.constant 88 : index
    %338 = memref.load %arg3[%c88] : memref<98xf32, #tpu.memory_space<smem>>
    %339 = vector.broadcast %338 : f32 to vector<1x384xf32>
    %340 = arith.mulf %18, %339 : vector<1x384xf32>
    %341 = arith.addf %337, %340 : vector<1x384xf32>
    %342 = arith.addf %334, %341 : vector<1x384xf32>
    %c40 = arith.constant 40 : index
    %343 = memref.load %arg3[%c40] : memref<98xf32, #tpu.memory_space<smem>>
    %344 = vector.broadcast %343 : f32 to vector<1x384xf32>
    %345 = arith.mulf %13, %344 : vector<1x384xf32>
    %c89 = arith.constant 89 : index
    %346 = memref.load %arg3[%c89] : memref<98xf32, #tpu.memory_space<smem>>
    %347 = vector.broadcast %346 : f32 to vector<1x384xf32>
    %348 = arith.mulf %19, %347 : vector<1x384xf32>
    %349 = arith.addf %345, %348 : vector<1x384xf32>
    %350 = arith.addf %342, %349 : vector<1x384xf32>
    %c41 = arith.constant 41 : index
    %351 = memref.load %arg3[%c41] : memref<98xf32, #tpu.memory_space<smem>>
    %352 = vector.broadcast %351 : f32 to vector<1x384xf32>
    %353 = arith.mulf %14, %352 : vector<1x384xf32>
    %c90 = arith.constant 90 : index
    %354 = memref.load %arg3[%c90] : memref<98xf32, #tpu.memory_space<smem>>
    %355 = vector.broadcast %354 : f32 to vector<1x384xf32>
    %356 = arith.mulf %20, %355 : vector<1x384xf32>
    %357 = arith.addf %353, %356 : vector<1x384xf32>
    %358 = arith.addf %350, %357 : vector<1x384xf32>
    %c346_i32 = arith.constant 346 : i32
    %359 = tpu.dynamic_rotate %358 by %c346_i32 dim 1 : vector<1x384xf32>, i32 -> vector<1x384xf32>
    %360 = arith.addf %303, %359 : vector<1x384xf32>
    %c42 = arith.constant 42 : index
    %361 = memref.load %arg3[%c42] : memref<98xf32, #tpu.memory_space<smem>>
    %362 = vector.broadcast %361 : f32 to vector<1x384xf32>
    %363 = arith.mulf %9, %362 : vector<1x384xf32>
    %c91 = arith.constant 91 : index
    %364 = memref.load %arg3[%c91] : memref<98xf32, #tpu.memory_space<smem>>
    %365 = vector.broadcast %364 : f32 to vector<1x384xf32>
    %366 = arith.mulf %15, %365 : vector<1x384xf32>
    %367 = arith.addf %363, %366 : vector<1x384xf32>
    %c43 = arith.constant 43 : index
    %368 = memref.load %arg3[%c43] : memref<98xf32, #tpu.memory_space<smem>>
    %369 = vector.broadcast %368 : f32 to vector<1x384xf32>
    %370 = arith.mulf %10, %369 : vector<1x384xf32>
    %c92 = arith.constant 92 : index
    %371 = memref.load %arg3[%c92] : memref<98xf32, #tpu.memory_space<smem>>
    %372 = vector.broadcast %371 : f32 to vector<1x384xf32>
    %373 = arith.mulf %16, %372 : vector<1x384xf32>
    %374 = arith.addf %370, %373 : vector<1x384xf32>
    %375 = arith.addf %367, %374 : vector<1x384xf32>
    %c44 = arith.constant 44 : index
    %376 = memref.load %arg3[%c44] : memref<98xf32, #tpu.memory_space<smem>>
    %377 = vector.broadcast %376 : f32 to vector<1x384xf32>
    %378 = arith.mulf %11, %377 : vector<1x384xf32>
    %c93 = arith.constant 93 : index
    %379 = memref.load %arg3[%c93] : memref<98xf32, #tpu.memory_space<smem>>
    %380 = vector.broadcast %379 : f32 to vector<1x384xf32>
    %381 = arith.mulf %17, %380 : vector<1x384xf32>
    %382 = arith.addf %378, %381 : vector<1x384xf32>
    %383 = arith.addf %375, %382 : vector<1x384xf32>
    %c45 = arith.constant 45 : index
    %384 = memref.load %arg3[%c45] : memref<98xf32, #tpu.memory_space<smem>>
    %385 = vector.broadcast %384 : f32 to vector<1x384xf32>
    %386 = arith.mulf %4, %385 : vector<1x384xf32>
    %c94 = arith.constant 94 : index
    %387 = memref.load %arg3[%c94] : memref<98xf32, #tpu.memory_space<smem>>
    %388 = vector.broadcast %387 : f32 to vector<1x384xf32>
    %389 = arith.mulf %8, %388 : vector<1x384xf32>
    %390 = arith.addf %386, %389 : vector<1x384xf32>
    %391 = arith.addf %383, %390 : vector<1x384xf32>
    %c46 = arith.constant 46 : index
    %392 = memref.load %arg3[%c46] : memref<98xf32, #tpu.memory_space<smem>>
    %393 = vector.broadcast %392 : f32 to vector<1x384xf32>
    %394 = arith.mulf %12, %393 : vector<1x384xf32>
    %c95 = arith.constant 95 : index
    %395 = memref.load %arg3[%c95] : memref<98xf32, #tpu.memory_space<smem>>
    %396 = vector.broadcast %395 : f32 to vector<1x384xf32>
    %397 = arith.mulf %18, %396 : vector<1x384xf32>
    %398 = arith.addf %394, %397 : vector<1x384xf32>
    %399 = arith.addf %391, %398 : vector<1x384xf32>
    %c47 = arith.constant 47 : index
    %400 = memref.load %arg3[%c47] : memref<98xf32, #tpu.memory_space<smem>>
    %401 = vector.broadcast %400 : f32 to vector<1x384xf32>
    %402 = arith.mulf %13, %401 : vector<1x384xf32>
    %c96 = arith.constant 96 : index
    %403 = memref.load %arg3[%c96] : memref<98xf32, #tpu.memory_space<smem>>
    %404 = vector.broadcast %403 : f32 to vector<1x384xf32>
    %405 = arith.mulf %19, %404 : vector<1x384xf32>
    %406 = arith.addf %402, %405 : vector<1x384xf32>
    %407 = arith.addf %399, %406 : vector<1x384xf32>
    %c48 = arith.constant 48 : index
    %408 = memref.load %arg3[%c48] : memref<98xf32, #tpu.memory_space<smem>>
    %409 = vector.broadcast %408 : f32 to vector<1x384xf32>
    %410 = arith.mulf %14, %409 : vector<1x384xf32>
    %c97 = arith.constant 97 : index
    %411 = memref.load %arg3[%c97] : memref<98xf32, #tpu.memory_space<smem>>
    %412 = vector.broadcast %411 : f32 to vector<1x384xf32>
    %413 = arith.mulf %20, %412 : vector<1x384xf32>
    %414 = arith.addf %410, %413 : vector<1x384xf32>
    %415 = arith.addf %407, %414 : vector<1x384xf32>
    %c327_i32 = arith.constant 327 : i32
    %416 = tpu.dynamic_rotate %415 by %c327_i32 dim 1 : vector<1x384xf32>, i32 -> vector<1x384xf32>
    %417 = arith.addf %360, %416 : vector<1x384xf32>
    %418 = arith.mulf %417, %0 : vector<1x384xf32>
    %419 = vector.shape_cast %418 : vector<1x384xf32> to vector<1x1x384xf32>
    %cst_13 = arith.constant dense<0.000000e+00> : vector<1xf32>
    %420 = vector.multi_reduction <add>, %419, %cst_13 [1, 2] : vector<1x1x384xf32> to vector<1xf32>
    %421 = vector.shape_cast %420 : vector<1xf32> to vector<1x1x1xf32>
    %422 = vector.extract %421[0, 0, 0] : f32 from vector<1x1x1xf32>
    %cst_14 = arith.constant 0.000000e+00 : f32
    %423 = arith.addf %cst_14, %422 : f32
    %c1_15 = arith.constant 1 : index
    %c0_16 = arith.constant 0 : index
    %c0_17 = arith.constant 0 : index
    %424 = vector.load %arg1[%c1_15, %c0_16, %c0_17] : memref<2x4x384xf32, #tpu.memory_space<vmem>>, vector<1x4x384xf32>
    %425 = vector.shape_cast %424 : vector<1x4x384xf32> to vector<4x384xf32>
    %cst_18 = arith.constant dense<0xFF800000> : vector<384xf32>
    %426 = vector.multi_reduction <maximumf>, %425, %cst_18 [0] : vector<4x384xf32> to vector<384xf32>
    %427 = vector.shape_cast %426 : vector<384xf32> to vector<1x384xf32>
    %cst_19 = arith.constant dense<0.000000e+00> : vector<384xf32>
    %428 = vector.multi_reduction <add>, %425, %cst_19 [0] : vector<4x384xf32> to vector<384xf32>
    %429 = vector.shape_cast %428 : vector<384xf32> to vector<1x384xf32>
    %cst_20 = arith.constant 4.000000e+00 : f32
    %430 = vector.broadcast %cst_20 : f32 to vector<1x384xf32>
    %431 = arith.divf %429, %430 : vector<1x384xf32>
    %c3_i32_21 = arith.constant 3 : i32
    %432 = tpu.dynamic_rotate %427 by %c3_i32_21 dim 1 : vector<1x384xf32>, i32 -> vector<1x384xf32>
    %c2_i32_22 = arith.constant 2 : i32
    %433 = tpu.dynamic_rotate %427 by %c2_i32_22 dim 1 : vector<1x384xf32>, i32 -> vector<1x384xf32>
    %c1_i32_23 = arith.constant 1 : i32
    %434 = tpu.dynamic_rotate %427 by %c1_i32_23 dim 1 : vector<1x384xf32>, i32 -> vector<1x384xf32>
    %c383_i32_24 = arith.constant 383 : i32
    %435 = tpu.dynamic_rotate %427 by %c383_i32_24 dim 1 : vector<1x384xf32>, i32 -> vector<1x384xf32>
    %c382_i32_25 = arith.constant 382 : i32
    %436 = tpu.dynamic_rotate %427 by %c382_i32_25 dim 1 : vector<1x384xf32>, i32 -> vector<1x384xf32>
    %c381_i32_26 = arith.constant 381 : i32
    %437 = tpu.dynamic_rotate %427 by %c381_i32_26 dim 1 : vector<1x384xf32>, i32 -> vector<1x384xf32>
    %c3_i32_27 = arith.constant 3 : i32
    %438 = tpu.dynamic_rotate %431 by %c3_i32_27 dim 1 : vector<1x384xf32>, i32 -> vector<1x384xf32>
    %c2_i32_28 = arith.constant 2 : i32
    %439 = tpu.dynamic_rotate %431 by %c2_i32_28 dim 1 : vector<1x384xf32>, i32 -> vector<1x384xf32>
    %c1_i32_29 = arith.constant 1 : i32
    %440 = tpu.dynamic_rotate %431 by %c1_i32_29 dim 1 : vector<1x384xf32>, i32 -> vector<1x384xf32>
    %c383_i32_30 = arith.constant 383 : i32
    %441 = tpu.dynamic_rotate %431 by %c383_i32_30 dim 1 : vector<1x384xf32>, i32 -> vector<1x384xf32>
    %c382_i32_31 = arith.constant 382 : i32
    %442 = tpu.dynamic_rotate %431 by %c382_i32_31 dim 1 : vector<1x384xf32>, i32 -> vector<1x384xf32>
    %c381_i32_32 = arith.constant 381 : i32
    %443 = tpu.dynamic_rotate %431 by %c381_i32_32 dim 1 : vector<1x384xf32>, i32 -> vector<1x384xf32>
    %c0_33 = arith.constant 0 : index
    %444 = memref.load %arg3[%c0_33] : memref<98xf32, #tpu.memory_space<smem>>
    %445 = vector.broadcast %444 : f32 to vector<1x384xf32>
    %446 = arith.mulf %432, %445 : vector<1x384xf32>
    %c49_34 = arith.constant 49 : index
    %447 = memref.load %arg3[%c49_34] : memref<98xf32, #tpu.memory_space<smem>>
    %448 = vector.broadcast %447 : f32 to vector<1x384xf32>
    %449 = arith.mulf %438, %448 : vector<1x384xf32>
    %450 = arith.addf %446, %449 : vector<1x384xf32>
    %c1_35 = arith.constant 1 : index
    %451 = memref.load %arg3[%c1_35] : memref<98xf32, #tpu.memory_space<smem>>
    %452 = vector.broadcast %451 : f32 to vector<1x384xf32>
    %453 = arith.mulf %433, %452 : vector<1x384xf32>
    %c50_36 = arith.constant 50 : index
    %454 = memref.load %arg3[%c50_36] : memref<98xf32, #tpu.memory_space<smem>>
    %455 = vector.broadcast %454 : f32 to vector<1x384xf32>
    %456 = arith.mulf %439, %455 : vector<1x384xf32>
    %457 = arith.addf %453, %456 : vector<1x384xf32>
    %458 = arith.addf %450, %457 : vector<1x384xf32>
    %c2_37 = arith.constant 2 : index
    %459 = memref.load %arg3[%c2_37] : memref<98xf32, #tpu.memory_space<smem>>
    %460 = vector.broadcast %459 : f32 to vector<1x384xf32>
    %461 = arith.mulf %434, %460 : vector<1x384xf32>
    %c51_38 = arith.constant 51 : index
    %462 = memref.load %arg3[%c51_38] : memref<98xf32, #tpu.memory_space<smem>>
    %463 = vector.broadcast %462 : f32 to vector<1x384xf32>
    %464 = arith.mulf %440, %463 : vector<1x384xf32>
    %465 = arith.addf %461, %464 : vector<1x384xf32>
    %466 = arith.addf %458, %465 : vector<1x384xf32>
    %c3_39 = arith.constant 3 : index
    %467 = memref.load %arg3[%c3_39] : memref<98xf32, #tpu.memory_space<smem>>
    %468 = vector.broadcast %467 : f32 to vector<1x384xf32>
    %469 = arith.mulf %427, %468 : vector<1x384xf32>
    %c52_40 = arith.constant 52 : index
    %470 = memref.load %arg3[%c52_40] : memref<98xf32, #tpu.memory_space<smem>>
    %471 = vector.broadcast %470 : f32 to vector<1x384xf32>
    %472 = arith.mulf %431, %471 : vector<1x384xf32>
    %473 = arith.addf %469, %472 : vector<1x384xf32>
    %474 = arith.addf %466, %473 : vector<1x384xf32>
    %c4_41 = arith.constant 4 : index
    %475 = memref.load %arg3[%c4_41] : memref<98xf32, #tpu.memory_space<smem>>
    %476 = vector.broadcast %475 : f32 to vector<1x384xf32>
    %477 = arith.mulf %435, %476 : vector<1x384xf32>
    %c53_42 = arith.constant 53 : index
    %478 = memref.load %arg3[%c53_42] : memref<98xf32, #tpu.memory_space<smem>>
    %479 = vector.broadcast %478 : f32 to vector<1x384xf32>
    %480 = arith.mulf %441, %479 : vector<1x384xf32>
    %481 = arith.addf %477, %480 : vector<1x384xf32>
    %482 = arith.addf %474, %481 : vector<1x384xf32>
    %c5_43 = arith.constant 5 : index
    %483 = memref.load %arg3[%c5_43] : memref<98xf32, #tpu.memory_space<smem>>
    %484 = vector.broadcast %483 : f32 to vector<1x384xf32>
    %485 = arith.mulf %436, %484 : vector<1x384xf32>
    %c54_44 = arith.constant 54 : index
    %486 = memref.load %arg3[%c54_44] : memref<98xf32, #tpu.memory_space<smem>>
    %487 = vector.broadcast %486 : f32 to vector<1x384xf32>
    %488 = arith.mulf %442, %487 : vector<1x384xf32>
    %489 = arith.addf %485, %488 : vector<1x384xf32>
    %490 = arith.addf %482, %489 : vector<1x384xf32>
    %c6_45 = arith.constant 6 : index
    %491 = memref.load %arg3[%c6_45] : memref<98xf32, #tpu.memory_space<smem>>
    %492 = vector.broadcast %491 : f32 to vector<1x384xf32>
    %493 = arith.mulf %437, %492 : vector<1x384xf32>
    %c55_46 = arith.constant 55 : index
    %494 = memref.load %arg3[%c55_46] : memref<98xf32, #tpu.memory_space<smem>>
    %495 = vector.broadcast %494 : f32 to vector<1x384xf32>
    %496 = arith.mulf %443, %495 : vector<1x384xf32>
    %497 = arith.addf %493, %496 : vector<1x384xf32>
    %498 = arith.addf %490, %497 : vector<1x384xf32>
    %c57_i32_47 = arith.constant 57 : i32
    %499 = tpu.dynamic_rotate %498 by %c57_i32_47 dim 1 : vector<1x384xf32>, i32 -> vector<1x384xf32>
    %c7_48 = arith.constant 7 : index
    %500 = memref.load %arg3[%c7_48] : memref<98xf32, #tpu.memory_space<smem>>
    %501 = vector.broadcast %500 : f32 to vector<1x384xf32>
    %502 = arith.mulf %432, %501 : vector<1x384xf32>
    %c56_49 = arith.constant 56 : index
    %503 = memref.load %arg3[%c56_49] : memref<98xf32, #tpu.memory_space<smem>>
    %504 = vector.broadcast %503 : f32 to vector<1x384xf32>
    %505 = arith.mulf %438, %504 : vector<1x384xf32>
    %506 = arith.addf %502, %505 : vector<1x384xf32>
    %c8_50 = arith.constant 8 : index
    %507 = memref.load %arg3[%c8_50] : memref<98xf32, #tpu.memory_space<smem>>
    %508 = vector.broadcast %507 : f32 to vector<1x384xf32>
    %509 = arith.mulf %433, %508 : vector<1x384xf32>
    %c57_51 = arith.constant 57 : index
    %510 = memref.load %arg3[%c57_51] : memref<98xf32, #tpu.memory_space<smem>>
    %511 = vector.broadcast %510 : f32 to vector<1x384xf32>
    %512 = arith.mulf %439, %511 : vector<1x384xf32>
    %513 = arith.addf %509, %512 : vector<1x384xf32>
    %514 = arith.addf %506, %513 : vector<1x384xf32>
    %c9_52 = arith.constant 9 : index
    %515 = memref.load %arg3[%c9_52] : memref<98xf32, #tpu.memory_space<smem>>
    %516 = vector.broadcast %515 : f32 to vector<1x384xf32>
    %517 = arith.mulf %434, %516 : vector<1x384xf32>
    %c58_53 = arith.constant 58 : index
    %518 = memref.load %arg3[%c58_53] : memref<98xf32, #tpu.memory_space<smem>>
    %519 = vector.broadcast %518 : f32 to vector<1x384xf32>
    %520 = arith.mulf %440, %519 : vector<1x384xf32>
    %521 = arith.addf %517, %520 : vector<1x384xf32>
    %522 = arith.addf %514, %521 : vector<1x384xf32>
    %c10_54 = arith.constant 10 : index
    %523 = memref.load %arg3[%c10_54] : memref<98xf32, #tpu.memory_space<smem>>
    %524 = vector.broadcast %523 : f32 to vector<1x384xf32>
    %525 = arith.mulf %427, %524 : vector<1x384xf32>
    %c59_55 = arith.constant 59 : index
    %526 = memref.load %arg3[%c59_55] : memref<98xf32, #tpu.memory_space<smem>>
    %527 = vector.broadcast %526 : f32 to vector<1x384xf32>
    %528 = arith.mulf %431, %527 : vector<1x384xf32>
    %529 = arith.addf %525, %528 : vector<1x384xf32>
    %530 = arith.addf %522, %529 : vector<1x384xf32>
    %c11_56 = arith.constant 11 : index
    %531 = memref.load %arg3[%c11_56] : memref<98xf32, #tpu.memory_space<smem>>
    %532 = vector.broadcast %531 : f32 to vector<1x384xf32>
    %533 = arith.mulf %435, %532 : vector<1x384xf32>
    %c60_57 = arith.constant 60 : index
    %534 = memref.load %arg3[%c60_57] : memref<98xf32, #tpu.memory_space<smem>>
    %535 = vector.broadcast %534 : f32 to vector<1x384xf32>
    %536 = arith.mulf %441, %535 : vector<1x384xf32>
    %537 = arith.addf %533, %536 : vector<1x384xf32>
    %538 = arith.addf %530, %537 : vector<1x384xf32>
    %c12_58 = arith.constant 12 : index
    %539 = memref.load %arg3[%c12_58] : memref<98xf32, #tpu.memory_space<smem>>
    %540 = vector.broadcast %539 : f32 to vector<1x384xf32>
    %541 = arith.mulf %436, %540 : vector<1x384xf32>
    %c61_59 = arith.constant 61 : index
    %542 = memref.load %arg3[%c61_59] : memref<98xf32, #tpu.memory_space<smem>>
    %543 = vector.broadcast %542 : f32 to vector<1x384xf32>
    %544 = arith.mulf %442, %543 : vector<1x384xf32>
    %545 = arith.addf %541, %544 : vector<1x384xf32>
    %546 = arith.addf %538, %545 : vector<1x384xf32>
    %c13_60 = arith.constant 13 : index
    %547 = memref.load %arg3[%c13_60] : memref<98xf32, #tpu.memory_space<smem>>
    %548 = vector.broadcast %547 : f32 to vector<1x384xf32>
    %549 = arith.mulf %437, %548 : vector<1x384xf32>
    %c62_61 = arith.constant 62 : index
    %550 = memref.load %arg3[%c62_61] : memref<98xf32, #tpu.memory_space<smem>>
    %551 = vector.broadcast %550 : f32 to vector<1x384xf32>
    %552 = arith.mulf %443, %551 : vector<1x384xf32>
    %553 = arith.addf %549, %552 : vector<1x384xf32>
    %554 = arith.addf %546, %553 : vector<1x384xf32>
    %c38_i32_62 = arith.constant 38 : i32
    %555 = tpu.dynamic_rotate %554 by %c38_i32_62 dim 1 : vector<1x384xf32>, i32 -> vector<1x384xf32>
    %556 = arith.addf %499, %555 : vector<1x384xf32>
    %c14_63 = arith.constant 14 : index
    %557 = memref.load %arg3[%c14_63] : memref<98xf32, #tpu.memory_space<smem>>
    %558 = vector.broadcast %557 : f32 to vector<1x384xf32>
    %559 = arith.mulf %432, %558 : vector<1x384xf32>
    %c63_64 = arith.constant 63 : index
    %560 = memref.load %arg3[%c63_64] : memref<98xf32, #tpu.memory_space<smem>>
    %561 = vector.broadcast %560 : f32 to vector<1x384xf32>
    %562 = arith.mulf %438, %561 : vector<1x384xf32>
    %563 = arith.addf %559, %562 : vector<1x384xf32>
    %c15_65 = arith.constant 15 : index
    %564 = memref.load %arg3[%c15_65] : memref<98xf32, #tpu.memory_space<smem>>
    %565 = vector.broadcast %564 : f32 to vector<1x384xf32>
    %566 = arith.mulf %433, %565 : vector<1x384xf32>
    %c64_66 = arith.constant 64 : index
    %567 = memref.load %arg3[%c64_66] : memref<98xf32, #tpu.memory_space<smem>>
    %568 = vector.broadcast %567 : f32 to vector<1x384xf32>
    %569 = arith.mulf %439, %568 : vector<1x384xf32>
    %570 = arith.addf %566, %569 : vector<1x384xf32>
    %571 = arith.addf %563, %570 : vector<1x384xf32>
    %c16_67 = arith.constant 16 : index
    %572 = memref.load %arg3[%c16_67] : memref<98xf32, #tpu.memory_space<smem>>
    %573 = vector.broadcast %572 : f32 to vector<1x384xf32>
    %574 = arith.mulf %434, %573 : vector<1x384xf32>
    %c65_68 = arith.constant 65 : index
    %575 = memref.load %arg3[%c65_68] : memref<98xf32, #tpu.memory_space<smem>>
    %576 = vector.broadcast %575 : f32 to vector<1x384xf32>
    %577 = arith.mulf %440, %576 : vector<1x384xf32>
    %578 = arith.addf %574, %577 : vector<1x384xf32>
    %579 = arith.addf %571, %578 : vector<1x384xf32>
    %c17_69 = arith.constant 17 : index
    %580 = memref.load %arg3[%c17_69] : memref<98xf32, #tpu.memory_space<smem>>
    %581 = vector.broadcast %580 : f32 to vector<1x384xf32>
    %582 = arith.mulf %427, %581 : vector<1x384xf32>
    %c66_70 = arith.constant 66 : index
    %583 = memref.load %arg3[%c66_70] : memref<98xf32, #tpu.memory_space<smem>>
    %584 = vector.broadcast %583 : f32 to vector<1x384xf32>
    %585 = arith.mulf %431, %584 : vector<1x384xf32>
    %586 = arith.addf %582, %585 : vector<1x384xf32>
    %587 = arith.addf %579, %586 : vector<1x384xf32>
    %c18_71 = arith.constant 18 : index
    %588 = memref.load %arg3[%c18_71] : memref<98xf32, #tpu.memory_space<smem>>
    %589 = vector.broadcast %588 : f32 to vector<1x384xf32>
    %590 = arith.mulf %435, %589 : vector<1x384xf32>
    %c67_72 = arith.constant 67 : index
    %591 = memref.load %arg3[%c67_72] : memref<98xf32, #tpu.memory_space<smem>>
    %592 = vector.broadcast %591 : f32 to vector<1x384xf32>
    %593 = arith.mulf %441, %592 : vector<1x384xf32>
    %594 = arith.addf %590, %593 : vector<1x384xf32>
    %595 = arith.addf %587, %594 : vector<1x384xf32>
    %c19_73 = arith.constant 19 : index
    %596 = memref.load %arg3[%c19_73] : memref<98xf32, #tpu.memory_space<smem>>
    %597 = vector.broadcast %596 : f32 to vector<1x384xf32>
    %598 = arith.mulf %436, %597 : vector<1x384xf32>
    %c68_74 = arith.constant 68 : index
    %599 = memref.load %arg3[%c68_74] : memref<98xf32, #tpu.memory_space<smem>>
    %600 = vector.broadcast %599 : f32 to vector<1x384xf32>
    %601 = arith.mulf %442, %600 : vector<1x384xf32>
    %602 = arith.addf %598, %601 : vector<1x384xf32>
    %603 = arith.addf %595, %602 : vector<1x384xf32>
    %c20_75 = arith.constant 20 : index
    %604 = memref.load %arg3[%c20_75] : memref<98xf32, #tpu.memory_space<smem>>
    %605 = vector.broadcast %604 : f32 to vector<1x384xf32>
    %606 = arith.mulf %437, %605 : vector<1x384xf32>
    %c69_76 = arith.constant 69 : index
    %607 = memref.load %arg3[%c69_76] : memref<98xf32, #tpu.memory_space<smem>>
    %608 = vector.broadcast %607 : f32 to vector<1x384xf32>
    %609 = arith.mulf %443, %608 : vector<1x384xf32>
    %610 = arith.addf %606, %609 : vector<1x384xf32>
    %611 = arith.addf %603, %610 : vector<1x384xf32>
    %c19_i32_77 = arith.constant 19 : i32
    %612 = tpu.dynamic_rotate %611 by %c19_i32_77 dim 1 : vector<1x384xf32>, i32 -> vector<1x384xf32>
    %613 = arith.addf %556, %612 : vector<1x384xf32>
    %c21_78 = arith.constant 21 : index
    %614 = memref.load %arg3[%c21_78] : memref<98xf32, #tpu.memory_space<smem>>
    %615 = vector.broadcast %614 : f32 to vector<1x384xf32>
    %616 = arith.mulf %432, %615 : vector<1x384xf32>
    %c70_79 = arith.constant 70 : index
    %617 = memref.load %arg3[%c70_79] : memref<98xf32, #tpu.memory_space<smem>>
    %618 = vector.broadcast %617 : f32 to vector<1x384xf32>
    %619 = arith.mulf %438, %618 : vector<1x384xf32>
    %620 = arith.addf %616, %619 : vector<1x384xf32>
    %c22_80 = arith.constant 22 : index
    %621 = memref.load %arg3[%c22_80] : memref<98xf32, #tpu.memory_space<smem>>
    %622 = vector.broadcast %621 : f32 to vector<1x384xf32>
    %623 = arith.mulf %433, %622 : vector<1x384xf32>
    %c71_81 = arith.constant 71 : index
    %624 = memref.load %arg3[%c71_81] : memref<98xf32, #tpu.memory_space<smem>>
    %625 = vector.broadcast %624 : f32 to vector<1x384xf32>
    %626 = arith.mulf %439, %625 : vector<1x384xf32>
    %627 = arith.addf %623, %626 : vector<1x384xf32>
    %628 = arith.addf %620, %627 : vector<1x384xf32>
    %c23_82 = arith.constant 23 : index
    %629 = memref.load %arg3[%c23_82] : memref<98xf32, #tpu.memory_space<smem>>
    %630 = vector.broadcast %629 : f32 to vector<1x384xf32>
    %631 = arith.mulf %434, %630 : vector<1x384xf32>
    %c72_83 = arith.constant 72 : index
    %632 = memref.load %arg3[%c72_83] : memref<98xf32, #tpu.memory_space<smem>>
    %633 = vector.broadcast %632 : f32 to vector<1x384xf32>
    %634 = arith.mulf %440, %633 : vector<1x384xf32>
    %635 = arith.addf %631, %634 : vector<1x384xf32>
    %636 = arith.addf %628, %635 : vector<1x384xf32>
    %c24_84 = arith.constant 24 : index
    %637 = memref.load %arg3[%c24_84] : memref<98xf32, #tpu.memory_space<smem>>
    %638 = vector.broadcast %637 : f32 to vector<1x384xf32>
    %639 = arith.mulf %427, %638 : vector<1x384xf32>
    %c73_85 = arith.constant 73 : index
    %640 = memref.load %arg3[%c73_85] : memref<98xf32, #tpu.memory_space<smem>>
    %641 = vector.broadcast %640 : f32 to vector<1x384xf32>
    %642 = arith.mulf %431, %641 : vector<1x384xf32>
    %643 = arith.addf %639, %642 : vector<1x384xf32>
    %644 = arith.addf %636, %643 : vector<1x384xf32>
    %c25_86 = arith.constant 25 : index
    %645 = memref.load %arg3[%c25_86] : memref<98xf32, #tpu.memory_space<smem>>
    %646 = vector.broadcast %645 : f32 to vector<1x384xf32>
    %647 = arith.mulf %435, %646 : vector<1x384xf32>
    %c74_87 = arith.constant 74 : index
    %648 = memref.load %arg3[%c74_87] : memref<98xf32, #tpu.memory_space<smem>>
    %649 = vector.broadcast %648 : f32 to vector<1x384xf32>
    %650 = arith.mulf %441, %649 : vector<1x384xf32>
    %651 = arith.addf %647, %650 : vector<1x384xf32>
    %652 = arith.addf %644, %651 : vector<1x384xf32>
    %c26_88 = arith.constant 26 : index
    %653 = memref.load %arg3[%c26_88] : memref<98xf32, #tpu.memory_space<smem>>
    %654 = vector.broadcast %653 : f32 to vector<1x384xf32>
    %655 = arith.mulf %436, %654 : vector<1x384xf32>
    %c75_89 = arith.constant 75 : index
    %656 = memref.load %arg3[%c75_89] : memref<98xf32, #tpu.memory_space<smem>>
    %657 = vector.broadcast %656 : f32 to vector<1x384xf32>
    %658 = arith.mulf %442, %657 : vector<1x384xf32>
    %659 = arith.addf %655, %658 : vector<1x384xf32>
    %660 = arith.addf %652, %659 : vector<1x384xf32>
    %c27_90 = arith.constant 27 : index
    %661 = memref.load %arg3[%c27_90] : memref<98xf32, #tpu.memory_space<smem>>
    %662 = vector.broadcast %661 : f32 to vector<1x384xf32>
    %663 = arith.mulf %437, %662 : vector<1x384xf32>
    %c76_91 = arith.constant 76 : index
    %664 = memref.load %arg3[%c76_91] : memref<98xf32, #tpu.memory_space<smem>>
    %665 = vector.broadcast %664 : f32 to vector<1x384xf32>
    %666 = arith.mulf %443, %665 : vector<1x384xf32>
    %667 = arith.addf %663, %666 : vector<1x384xf32>
    %668 = arith.addf %660, %667 : vector<1x384xf32>
    %669 = arith.addf %613, %668 : vector<1x384xf32>
    %c28_92 = arith.constant 28 : index
    %670 = memref.load %arg3[%c28_92] : memref<98xf32, #tpu.memory_space<smem>>
    %671 = vector.broadcast %670 : f32 to vector<1x384xf32>
    %672 = arith.mulf %432, %671 : vector<1x384xf32>
    %c77_93 = arith.constant 77 : index
    %673 = memref.load %arg3[%c77_93] : memref<98xf32, #tpu.memory_space<smem>>
    %674 = vector.broadcast %673 : f32 to vector<1x384xf32>
    %675 = arith.mulf %438, %674 : vector<1x384xf32>
    %676 = arith.addf %672, %675 : vector<1x384xf32>
    %c29_94 = arith.constant 29 : index
    %677 = memref.load %arg3[%c29_94] : memref<98xf32, #tpu.memory_space<smem>>
    %678 = vector.broadcast %677 : f32 to vector<1x384xf32>
    %679 = arith.mulf %433, %678 : vector<1x384xf32>
    %c78_95 = arith.constant 78 : index
    %680 = memref.load %arg3[%c78_95] : memref<98xf32, #tpu.memory_space<smem>>
    %681 = vector.broadcast %680 : f32 to vector<1x384xf32>
    %682 = arith.mulf %439, %681 : vector<1x384xf32>
    %683 = arith.addf %679, %682 : vector<1x384xf32>
    %684 = arith.addf %676, %683 : vector<1x384xf32>
    %c30_96 = arith.constant 30 : index
    %685 = memref.load %arg3[%c30_96] : memref<98xf32, #tpu.memory_space<smem>>
    %686 = vector.broadcast %685 : f32 to vector<1x384xf32>
    %687 = arith.mulf %434, %686 : vector<1x384xf32>
    %c79_97 = arith.constant 79 : index
    %688 = memref.load %arg3[%c79_97] : memref<98xf32, #tpu.memory_space<smem>>
    %689 = vector.broadcast %688 : f32 to vector<1x384xf32>
    %690 = arith.mulf %440, %689 : vector<1x384xf32>
    %691 = arith.addf %687, %690 : vector<1x384xf32>
    %692 = arith.addf %684, %691 : vector<1x384xf32>
    %c31_98 = arith.constant 31 : index
    %693 = memref.load %arg3[%c31_98] : memref<98xf32, #tpu.memory_space<smem>>
    %694 = vector.broadcast %693 : f32 to vector<1x384xf32>
    %695 = arith.mulf %427, %694 : vector<1x384xf32>
    %c80_99 = arith.constant 80 : index
    %696 = memref.load %arg3[%c80_99] : memref<98xf32, #tpu.memory_space<smem>>
    %697 = vector.broadcast %696 : f32 to vector<1x384xf32>
    %698 = arith.mulf %431, %697 : vector<1x384xf32>
    %699 = arith.addf %695, %698 : vector<1x384xf32>
    %700 = arith.addf %692, %699 : vector<1x384xf32>
    %c32_100 = arith.constant 32 : index
    %701 = memref.load %arg3[%c32_100] : memref<98xf32, #tpu.memory_space<smem>>
    %702 = vector.broadcast %701 : f32 to vector<1x384xf32>
    %703 = arith.mulf %435, %702 : vector<1x384xf32>
    %c81_101 = arith.constant 81 : index
    %704 = memref.load %arg3[%c81_101] : memref<98xf32, #tpu.memory_space<smem>>
    %705 = vector.broadcast %704 : f32 to vector<1x384xf32>
    %706 = arith.mulf %441, %705 : vector<1x384xf32>
    %707 = arith.addf %703, %706 : vector<1x384xf32>
    %708 = arith.addf %700, %707 : vector<1x384xf32>
    %c33_102 = arith.constant 33 : index
    %709 = memref.load %arg3[%c33_102] : memref<98xf32, #tpu.memory_space<smem>>
    %710 = vector.broadcast %709 : f32 to vector<1x384xf32>
    %711 = arith.mulf %436, %710 : vector<1x384xf32>
    %c82_103 = arith.constant 82 : index
    %712 = memref.load %arg3[%c82_103] : memref<98xf32, #tpu.memory_space<smem>>
    %713 = vector.broadcast %712 : f32 to vector<1x384xf32>
    %714 = arith.mulf %442, %713 : vector<1x384xf32>
    %715 = arith.addf %711, %714 : vector<1x384xf32>
    %716 = arith.addf %708, %715 : vector<1x384xf32>
    %c34_104 = arith.constant 34 : index
    %717 = memref.load %arg3[%c34_104] : memref<98xf32, #tpu.memory_space<smem>>
    %718 = vector.broadcast %717 : f32 to vector<1x384xf32>
    %719 = arith.mulf %437, %718 : vector<1x384xf32>
    %c83_105 = arith.constant 83 : index
    %720 = memref.load %arg3[%c83_105] : memref<98xf32, #tpu.memory_space<smem>>
    %721 = vector.broadcast %720 : f32 to vector<1x384xf32>
    %722 = arith.mulf %443, %721 : vector<1x384xf32>
    %723 = arith.addf %719, %722 : vector<1x384xf32>
    %724 = arith.addf %716, %723 : vector<1x384xf32>
    %c365_i32_106 = arith.constant 365 : i32
    %725 = tpu.dynamic_rotate %724 by %c365_i32_106 dim 1 : vector<1x384xf32>, i32 -> vector<1x384xf32>
    %726 = arith.addf %669, %725 : vector<1x384xf32>
    %c35_107 = arith.constant 35 : index
    %727 = memref.load %arg3[%c35_107] : memref<98xf32, #tpu.memory_space<smem>>
    %728 = vector.broadcast %727 : f32 to vector<1x384xf32>
    %729 = arith.mulf %432, %728 : vector<1x384xf32>
    %c84_108 = arith.constant 84 : index
    %730 = memref.load %arg3[%c84_108] : memref<98xf32, #tpu.memory_space<smem>>
    %731 = vector.broadcast %730 : f32 to vector<1x384xf32>
    %732 = arith.mulf %438, %731 : vector<1x384xf32>
    %733 = arith.addf %729, %732 : vector<1x384xf32>
    %c36_109 = arith.constant 36 : index
    %734 = memref.load %arg3[%c36_109] : memref<98xf32, #tpu.memory_space<smem>>
    %735 = vector.broadcast %734 : f32 to vector<1x384xf32>
    %736 = arith.mulf %433, %735 : vector<1x384xf32>
    %c85_110 = arith.constant 85 : index
    %737 = memref.load %arg3[%c85_110] : memref<98xf32, #tpu.memory_space<smem>>
    %738 = vector.broadcast %737 : f32 to vector<1x384xf32>
    %739 = arith.mulf %439, %738 : vector<1x384xf32>
    %740 = arith.addf %736, %739 : vector<1x384xf32>
    %741 = arith.addf %733, %740 : vector<1x384xf32>
    %c37_111 = arith.constant 37 : index
    %742 = memref.load %arg3[%c37_111] : memref<98xf32, #tpu.memory_space<smem>>
    %743 = vector.broadcast %742 : f32 to vector<1x384xf32>
    %744 = arith.mulf %434, %743 : vector<1x384xf32>
    %c86_112 = arith.constant 86 : index
    %745 = memref.load %arg3[%c86_112] : memref<98xf32, #tpu.memory_space<smem>>
    %746 = vector.broadcast %745 : f32 to vector<1x384xf32>
    %747 = arith.mulf %440, %746 : vector<1x384xf32>
    %748 = arith.addf %744, %747 : vector<1x384xf32>
    %749 = arith.addf %741, %748 : vector<1x384xf32>
    %c38_113 = arith.constant 38 : index
    %750 = memref.load %arg3[%c38_113] : memref<98xf32, #tpu.memory_space<smem>>
    %751 = vector.broadcast %750 : f32 to vector<1x384xf32>
    %752 = arith.mulf %427, %751 : vector<1x384xf32>
    %c87_114 = arith.constant 87 : index
    %753 = memref.load %arg3[%c87_114] : memref<98xf32, #tpu.memory_space<smem>>
    %754 = vector.broadcast %753 : f32 to vector<1x384xf32>
    %755 = arith.mulf %431, %754 : vector<1x384xf32>
    %756 = arith.addf %752, %755 : vector<1x384xf32>
    %757 = arith.addf %749, %756 : vector<1x384xf32>
    %c39_115 = arith.constant 39 : index
    %758 = memref.load %arg3[%c39_115] : memref<98xf32, #tpu.memory_space<smem>>
    %759 = vector.broadcast %758 : f32 to vector<1x384xf32>
    %760 = arith.mulf %435, %759 : vector<1x384xf32>
    %c88_116 = arith.constant 88 : index
    %761 = memref.load %arg3[%c88_116] : memref<98xf32, #tpu.memory_space<smem>>
    %762 = vector.broadcast %761 : f32 to vector<1x384xf32>
    %763 = arith.mulf %441, %762 : vector<1x384xf32>
    %764 = arith.addf %760, %763 : vector<1x384xf32>
    %765 = arith.addf %757, %764 : vector<1x384xf32>
    %c40_117 = arith.constant 40 : index
    %766 = memref.load %arg3[%c40_117] : memref<98xf32, #tpu.memory_space<smem>>
    %767 = vector.broadcast %766 : f32 to vector<1x384xf32>
    %768 = arith.mulf %436, %767 : vector<1x384xf32>
    %c89_118 = arith.constant 89 : index
    %769 = memref.load %arg3[%c89_118] : memref<98xf32, #tpu.memory_space<smem>>
    %770 = vector.broadcast %769 : f32 to vector<1x384xf32>
    %771 = arith.mulf %442, %770 : vector<1x384xf32>
    %772 = arith.addf %768, %771 : vector<1x384xf32>
    %773 = arith.addf %765, %772 : vector<1x384xf32>
    %c41_119 = arith.constant 41 : index
    %774 = memref.load %arg3[%c41_119] : memref<98xf32, #tpu.memory_space<smem>>
    %775 = vector.broadcast %774 : f32 to vector<1x384xf32>
    %776 = arith.mulf %437, %775 : vector<1x384xf32>
    %c90_120 = arith.constant 90 : index
    %777 = memref.load %arg3[%c90_120] : memref<98xf32, #tpu.memory_space<smem>>
    %778 = vector.broadcast %777 : f32 to vector<1x384xf32>
    %779 = arith.mulf %443, %778 : vector<1x384xf32>
    %780 = arith.addf %776, %779 : vector<1x384xf32>
    %781 = arith.addf %773, %780 : vector<1x384xf32>
    %c346_i32_121 = arith.constant 346 : i32
    %782 = tpu.dynamic_rotate %781 by %c346_i32_121 dim 1 : vector<1x384xf32>, i32 -> vector<1x384xf32>
    %783 = arith.addf %726, %782 : vector<1x384xf32>
    %c42_122 = arith.constant 42 : index
    %784 = memref.load %arg3[%c42_122] : memref<98xf32, #tpu.memory_space<smem>>
    %785 = vector.broadcast %784 : f32 to vector<1x384xf32>
    %786 = arith.mulf %432, %785 : vector<1x384xf32>
    %c91_123 = arith.constant 91 : index
    %787 = memref.load %arg3[%c91_123] : memref<98xf32, #tpu.memory_space<smem>>
    %788 = vector.broadcast %787 : f32 to vector<1x384xf32>
    %789 = arith.mulf %438, %788 : vector<1x384xf32>
    %790 = arith.addf %786, %789 : vector<1x384xf32>
    %c43_124 = arith.constant 43 : index
    %791 = memref.load %arg3[%c43_124] : memref<98xf32, #tpu.memory_space<smem>>
    %792 = vector.broadcast %791 : f32 to vector<1x384xf32>
    %793 = arith.mulf %433, %792 : vector<1x384xf32>
    %c92_125 = arith.constant 92 : index
    %794 = memref.load %arg3[%c92_125] : memref<98xf32, #tpu.memory_space<smem>>
    %795 = vector.broadcast %794 : f32 to vector<1x384xf32>
    %796 = arith.mulf %439, %795 : vector<1x384xf32>
    %797 = arith.addf %793, %796 : vector<1x384xf32>
    %798 = arith.addf %790, %797 : vector<1x384xf32>
    %c44_126 = arith.constant 44 : index
    %799 = memref.load %arg3[%c44_126] : memref<98xf32, #tpu.memory_space<smem>>
    %800 = vector.broadcast %799 : f32 to vector<1x384xf32>
    %801 = arith.mulf %434, %800 : vector<1x384xf32>
    %c93_127 = arith.constant 93 : index
    %802 = memref.load %arg3[%c93_127] : memref<98xf32, #tpu.memory_space<smem>>
    %803 = vector.broadcast %802 : f32 to vector<1x384xf32>
    %804 = arith.mulf %440, %803 : vector<1x384xf32>
    %805 = arith.addf %801, %804 : vector<1x384xf32>
    %806 = arith.addf %798, %805 : vector<1x384xf32>
    %c45_128 = arith.constant 45 : index
    %807 = memref.load %arg3[%c45_128] : memref<98xf32, #tpu.memory_space<smem>>
    %808 = vector.broadcast %807 : f32 to vector<1x384xf32>
    %809 = arith.mulf %427, %808 : vector<1x384xf32>
    %c94_129 = arith.constant 94 : index
    %810 = memref.load %arg3[%c94_129] : memref<98xf32, #tpu.memory_space<smem>>
    %811 = vector.broadcast %810 : f32 to vector<1x384xf32>
    %812 = arith.mulf %431, %811 : vector<1x384xf32>
    %813 = arith.addf %809, %812 : vector<1x384xf32>
    %814 = arith.addf %806, %813 : vector<1x384xf32>
    %c46_130 = arith.constant 46 : index
    %815 = memref.load %arg3[%c46_130] : memref<98xf32, #tpu.memory_space<smem>>
    %816 = vector.broadcast %815 : f32 to vector<1x384xf32>
    %817 = arith.mulf %435, %816 : vector<1x384xf32>
    %c95_131 = arith.constant 95 : index
    %818 = memref.load %arg3[%c95_131] : memref<98xf32, #tpu.memory_space<smem>>
    %819 = vector.broadcast %818 : f32 to vector<1x384xf32>
    %820 = arith.mulf %441, %819 : vector<1x384xf32>
    %821 = arith.addf %817, %820 : vector<1x384xf32>
    %822 = arith.addf %814, %821 : vector<1x384xf32>
    %c47_132 = arith.constant 47 : index
    %823 = memref.load %arg3[%c47_132] : memref<98xf32, #tpu.memory_space<smem>>
    %824 = vector.broadcast %823 : f32 to vector<1x384xf32>
    %825 = arith.mulf %436, %824 : vector<1x384xf32>
    %c96_133 = arith.constant 96 : index
    %826 = memref.load %arg3[%c96_133] : memref<98xf32, #tpu.memory_space<smem>>
    %827 = vector.broadcast %826 : f32 to vector<1x384xf32>
    %828 = arith.mulf %442, %827 : vector<1x384xf32>
    %829 = arith.addf %825, %828 : vector<1x384xf32>
    %830 = arith.addf %822, %829 : vector<1x384xf32>
    %c48_134 = arith.constant 48 : index
    %831 = memref.load %arg3[%c48_134] : memref<98xf32, #tpu.memory_space<smem>>
    %832 = vector.broadcast %831 : f32 to vector<1x384xf32>
    %833 = arith.mulf %437, %832 : vector<1x384xf32>
    %c97_135 = arith.constant 97 : index
    %834 = memref.load %arg3[%c97_135] : memref<98xf32, #tpu.memory_space<smem>>
    %835 = vector.broadcast %834 : f32 to vector<1x384xf32>
    %836 = arith.mulf %443, %835 : vector<1x384xf32>
    %837 = arith.addf %833, %836 : vector<1x384xf32>
    %838 = arith.addf %830, %837 : vector<1x384xf32>
    %c327_i32_136 = arith.constant 327 : i32
    %839 = tpu.dynamic_rotate %838 by %c327_i32_136 dim 1 : vector<1x384xf32>, i32 -> vector<1x384xf32>
    %840 = arith.addf %783, %839 : vector<1x384xf32>
    %841 = arith.mulf %840, %0 : vector<1x384xf32>
    %842 = vector.shape_cast %841 : vector<1x384xf32> to vector<1x1x384xf32>
    %cst_137 = arith.constant dense<0.000000e+00> : vector<1xf32>
    %843 = vector.multi_reduction <add>, %842, %cst_137 [1, 2] : vector<1x1x384xf32> to vector<1xf32>
    %844 = vector.shape_cast %843 : vector<1xf32> to vector<1x1x1xf32>
    %845 = vector.extract %844[0, 0, 0] : f32 from vector<1x1x1xf32>
    %846 = arith.addf %423, %845 : f32
    %cst_138 = arith.constant 0.001953125 : f32
    %847 = arith.mulf %846, %cst_138 : f32
    %848 = vector.broadcast %847 : f32 to vector<1x384xf32>
    %849 = arith.subf %417, %848 : vector<1x384xf32>
    %850 = arith.mulf %849, %0 : vector<1x384xf32>
    %851 = arith.mulf %850, %850 : vector<1x384xf32>
    %852 = vector.shape_cast %851 : vector<1x384xf32> to vector<1x1x384xf32>
    %cst_139 = arith.constant dense<0.000000e+00> : vector<1xf32>
    %853 = vector.multi_reduction <add>, %852, %cst_139 [1, 2] : vector<1x1x384xf32> to vector<1xf32>
    %854 = vector.shape_cast %853 : vector<1xf32> to vector<1x1x1xf32>
    %855 = vector.extract %854[0, 0, 0] : f32 from vector<1x1x1xf32>
    %cst_140 = arith.constant 0.000000e+00 : f32
    %856 = arith.addf %cst_140, %855 : f32
    %857 = vector.broadcast %847 : f32 to vector<1x384xf32>
    %858 = arith.subf %840, %857 : vector<1x384xf32>
    %859 = arith.mulf %858, %0 : vector<1x384xf32>
    %860 = arith.mulf %859, %859 : vector<1x384xf32>
    %861 = vector.shape_cast %860 : vector<1x384xf32> to vector<1x1x384xf32>
    %cst_141 = arith.constant dense<0.000000e+00> : vector<1xf32>
    %862 = vector.multi_reduction <add>, %861, %cst_141 [1, 2] : vector<1x1x384xf32> to vector<1xf32>
    %863 = vector.shape_cast %862 : vector<1xf32> to vector<1x1x1xf32>
    %864 = vector.extract %863[0, 0, 0] : f32 from vector<1x1x1xf32>
    %865 = arith.addf %856, %864 : f32
    %cst_142 = arith.constant 0.001953125 : f32
    %866 = arith.mulf %865, %cst_142 : f32
    %cst_143 = arith.constant 9.99999974E-6 : f32
    %867 = arith.addf %866, %cst_143 : f32
    %868 = math.rsqrt %867 : f32
    %c0_144 = arith.constant 0 : index
    %869 = memref.load %arg4[%c0_144] : memref<2xf32, #tpu.memory_space<smem>>
    %870 = arith.mulf %868, %869 : f32
    %c1_145 = arith.constant 1 : index
    %871 = memref.load %arg4[%c1_145] : memref<2xf32, #tpu.memory_space<smem>>
    %872 = vector.broadcast %847 : f32 to vector<1x384xf32>
    %873 = arith.subf %417, %872 : vector<1x384xf32>
    %874 = vector.broadcast %870 : f32 to vector<1x384xf32>
    %875 = arith.mulf %873, %874 : vector<1x384xf32>
    %876 = vector.broadcast %871 : f32 to vector<1x384xf32>
    %877 = arith.addf %875, %876 : vector<1x384xf32>
    %878 = arith.negf %877 : vector<1x384xf32>
    %879 = math.exp %878 : vector<1x384xf32>
    %cst_146 = arith.constant 1.000000e+00 : f32
    %880 = vector.broadcast %cst_146 : f32 to vector<1x384xf32>
    %881 = arith.addf %880, %879 : vector<1x384xf32>
    %882 = arith.divf %880, %881 : vector<1x384xf32>
    %c0_147 = arith.constant 0 : index
    %c0_148 = arith.constant 0 : index
    %c0_149 = arith.constant 0 : index
    %883 = vector.load %arg1[%c0_147, %c0_148, %c0_149] : memref<2x4x384xf32, #tpu.memory_space<vmem>>, vector<1x4x384xf32>
    %884 = vector.shape_cast %883 : vector<1x4x384xf32> to vector<4x384xf32>
    %885 = vector.broadcast %882 : vector<1x384xf32> to vector<4x384xf32>
    %886 = arith.mulf %884, %885 : vector<4x384xf32>
    %c0_150 = arith.constant 0 : index
    %c0_151 = arith.constant 0 : index
    %c0_152 = arith.constant 0 : index
    %887 = vector.load %arg5[%c0_150, %c0_151, %c0_152] : memref<2x4x384xf32, #tpu.memory_space<vmem>>, vector<1x4x384xf32>
    %888 = vector.shape_cast %887 : vector<1x4x384xf32> to vector<4x384xf32>
    %889 = vector.shape_cast %886 : vector<4x384xf32> to vector<1x4x384xf32>
    tpu.vector_store %arg5[%c0_150, %c0_151, %c0_152], %889 {strides = array<i32>} : memref<2x4x384xf32, #tpu.memory_space<vmem>>, vector<1x4x384xf32>,
    %890 = vector.broadcast %847 : f32 to vector<1x384xf32>
    %891 = arith.subf %840, %890 : vector<1x384xf32>
    %892 = vector.broadcast %870 : f32 to vector<1x384xf32>
    %893 = arith.mulf %891, %892 : vector<1x384xf32>
    %894 = vector.broadcast %871 : f32 to vector<1x384xf32>
    %895 = arith.addf %893, %894 : vector<1x384xf32>
    %896 = arith.negf %895 : vector<1x384xf32>
    %897 = math.exp %896 : vector<1x384xf32>
    %cst_153 = arith.constant 1.000000e+00 : f32
    %898 = vector.broadcast %cst_153 : f32 to vector<1x384xf32>
    %899 = arith.addf %898, %897 : vector<1x384xf32>
    %900 = arith.divf %898, %899 : vector<1x384xf32>
    %c1_154 = arith.constant 1 : index
    %c0_155 = arith.constant 0 : index
    %c0_156 = arith.constant 0 : index
    %901 = vector.load %arg1[%c1_154, %c0_155, %c0_156] : memref<2x4x384xf32, #tpu.memory_space<vmem>>, vector<1x4x384xf32>
    %902 = vector.shape_cast %901 : vector<1x4x384xf32> to vector<4x384xf32>
    %903 = vector.broadcast %900 : vector<1x384xf32> to vector<4x384xf32>
    %904 = arith.mulf %902, %903 : vector<4x384xf32>
    %c1_157 = arith.constant 1 : index
    %c0_158 = arith.constant 0 : index
    %c0_159 = arith.constant 0 : index
    %905 = vector.load %arg5[%c1_157, %c0_158, %c0_159] : memref<2x4x384xf32, #tpu.memory_space<vmem>>, vector<1x4x384xf32>
    %906 = vector.shape_cast %905 : vector<1x4x384xf32> to vector<4x384xf32>
    %907 = vector.shape_cast %904 : vector<4x384xf32> to vector<1x4x384xf32>
    tpu.vector_store %arg5[%c1_157, %c0_158, %c0_159], %907 {strides = array<i32>} : memref<2x4x384xf32, #tpu.memory_space<vmem>>, vector<1x4x384xf32>,
    return
  }
  func.func @transform_0(%arg0: i32) -> (i32, i32, i32) {
    %c0_i32 = arith.constant 0 : i32
    %c0_i32_0 = arith.constant 0 : i32
    %c0_i32_1 = arith.constant 0 : i32
    %c0_i32_2 = arith.constant 0 : i32
    return %c0_i32, %c0_i32_0, %c0_i32_1 : i32, i32, i32
  }
  func.func @transform_1(%arg0: i32) -> (i32, i32) {
    %c0_i32 = arith.constant 0 : i32
    %c0_i32_0 = arith.constant 0 : i32
    %c0_i32_1 = arith.constant 0 : i32
    return %c0_i32, %c0_i32_0 : i32, i32
  }
  func.func @transform_2(%arg0: i32) -> i32 {
    %c0_i32 = arith.constant 0 : i32
    %c0_i32_0 = arith.constant 0 : i32
    return %c0_i32 : i32
  }
  func.func @transform_3(%arg0: i32) -> i32 {
    %c0_i32 = arith.constant 0 : i32
    %c0_i32_0 = arith.constant 0 : i32
    return %c0_i32 : i32
  }
  func.func @transform_4(%arg0: i32) -> (i32, i32, i32) {
    %c0_i32 = arith.constant 0 : i32
    %c0_i32_0 = arith.constant 0 : i32
    %c0_i32_1 = arith.constant 0 : i32
    %c0_i32_2 = arith.constant 0 : i32
    return %c0_i32, %c0_i32_0, %c0_i32_1 : i32, i32, i32
  }
}

</mosaic_0001>

<llo_original>
// kernel: tpu_custom_call.1
$region0: #{tpu_custom_call.1}
  #allocation0 [shape = 'u32[]', space=smem, size = 0x4, offset = 0x4, fixed_abs, tag = 'smem constant byte address 0x4 - core index']
  #allocation1 [shape = 'u32[144,128]{1,0:T(1,128)}', space=vmem, size = 0x12000, scoped, tag = 'internal scratch']
  %s0 = inlined_call_operand.hbm [shape: f32[2,4,384], index: 0, kind: input, shape index: {}]
  %s1 = inlined_call_operand.vmem [shape: f32[1,384], index: 1, kind: input, shape index: {}]
  %s2 = inlined_call_operand.vmem [shape: f32[98], index: 2, kind: input, shape index: {}]
  %s3 = inlined_call_operand.vmem [shape: f32[2], index: 3, kind: input, shape index: {}]
  %s4 = inlined_call_operand.hbm [shape: f32[2,4,384], index: 4, kind: output, shape index: {}]
  %s5 = sld [smem:[#allocation0]]
  $region38: #{tpu_custom_call.1} parent=0
    _
  %s7 = ssub.s32 1, %s5
  %s8 = scalar_select 0, %s7, %s5
  $region1: #{tpu_custom_call.1} parent=0
    #allocation2 [shape = 'u8[12288]{0}', space=vmem, size = 0x3000, scoped, tag = 'input window, operand 0, single buffered']
    #allocation3 [shape = 's32[1]{0}', space=sflag, size = 0x4, scoped, tag = 'scoped memory for tpu_custom_call.1']
    #allocation4 [shape = 's32[1]{0}', space=sflag, size = 0x4, scoped, tag = 'scoped memory for tpu_custom_call.1']
    #allocation5 [shape = 's32[1]{0}', space=sflag, size = 0x4, scoped, tag = 'scoped memory for tpu_custom_call.1']
    #allocation6 [shape = 'u8[512]{0}', space=smem, size = 0x200, scoped, tag = 'input window, operand 2, single buffered']
    #allocation7 [shape = 'u8[512]{0}', space=smem, size = 0x200, scoped, tag = 'input window, operand 3, single buffered']
    #allocation8 [shape = 's32[1]{0}', space=sflag, size = 0x4, scoped, tag = 'scoped memory for tpu_custom_call.1']
    #allocation9 [shape = 'u8[12288]{0}', space=vmem, size = 0x3000, scoped, tag = 'output window, operand 0, single buffered']
    %9 = vsyncpa [#allocation3], 0
    %10 = vsyncpa [#allocation5], 0
    %11 = vsyncpa [#allocation8], 0
    %12 = vsyncpa [#allocation4], 0
    // Predicated region
    $region2: #{tpu_custom_call.1} parent=1 // pred_check
      _
    $region3: #{tpu_custom_call.1} parent=1 // pred_check_branch
      %14 = sbr.rel (0) target = $region5
    $region4: #{tpu_custom_call.1} parent=1 // pred_region
      %s16 = ssub.s32 384, 384
      %17 = vsyncadd [#allocation3], %s16
      %s18 = sshll.u32 [#allocation2], 4
      %s19 = int_to_ptr.vmem [resolvable:$true] %s18
      %24 = dma.hbm_to_vmem [thread:$0]  %s0, 384, %s19, [#allocation3], 192, 192, 12
    $region5: #{tpu_custom_call.1} parent=1 // pred_fallthru
      _
    // Predicated region
    $region6: #{tpu_custom_call.1} parent=1 // pred_check
      _
    $region7: #{tpu_custom_call.1} parent=1 // pred_check_branch
      %26 = sbr.rel (0) target = $region9
    $region8: #{tpu_custom_call.1} parent=1 // pred_region
      _
    $region9: #{tpu_custom_call.1} parent=1 // pred_fallthru
      _
    // Predicated region
    $region10: #{tpu_custom_call.1} parent=1 // pred_check
      _
    $region11: #{tpu_custom_call.1} parent=1 // pred_check_branch
      %28 = sbr.rel (0) target = $region13
    $region12: #{tpu_custom_call.1} parent=1 // pred_region
      %s30 = ssub.s32 16, 16
      %31 = vsyncadd [#allocation5], %s30
      %s33 = sshll.u32 %s2, 4
      %s34 = int_to_ptr.vmem [resolvable:$true] %s33
      %36 = dma.vmem_to_smem %s34, 16, [#allocation6], [#allocation5]
    $region13: #{tpu_custom_call.1} parent=1 // pred_fallthru
      _
    // Predicated region
    $region14: #{tpu_custom_call.1} parent=1 // pred_check
      _
    $region15: #{tpu_custom_call.1} parent=1 // pred_check_branch
      %38 = sbr.rel (0) target = $region17
    $region16: #{tpu_custom_call.1} parent=1 // pred_region
      %s40 = ssub.s32 16, 16
      %41 = vsyncadd [#allocation8], %s40
      %s43 = sshll.u32 %s3, 4
      %s44 = int_to_ptr.vmem [resolvable:$true] %s43
      %46 = dma.vmem_to_smem %s44, 16, [#allocation7], [#allocation8]
    $region17: #{tpu_custom_call.1} parent=1 // pred_fallthru
      _
    // Predicated region
    $region18: #{tpu_custom_call.1} parent=1 // pred_check
      _
    $region19: #{tpu_custom_call.1} parent=1 // pred_check_branch
      %48 = sbr.rel (0) target = $region21
    $region20: #{tpu_custom_call.1} parent=1 // pred_region
      %49 = dma.done [#allocation3], 384
    $region21: #{tpu_custom_call.1} parent=1 // pred_fallthru
      _
    // Predicated region
    $region22: #{tpu_custom_call.1} parent=1 // pred_check
      _
    $region23: #{tpu_custom_call.1} parent=1 // pred_check_branch
      %51 = sbr.rel (0) target = $region25
    $region24: #{tpu_custom_call.1} parent=1 // pred_region
      %52 = dma.done [#allocation5], 16
    $region25: #{tpu_custom_call.1} parent=1 // pred_fallthru
      _
    // Predicated region
    $region26: #{tpu_custom_call.1} parent=1 // pred_check
      _
    $region27: #{tpu_custom_call.1} parent=1 // pred_check_branch
      %54 = sbr.rel (0) target = $region29
    $region28: #{tpu_custom_call.1} parent=1 // pred_region
      %55 = dma.done [#allocation8], 16
    $region29: #{tpu_custom_call.1} parent=1 // pred_fallthru
      _
    %56 = sfence
    %v57 = vld [vmem:[%s1] sm:$0x7]
    %v58 = vld [vmem:[#allocation2] sm:$0xff]
    %v59 = vld [vmem:[#allocation2 + $0x8] sm:$0xf]
    %v61 = vcombine.high %v58, %v58
    %vm63 = vcmask 1043456
    %v64 = vsel %vm63, %v58, -inf
    %v65 = vrot.slane %v64, 4
    %v66 = vmax.f32 %v64, %v65
    %v67 = vrot.slane %v66, 2
    %v68 = vmax.f32 %v66, %v67
    %v69 = vrot.slane %v68, 1
    %v70 = vmax.f32 %v68, %v69
    %v71 = vsel %vm63, %v61, -inf
    %v72 = vrot.slane %v71, 4
    %v73 = vmax.f32 %v71, %v72
    %v74 = vrot.slane %v73, 2
    %v75 = vmax.f32 %v73, %v74
    %v76 = vrot.slane %v75, 1
    %v77 = vmax.f32 %v75, %v76
    %v78 = vsel %vm63, %v59, -inf
    %v79 = vrot.slane %v78, 4
    %v80 = vmax.f32 %v78, %v79
    %v81 = vrot.slane %v80, 2
    %v82 = vmax.f32 %v80, %v81
    %v83 = vrot.slane %v82, 1
    %v84 = vmax.f32 %v82, %v83
    %v85 = vsel %vm63, %v58, 0.0
    %v86 = vrot.slane %v85, 4
    %v87 = vadd.f32 %v85, %v86
    %v88 = vrot.slane %v87, 2
    %v89 = vadd.f32 %v87, %v88
    %v90 = vrot.slane %v89, 1
    %v91 = vadd.f32 %v89, %v90
    %v92 = vsel %vm63, %v61, 0.0
    %v93 = vrot.slane %v92, 4
    %v94 = vadd.f32 %v92, %v93
    %v95 = vrot.slane %v94, 2
    %v96 = vadd.f32 %v94, %v95
    %v97 = vrot.slane %v96, 1
    %v98 = vadd.f32 %v96, %v97
    %v99 = vsel %vm63, %v59, 0.0
    %v100 = vrot.slane %v99, 4
    %v101 = vadd.f32 %v99, %v100
    %v102 = vrot.slane %v101, 2
    %v103 = vadd.f32 %v101, %v102
    %v104 = vrot.slane %v103, 1
    %v105 = vadd.f32 %v103, %v104
    %v106 = vrcp.pop 4.0
    %v107 = vmul.f32 %v91, %v106
    %v108 = vmul.f32 %v98, %v106
    %v109 = vmul.f32 %v105, %v106
    %110 = vrot.lane.b32.xlu0 %v70, 3
    %v111 = vpop.permute.xlu0 %110
    %112 = vrot.lane.b32.xlu0 %v77, 3
    %v113 = vpop.permute.xlu0 %112
    %114 = vrot.lane.b32.xlu0 %v84, 3
    %v115 = vpop.permute.xlu0 %114
    %v116 = vlaneseq
    %v117 = vand.u32 %v116, 127
    %vm118 = vcmp.lt.s32.totalorder %v117, 3
    %v119 = vsel %vm118, %v113, %v115
    %v120 = vsel %vm118, %v111, %v113
    %v121 = vsel %vm118, %v115, %v111
    %122 = vrot.lane.b32.xlu0 %v70, 2
    %v123 = vpop.permute.xlu0 %122
    %124 = vrot.lane.b32.xlu0 %v77, 2
    %v125 = vpop.permute.xlu0 %124
    %126 = vrot.lane.b32.xlu0 %v84, 2
    %v127 = vpop.permute.xlu0 %126
    %vm128 = vcmp.lt.s32.totalorder %v117, 2
    %v129 = vsel %vm128, %v125, %v127
    %v130 = vsel %vm128, %v123, %v125
    %v131 = vsel %vm128, %v127, %v123
    %132 = vrot.lane.b32.xlu0 %v70, 1
    %v133 = vpop.permute.xlu0 %132
    %134 = vrot.lane.b32.xlu0 %v77, 1
    %v135 = vpop.permute.xlu0 %134
    %136 = vrot.lane.b32.xlu0 %v84, 1
    %v137 = vpop.permute.xlu0 %136
    %vm138 = vcmp.lt.s32.totalorder %v117, 1
    %v139 = vsel %vm138, %v135, %v137
    %v140 = vsel %vm138, %v133, %v135
    %v141 = vsel %vm138, %v137, %v133
    %142 = vrot.lane.b32.xlu0 %v70, 127
    %v143 = vpop.permute.xlu0 %142
    %144 = vrot.lane.b32.xlu0 %v77, 127
    %v145 = vpop.permute.xlu0 %144
    %146 = vrot.lane.b32.xlu0 %v84, 127
    %v147 = vpop.permute.xlu0 %146
    %vm148 = vcmp.lt.s32.totalorder %v117, 127
    %v149 = vsel %vm148, %v145, %v147
    %v150 = vsel %vm148, %v143, %v145
    %v151 = vsel %vm148, %v147, %v143
    %152 = vrot.lane.b32.xlu0 %v70, 126
    %v153 = vpop.permute.xlu0 %152
    %154 = vrot.lane.b32.xlu0 %v77, 126
    %v155 = vpop.permute.xlu0 %154
    %156 = vrot.lane.b32.xlu0 %v84, 126
    %v157 = vpop.permute.xlu0 %156
    %vm158 = vcmp.lt.s32.totalorder %v117, 126
    %v159 = vsel %vm158, %v155, %v157
    %v160 = vsel %vm158, %v153, %v155
    %v161 = vsel %vm158, %v157, %v153
    %162 = vrot.lane.b32.xlu0 %v70, 125
    %v163 = vpop.permute.xlu0 %162
    %164 = vrot.lane.b32.xlu0 %v77, 125
    %v165 = vpop.permute.xlu0 %164
    %166 = vrot.lane.b32.xlu0 %v84, 125
    %v167 = vpop.permute.xlu0 %166
    %vm168 = vcmp.lt.s32.totalorder %v117, 125
    %v169 = vsel %vm168, %v165, %v167
    %v170 = vsel %vm168, %v163, %v165
    %v171 = vsel %vm168, %v167, %v163
    %172 = vrot.lane.b32.xlu0 %v107, 3
    %v173 = vpop.permute.xlu0 %172
    %174 = vrot.lane.b32.xlu0 %v108, 3
    %v175 = vpop.permute.xlu0 %174
    %176 = vrot.lane.b32.xlu0 %v109, 3
    %v177 = vpop.permute.xlu0 %176
    %v178 = vsel %vm118, %v175, %v177
    %v179 = vsel %vm118, %v173, %v175
    %v180 = vsel %vm118, %v177, %v173
    %181 = vrot.lane.b32.xlu0 %v107, 2
    %v182 = vpop.permute.xlu0 %181
    %183 = vrot.lane.b32.xlu0 %v108, 2
    %v184 = vpop.permute.xlu0 %183
    %185 = vrot.lane.b32.xlu0 %v109, 2
    %v186 = vpop.permute.xlu0 %185
    %v187 = vsel %vm128, %v184, %v186
    %v188 = vsel %vm128, %v182, %v184
    %v189 = vsel %vm128, %v186, %v182
    %190 = vrot.lane.b32.xlu0 %v107, 1
    %v191 = vpop.permute.xlu0 %190
    %192 = vrot.lane.b32.xlu0 %v108, 1
    %v193 = vpop.permute.xlu0 %192
    %194 = vrot.lane.b32.xlu0 %v109, 1
    %v195 = vpop.permute.xlu0 %194
    %v196 = vsel %vm138, %v193, %v195
    %v197 = vsel %vm138, %v191, %v193
    %v198 = vsel %vm138, %v195, %v191
    %199 = vrot.lane.b32.xlu0 %v107, 127
    %v200 = vpop.permute.xlu0 %199
    %201 = vrot.lane.b32.xlu0 %v108, 127
    %v202 = vpop.permute.xlu0 %201
    %203 = vrot.lane.b32.xlu0 %v109, 127
    %v204 = vpop.permute.xlu0 %203
    %v205 = vsel %vm148, %v202, %v204
    %v206 = vsel %vm148, %v200, %v202
    %v207 = vsel %vm148, %v204, %v200
    %208 = vrot.lane.b32.xlu0 %v107, 126
    %v209 = vpop.permute.xlu0 %208
    %210 = vrot.lane.b32.xlu0 %v108, 126
    %v211 = vpop.permute.xlu0 %210
    %212 = vrot.lane.b32.xlu0 %v109, 126
    %v213 = vpop.permute.xlu0 %212
    %v214 = vsel %vm158, %v211, %v213
    %v215 = vsel %vm158, %v209, %v211
    %v216 = vsel %vm158, %v213, %v209
    %217 = vrot.lane.b32.xlu0 %v107, 125
    %v218 = vpop.permute.xlu0 %217
    %219 = vrot.lane.b32.xlu0 %v108, 125
    %v220 = vpop.permute.xlu0 %219
    %221 = vrot.lane.b32.xlu0 %v109, 125
    %v222 = vpop.permute.xlu0 %221
    %v223 = vsel %vm168, %v220, %v222
    %v224 = vsel %vm168, %v218, %v220
    %v225 = vsel %vm168, %v222, %v218
    %s226 = sld [smem:[#allocation6]]
    %v227 = vstv %s226
    %v228 = vmul.f32 %v121, %v227
    %v229 = vmul.f32 %v120, %v227
    %v230 = vmul.f32 %v119, %v227
    %s231 = sld [smem:[#allocation6 + $0x31]]
    %v232 = vstv %s231
    %v233 = vmul.f32 %v180, %v232
    %v234 = vmul.f32 %v179, %v232
    %v235 = vmul.f32 %v178, %v232
    %v236 = vadd.f32 %v228, %v233
    %v237 = vadd.f32 %v229, %v234
    %v238 = vadd.f32 %v230, %v235
    %s239 = sld [smem:[#allocation6 + $0x1]]
    %v240 = vstv %s239
    %v241 = vmul.f32 %v131, %v240
    %v242 = vmul.f32 %v130, %v240
    %v243 = vmul.f32 %v129, %v240
    %s244 = sld [smem:[#allocation6 + $0x32]]
    %v245 = vstv %s244
    %v246 = vmul.f32 %v189, %v245
    %v247 = vmul.f32 %v188, %v245
    %v248 = vmul.f32 %v187, %v245
    %v249 = vadd.f32 %v241, %v246
    %v250 = vadd.f32 %v242, %v247
    %v251 = vadd.f32 %v243, %v248
    %v252 = vadd.f32 %v236, %v249
    %v253 = vadd.f32 %v237, %v250
    %v254 = vadd.f32 %v238, %v251
    %s255 = sld [smem:[#allocation6 + $0x2]]
    %v256 = vstv %s255
    %v257 = vmul.f32 %v141, %v256
    %v258 = vmul.f32 %v140, %v256
    %v259 = vmul.f32 %v139, %v256
    %s260 = sld [smem:[#allocation6 + $0x33]]
    %v261 = vstv %s260
    %v262 = vmul.f32 %v198, %v261
    %v263 = vmul.f32 %v197, %v261
    %v264 = vmul.f32 %v196, %v261
    %v265 = vadd.f32 %v257, %v262
    %v266 = vadd.f32 %v258, %v263
    %v267 = vadd.f32 %v259, %v264
    %v268 = vadd.f32 %v252, %v265
    %v269 = vadd.f32 %v253, %v266
    %v270 = vadd.f32 %v254, %v267
    %s271 = sld [smem:[#allocation6 + $0x3]]
    %v272 = vstv %s271
    %v273 = vmul.f32 %v70, %v272
    %v274 = vmul.f32 %v77, %v272
    %v275 = vmul.f32 %v84, %v272
    %s276 = sld [smem:[#allocation6 + $0x34]]
    %v277 = vstv %s276
    %v278 = vmul.f32 %v107, %v277
    %v279 = vmul.f32 %v108, %v277
    %v280 = vmul.f32 %v109, %v277
    %v281 = vadd.f32 %v273, %v278
    %v282 = vadd.f32 %v274, %v279
    %v283 = vadd.f32 %v275, %v280
    %v284 = vadd.f32 %v268, %v281
    %v285 = vadd.f32 %v269, %v282
    %v286 = vadd.f32 %v270, %v283
    %s287 = sld [smem:[#allocation6 + $0x4]]
    %v288 = vstv %s287
    %v289 = vmul.f32 %v150, %v288
    %v290 = vmul.f32 %v149, %v288
    %v291 = vmul.f32 %v151, %v288
    %s292 = sld [smem:[#allocation6 + $0x35]]
    %v293 = vstv %s292
    %v294 = vmul.f32 %v206, %v293
    %v295 = vmul.f32 %v205, %v293
    %v296 = vmul.f32 %v207, %v293
    %v297 = vadd.f32 %v289, %v294
    %v298 = vadd.f32 %v290, %v295
    %v299 = vadd.f32 %v291, %v296
    %v300 = vadd.f32 %v284, %v297
    %v301 = vadd.f32 %v285, %v298
    %v302 = vadd.f32 %v286, %v299
    %s303 = sld [smem:[#allocation6 + $0x5]]
    %v304 = vstv %s303
    %v305 = vmul.f32 %v160, %v304
    %v306 = vmul.f32 %v159, %v304
    %v307 = vmul.f32 %v161, %v304
    %s308 = sld [smem:[#allocation6 + $0x36]]
    %v309 = vstv %s308
    %v310 = vmul.f32 %v215, %v309
    %v311 = vmul.f32 %v214, %v309
    %v312 = vmul.f32 %v216, %v309
    %v313 = vadd.f32 %v305, %v310
    %v314 = vadd.f32 %v306, %v311
    %v315 = vadd.f32 %v307, %v312
    %v316 = vadd.f32 %v300, %v313
    %v317 = vadd.f32 %v301, %v314
    %v318 = vadd.f32 %v302, %v315
    %s319 = sld [smem:[#allocation6 + $0x6]]
    %v320 = vstv %s319
    %v321 = vmul.f32 %v170, %v320
    %v322 = vmul.f32 %v169, %v320
    %v323 = vmul.f32 %v171, %v320
    %s324 = sld [smem:[#allocation6 + $0x37]]
    %v325 = vstv %s324
    %v326 = vmul.f32 %v224, %v325
    %v327 = vmul.f32 %v223, %v325
    %v328 = vmul.f32 %v225, %v325
    %v329 = vadd.f32 %v321, %v326
    %v330 = vadd.f32 %v322, %v327
    %v331 = vadd.f32 %v323, %v328
    %v332 = vadd.f32 %v316, %v329
    %v333 = vadd.f32 %v317, %v330
    %v334 = vadd.f32 %v318, %v331
    %335 = vrot.lane.b32.xlu0 %v332, 57
    %v336 = vpop.permute.xlu0 %335
    %337 = vrot.lane.b32.xlu0 %v333, 57
    %v338 = vpop.permute.xlu0 %337
    %339 = vrot.lane.b32.xlu0 %v334, 57
    %v340 = vpop.permute.xlu0 %339
    %vm341 = vcmp.lt.s32.totalorder %v117, 57
    %v342 = vsel %vm341, %v338, %v340
    %v343 = vsel %vm341, %v336, %v338
    %v344 = vsel %vm341, %v340, %v336
    %s345 = sld [smem:[#allocation6 + $0x7]]
    %v346 = vstv %s345
    %v347 = vmul.f32 %v121, %v346
    %v348 = vmul.f32 %v120, %v346
    %v349 = vmul.f32 %v119, %v346
    %s350 = sld [smem:[#allocation6 + $0x38]]
    %v351 = vstv %s350
    %v352 = vmul.f32 %v180, %v351
    %v353 = vmul.f32 %v179, %v351
    %v354 = vmul.f32 %v178, %v351
    %v355 = vadd.f32 %v347, %v352
    %v356 = vadd.f32 %v348, %v353
    %v357 = vadd.f32 %v349, %v354
    %s358 = sld [smem:[#allocation6 + $0x8]]
    %v359 = vstv %s358
    %v360 = vmul.f32 %v131, %v359
    %v361 = vmul.f32 %v130, %v359
    %v362 = vmul.f32 %v129, %v359
    %s363 = sld [smem:[#allocation6 + $0x39]]
    %v364 = vstv %s363
    %v365 = vmul.f32 %v189, %v364
    %v366 = vmul.f32 %v188, %v364
    %v367 = vmul.f32 %v187, %v364
    %v368 = vadd.f32 %v360, %v365
    %v369 = vadd.f32 %v361, %v366
    %v370 = vadd.f32 %v362, %v367
    %v371 = vadd.f32 %v355, %v368
    %v372 = vadd.f32 %v356, %v369
    %v373 = vadd.f32 %v357, %v370
    %s374 = sld [smem:[#allocation6 + $0x9]]
    %v375 = vstv %s374
    %v376 = vmul.f32 %v141, %v375
    %v377 = vmul.f32 %v140, %v375
    %v378 = vmul.f32 %v139, %v375
    %s379 = sld [smem:[#allocation6 + $0x3a]]
    %v380 = vstv %s379
    %v381 = vmul.f32 %v198, %v380
    %v382 = vmul.f32 %v197, %v380
    %v383 = vmul.f32 %v196, %v380
    %v384 = vadd.f32 %v376, %v381
    %v385 = vadd.f32 %v377, %v382
    %v386 = vadd.f32 %v378, %v383
    %v387 = vadd.f32 %v371, %v384
    %v388 = vadd.f32 %v372, %v385
    %v389 = vadd.f32 %v373, %v386
    %s390 = sld [smem:[#allocation6 + $0xa]]
    %v391 = vstv %s390
    %v392 = vmul.f32 %v70, %v391
    %v393 = vmul.f32 %v77, %v391
    %v394 = vmul.f32 %v84, %v391
    %s395 = sld [smem:[#allocation6 + $0x3b]]
    %v396 = vstv %s395
    %v397 = vmul.f32 %v107, %v396
    %v398 = vmul.f32 %v108, %v396
    %v399 = vmul.f32 %v109, %v396
    %v400 = vadd.f32 %v392, %v397
    %v401 = vadd.f32 %v393, %v398
    %v402 = vadd.f32 %v394, %v399
    %v403 = vadd.f32 %v387, %v400
    %v404 = vadd.f32 %v388, %v401
    %v405 = vadd.f32 %v389, %v402
    %s406 = sld [smem:[#allocation6 + $0xb]]
    %v407 = vstv %s406
    %v408 = vmul.f32 %v150, %v407
    %v409 = vmul.f32 %v149, %v407
    %v410 = vmul.f32 %v151, %v407
    %s411 = sld [smem:[#allocation6 + $0x3c]]
    %v412 = vstv %s411
    %v413 = vmul.f32 %v206, %v412
    %v414 = vmul.f32 %v205, %v412
    %v415 = vmul.f32 %v207, %v412
    %v416 = vadd.f32 %v408, %v413
    %v417 = vadd.f32 %v409, %v414
    %v418 = vadd.f32 %v410, %v415
    %v419 = vadd.f32 %v403, %v416
    %v420 = vadd.f32 %v404, %v417
    %v421 = vadd.f32 %v405, %v418
    %s422 = sld [smem:[#allocation6 + $0xc]]
    %v423 = vstv %s422
    %v424 = vmul.f32 %v160, %v423
    %v425 = vmul.f32 %v159, %v423
    %v426 = vmul.f32 %v161, %v423
    %s427 = sld [smem:[#allocation6 + $0x3d]]
    %v428 = vstv %s427
    %v429 = vmul.f32 %v215, %v428
    %v430 = vmul.f32 %v214, %v428
    %v431 = vmul.f32 %v216, %v428
    %v432 = vadd.f32 %v424, %v429
    %v433 = vadd.f32 %v425, %v430
    %v434 = vadd.f32 %v426, %v431
    %v435 = vadd.f32 %v419, %v432
    %v436 = vadd.f32 %v420, %v433
    %v437 = vadd.f32 %v421, %v434
    %s438 = sld [smem:[#allocation6 + $0xd]]
    %v439 = vstv %s438
    %v440 = vmul.f32 %v170, %v439
    %v441 = vmul.f32 %v169, %v439
    %v442 = vmul.f32 %v171, %v439
    %s443 = sld [smem:[#allocation6 + $0x3e]]
    %v444 = vstv %s443
    %v445 = vmul.f32 %v224, %v444
    %v446 = vmul.f32 %v223, %v444
    %v447 = vmul.f32 %v225, %v444
    %v448 = vadd.f32 %v440, %v445
    %v449 = vadd.f32 %v441, %v446
    %v450 = vadd.f32 %v442, %v447
    %v451 = vadd.f32 %v435, %v448
    %v452 = vadd.f32 %v436, %v449
    %v453 = vadd.f32 %v437, %v450
    %454 = vrot.lane.b32.xlu0 %v451, 38
    %v455 = vpop.permute.xlu0 %454
    %456 = vrot.lane.b32.xlu0 %v452, 38
    %v457 = vpop.permute.xlu0 %456
    %458 = vrot.lane.b32.xlu0 %v453, 38
    %v459 = vpop.permute.xlu0 %458
    %vm460 = vcmp.lt.s32.totalorder %v117, 38
    %v461 = vsel %vm460, %v457, %v459
    %v462 = vsel %vm460, %v455, %v457
    %v463 = vsel %vm460, %v459, %v455
    %v464 = vadd.f32 %v344, %v463
    %v465 = vadd.f32 %v343, %v462
    %v466 = vadd.f32 %v342, %v461
    %s467 = sld [smem:[#allocation6 + $0xe]]
    %v468 = vstv %s467
    %v469 = vmul.f32 %v121, %v468
    %v470 = vmul.f32 %v120, %v468
    %v471 = vmul.f32 %v119, %v468
    %s472 = sld [smem:[#allocation6 + $0x3f]]
    %v473 = vstv %s472
    %v474 = vmul.f32 %v180, %v473
    %v475 = vmul.f32 %v179, %v473
    %v476 = vmul.f32 %v178, %v473
    %v477 = vadd.f32 %v469, %v474
    %v478 = vadd.f32 %v470, %v475
    %v479 = vadd.f32 %v471, %v476
    %s480 = sld [smem:[#allocation6 + $0xf]]
    %v481 = vstv %s480
    %v482 = vmul.f32 %v131, %v481
    %v483 = vmul.f32 %v130, %v481
    %v484 = vmul.f32 %v129, %v481
    %s485 = sld [smem:[#allocation6 + $0x40]]
    %v486 = vstv %s485
    %v487 = vmul.f32 %v189, %v486
    %v488 = vmul.f32 %v188, %v486
    %v489 = vmul.f32 %v187, %v486
    %v490 = vadd.f32 %v482, %v487
    %v491 = vadd.f32 %v483, %v488
    %v492 = vadd.f32 %v484, %v489
    %v493 = vadd.f32 %v477, %v490
    %v494 = vadd.f32 %v478, %v491
    %v495 = vadd.f32 %v479, %v492
    %s496 = sld [smem:[#allocation6 + $0x10]]
    %v497 = vstv %s496
    %v498 = vmul.f32 %v141, %v497
    %v499 = vmul.f32 %v140, %v497
    %v500 = vmul.f32 %v139, %v497
    %s501 = sld [smem:[#allocation6 + $0x41]]
    %v502 = vstv %s501
    %v503 = vmul.f32 %v198, %v502
    %v504 = vmul.f32 %v197, %v502
    %v505 = vmul.f32 %v196, %v502
    %v506 = vadd.f32 %v498, %v503
    %v507 = vadd.f32 %v499, %v504
    %v508 = vadd.f32 %v500, %v505
    %v509 = vadd.f32 %v493, %v506
    %v510 = vadd.f32 %v494, %v507
    %v511 = vadd.f32 %v495, %v508
    %s512 = sld [smem:[#allocation6 + $0x11]]
    %v513 = vstv %s512
    %v514 = vmul.f32 %v70, %v513
    %v515 = vmul.f32 %v77, %v513
    %v516 = vmul.f32 %v84, %v513
    %s517 = sld [smem:[#allocation6 + $0x42]]
    %v518 = vstv %s517
    %v519 = vmul.f32 %v107, %v518
    %v520 = vmul.f32 %v108, %v518
    %v521 = vmul.f32 %v109, %v518
    %v522 = vadd.f32 %v514, %v519
    %v523 = vadd.f32 %v515, %v520
    %v524 = vadd.f32 %v516, %v521
    %v525 = vadd.f32 %v509, %v522
    %v526 = vadd.f32 %v510, %v523
    %v527 = vadd.f32 %v511, %v524
    %s528 = sld [smem:[#allocation6 + $0x12]]
    %v529 = vstv %s528
    %v530 = vmul.f32 %v150, %v529
    %v531 = vmul.f32 %v149, %v529
    %v532 = vmul.f32 %v151, %v529
    %s533 = sld [smem:[#allocation6 + $0x43]]
    %v534 = vstv %s533
    %v535 = vmul.f32 %v206, %v534
    %v536 = vmul.f32 %v205, %v534
    %v537 = vmul.f32 %v207, %v534
    %v538 = vadd.f32 %v530, %v535
    %v539 = vadd.f32 %v531, %v536
    %v540 = vadd.f32 %v532, %v537
    %v541 = vadd.f32 %v525, %v538
    %v542 = vadd.f32 %v526, %v539
    %v543 = vadd.f32 %v527, %v540
    %s544 = sld [smem:[#allocation6 + $0x13]]
    %v545 = vstv %s544
    %v546 = vmul.f32 %v160, %v545
    %v547 = vmul.f32 %v159, %v545
    %v548 = vmul.f32 %v161, %v545
    %s549 = sld [smem:[#allocation6 + $0x44]]
    %v550 = vstv %s549
    %v551 = vmul.f32 %v215, %v550
    %v552 = vmul.f32 %v214, %v550
    %v553 = vmul.f32 %v216, %v550
    %v554 = vadd.f32 %v546, %v551
    %v555 = vadd.f32 %v547, %v552
    %v556 = vadd.f32 %v548, %v553
    %v557 = vadd.f32 %v541, %v554
    %v558 = vadd.f32 %v542, %v555
    %v559 = vadd.f32 %v543, %v556
    %s560 = sld [smem:[#allocation6 + $0x14]]
    %v561 = vstv %s560
    %v562 = vmul.f32 %v170, %v561
    %v563 = vmul.f32 %v169, %v561
    %v564 = vmul.f32 %v171, %v561
    %s565 = sld [smem:[#allocation6 + $0x45]]
    %v566 = vstv %s565
    %v567 = vmul.f32 %v224, %v566
    %v568 = vmul.f32 %v223, %v566
    %v569 = vmul.f32 %v225, %v566
    %v570 = vadd.f32 %v562, %v567
    %v571 = vadd.f32 %v563, %v568
    %v572 = vadd.f32 %v564, %v569
    %v573 = vadd.f32 %v557, %v570
    %v574 = vadd.f32 %v558, %v571
    %v575 = vadd.f32 %v559, %v572
    %576 = vrot.lane.b32.xlu0 %v573, 19
    %v577 = vpop.permute.xlu0 %576
    %578 = vrot.lane.b32.xlu0 %v574, 19
    %v579 = vpop.permute.xlu0 %578
    %580 = vrot.lane.b32.xlu0 %v575, 19
    %v581 = vpop.permute.xlu0 %580
    %vm582 = vcmp.lt.s32.totalorder %v117, 19
    %v583 = vsel %vm582, %v579, %v581
    %v584 = vsel %vm582, %v577, %v579
    %v585 = vsel %vm582, %v581, %v577
    %v586 = vadd.f32 %v464, %v585
    %v587 = vadd.f32 %v465, %v584
    %v588 = vadd.f32 %v466, %v583
    %s589 = sld [smem:[#allocation6 + $0x15]]
    %v590 = vstv %s589
    %v591 = vmul.f32 %v121, %v590
    %v592 = vmul.f32 %v120, %v590
    %v593 = vmul.f32 %v119, %v590
    %s594 = sld [smem:[#allocation6 + $0x46]]
    %v595 = vstv %s594
    %v596 = vmul.f32 %v180, %v595
    %v597 = vmul.f32 %v179, %v595
    %v598 = vmul.f32 %v178, %v595
    %v599 = vadd.f32 %v591, %v596
    %v600 = vadd.f32 %v592, %v597
    %v601 = vadd.f32 %v593, %v598
    %s602 = sld [smem:[#allocation6 + $0x16]]
    %v603 = vstv %s602
    %v604 = vmul.f32 %v131, %v603
    %v605 = vmul.f32 %v130, %v603
    %v606 = vmul.f32 %v129, %v603
    %s607 = sld [smem:[#allocation6 + $0x47]]
    %v608 = vstv %s607
    %v609 = vmul.f32 %v189, %v608
    %v610 = vmul.f32 %v188, %v608
    %v611 = vmul.f32 %v187, %v608
    %v612 = vadd.f32 %v604, %v609
    %v613 = vadd.f32 %v605, %v610
    %v614 = vadd.f32 %v606, %v611
    %v615 = vadd.f32 %v599, %v612
    %v616 = vadd.f32 %v600, %v613
    %v617 = vadd.f32 %v601, %v614
    %s618 = sld [smem:[#allocation6 + $0x17]]
    %v619 = vstv %s618
    %v620 = vmul.f32 %v141, %v619
    %v621 = vmul.f32 %v140, %v619
    %v622 = vmul.f32 %v139, %v619
    %s623 = sld [smem:[#allocation6 + $0x48]]
    %v624 = vstv %s623
    %v625 = vmul.f32 %v198, %v624
    %v626 = vmul.f32 %v197, %v624
    %v627 = vmul.f32 %v196, %v624
    %v628 = vadd.f32 %v620, %v625
    %v629 = vadd.f32 %v621, %v626
    %v630 = vadd.f32 %v622, %v627
    %v631 = vadd.f32 %v615, %v628
    %v632 = vadd.f32 %v616, %v629
    %v633 = vadd.f32 %v617, %v630
    %s634 = sld [smem:[#allocation6 + $0x18]]
    %v635 = vstv %s634
    %v636 = vmul.f32 %v70, %v635
    %v637 = vmul.f32 %v77, %v635
    %v638 = vmul.f32 %v84, %v635
    %s639 = sld [smem:[#allocation6 + $0x49]]
    %v640 = vstv %s639
    %v641 = vmul.f32 %v107, %v640
    %v642 = vmul.f32 %v108, %v640
    %v643 = vmul.f32 %v109, %v640
    %v644 = vadd.f32 %v636, %v641
    %v645 = vadd.f32 %v637, %v642
    %v646 = vadd.f32 %v638, %v643
    %v647 = vadd.f32 %v631, %v644
    %v648 = vadd.f32 %v632, %v645
    %v649 = vadd.f32 %v633, %v646
    %s650 = sld [smem:[#allocation6 + $0x19]]
    %v651 = vstv %s650
    %v652 = vmul.f32 %v150, %v651
    %v653 = vmul.f32 %v149, %v651
    %v654 = vmul.f32 %v151, %v651
    %s655 = sld [smem:[#allocation6 + $0x4a]]
    %v656 = vstv %s655
    %v657 = vmul.f32 %v206, %v656
    %v658 = vmul.f32 %v205, %v656
    %v659 = vmul.f32 %v207, %v656
    %v660 = vadd.f32 %v652, %v657
    %v661 = vadd.f32 %v653, %v658
    %v662 = vadd.f32 %v654, %v659
    %v663 = vadd.f32 %v647, %v660
    %v664 = vadd.f32 %v648, %v661
    %v665 = vadd.f32 %v649, %v662
    %s666 = sld [smem:[#allocation6 + $0x1a]]
    %v667 = vstv %s666
    %v668 = vmul.f32 %v160, %v667
    %v669 = vmul.f32 %v159, %v667
    %v670 = vmul.f32 %v161, %v667
    %s671 = sld [smem:[#allocation6 + $0x4b]]
    %v672 = vstv %s671
    %v673 = vmul.f32 %v215, %v672
    %v674 = vmul.f32 %v214, %v672
    %v675 = vmul.f32 %v216, %v672
    %v676 = vadd.f32 %v668, %v673
    %v677 = vadd.f32 %v669, %v674
    %v678 = vadd.f32 %v670, %v675
    %v679 = vadd.f32 %v663, %v676
    %v680 = vadd.f32 %v664, %v677
    %v681 = vadd.f32 %v665, %v678
    %s682 = sld [smem:[#allocation6 + $0x1b]]
    %v683 = vstv %s682
    %v684 = vmul.f32 %v170, %v683
    %v685 = vmul.f32 %v169, %v683
    %v686 = vmul.f32 %v171, %v683
    %s687 = sld [smem:[#allocation6 + $0x4c]]
    %v688 = vstv %s687
    %v689 = vmul.f32 %v224, %v688
    %v690 = vmul.f32 %v223, %v688
    %v691 = vmul.f32 %v225, %v688
    %v692 = vadd.f32 %v684, %v689
    %v693 = vadd.f32 %v685, %v690
    %v694 = vadd.f32 %v686, %v691
    %v695 = vadd.f32 %v679, %v692
    %v696 = vadd.f32 %v680, %v693
    %v697 = vadd.f32 %v681, %v694
    %v698 = vadd.f32 %v586, %v695
    %v699 = vadd.f32 %v587, %v696
    %v700 = vadd.f32 %v588, %v697
    %s701 = sld [smem:[#allocation6 + $0x1c]]
    %v702 = vstv %s701
    %v703 = vmul.f32 %v121, %v702
    %v704 = vmul.f32 %v120, %v702
    %v705 = vmul.f32 %v119, %v702
    %s706 = sld [smem:[#allocation6 + $0x4d]]
    %v707 = vstv %s706
    %v708 = vmul.f32 %v180, %v707
    %v709 = vmul.f32 %v179, %v707
    %v710 = vmul.f32 %v178, %v707
    %v711 = vadd.f32 %v703, %v708
    %v712 = vadd.f32 %v704, %v709
    %v713 = vadd.f32 %v705, %v710
    %s714 = sld [smem:[#allocation6 + $0x1d]]
    %v715 = vstv %s714
    %v716 = vmul.f32 %v131, %v715
    %v717 = vmul.f32 %v130, %v715
    %v718 = vmul.f32 %v129, %v715
    %s719 = sld [smem:[#allocation6 + $0x4e]]
    %v720 = vstv %s719
    %v721 = vmul.f32 %v189, %v720
    %v722 = vmul.f32 %v188, %v720
    %v723 = vmul.f32 %v187, %v720
    %v724 = vadd.f32 %v716, %v721
    %v725 = vadd.f32 %v717, %v722
    %v726 = vadd.f32 %v718, %v723
    %v727 = vadd.f32 %v711, %v724
    %v728 = vadd.f32 %v712, %v725
    %v729 = vadd.f32 %v713, %v726
    %s730 = sld [smem:[#allocation6 + $0x1e]]
    %v731 = vstv %s730
    %v732 = vmul.f32 %v141, %v731
    %v733 = vmul.f32 %v140, %v731
    %v734 = vmul.f32 %v139, %v731
    %s735 = sld [smem:[#allocation6 + $0x4f]]
    %v736 = vstv %s735
    %v737 = vmul.f32 %v198, %v736
    %v738 = vmul.f32 %v197, %v736
    %v739 = vmul.f32 %v196, %v736
    %v740 = vadd.f32 %v732, %v737
    %v741 = vadd.f32 %v733, %v738
    %v742 = vadd.f32 %v734, %v739
    %v743 = vadd.f32 %v727, %v740
    %v744 = vadd.f32 %v728, %v741
    %v745 = vadd.f32 %v729, %v742
    %s746 = sld [smem:[#allocation6 + $0x1f]]
    %v747 = vstv %s746
    %v748 = vmul.f32 %v70, %v747
    %v749 = vmul.f32 %v77, %v747
    %v750 = vmul.f32 %v84, %v747
    %s751 = sld [smem:[#allocation6 + $0x50]]
    %v752 = vstv %s751
    %v753 = vmul.f32 %v107, %v752
    %v754 = vmul.f32 %v108, %v752
    %v755 = vmul.f32 %v109, %v752
    %v756 = vadd.f32 %v748, %v753
    %v757 = vadd.f32 %v749, %v754
    %v758 = vadd.f32 %v750, %v755
    %v759 = vadd.f32 %v743, %v756
    %v760 = vadd.f32 %v744, %v757
    %v761 = vadd.f32 %v745, %v758
    %s762 = sld [smem:[#allocation6 + $0x20]]
    %v763 = vstv %s762
    %v764 = vmul.f32 %v150, %v763
    %v765 = vmul.f32 %v149, %v763
    %v766 = vmul.f32 %v151, %v763
    %s767 = sld [smem:[#allocation6 + $0x51]]
    %v768 = vstv %s767
    %v769 = vmul.f32 %v206, %v768
    %v770 = vmul.f32 %v205, %v768
    %v771 = vmul.f32 %v207, %v768
    %v772 = vadd.f32 %v764, %v769
    %v773 = vadd.f32 %v765, %v770
    %v774 = vadd.f32 %v766, %v771
    %v775 = vadd.f32 %v759, %v772
    %v776 = vadd.f32 %v760, %v773
    %v777 = vadd.f32 %v761, %v774
    %s778 = sld [smem:[#allocation6 + $0x21]]
    %v779 = vstv %s778
    %v780 = vmul.f32 %v160, %v779
    %v781 = vmul.f32 %v159, %v779
    %v782 = vmul.f32 %v161, %v779
    %s783 = sld [smem:[#allocation6 + $0x52]]
    %v784 = vstv %s783
    %v785 = vmul.f32 %v215, %v784
    %v786 = vmul.f32 %v214, %v784
    %v787 = vmul.f32 %v216, %v784
    %v788 = vadd.f32 %v780, %v785
    %v789 = vadd.f32 %v781, %v786
    %v790 = vadd.f32 %v782, %v787
    %v791 = vadd.f32 %v775, %v788
    %v792 = vadd.f32 %v776, %v789
    %v793 = vadd.f32 %v777, %v790
    %s794 = sld [smem:[#allocation6 + $0x22]]
    %v795 = vstv %s794
    %v796 = vmul.f32 %v170, %v795
    %v797 = vmul.f32 %v169, %v795
    %v798 = vmul.f32 %v171, %v795
    %s799 = sld [smem:[#allocation6 + $0x53]]
    %v800 = vstv %s799
    %v801 = vmul.f32 %v224, %v800
    %v802 = vmul.f32 %v223, %v800
    %v803 = vmul.f32 %v225, %v800
    %v804 = vadd.f32 %v796, %v801
    %v805 = vadd.f32 %v797, %v802
    %v806 = vadd.f32 %v798, %v803
    %v807 = vadd.f32 %v791, %v804
    %v808 = vadd.f32 %v792, %v805
    %v809 = vadd.f32 %v793, %v806
    %810 = vrot.lane.b32.xlu0 %v807, 109
    %v811 = vpop.permute.xlu0 %810
    %812 = vrot.lane.b32.xlu0 %v808, 109
    %v813 = vpop.permute.xlu0 %812
    %814 = vrot.lane.b32.xlu0 %v809, 109
    %v815 = vpop.permute.xlu0 %814
    %vm816 = vcmp.lt.s32.totalorder %v117, 109
    %v817 = vsel %vm816, %v813, %v815
    %v818 = vsel %vm816, %v811, %v813
    %v819 = vsel %vm816, %v815, %v811
    %v820 = vadd.f32 %v698, %v818
    %v821 = vadd.f32 %v699, %v817
    %v822 = vadd.f32 %v700, %v819
    %s823 = sld [smem:[#allocation6 + $0x23]]
    %v824 = vstv %s823
    %v825 = vmul.f32 %v121, %v824
    %v826 = vmul.f32 %v120, %v824
    %v827 = vmul.f32 %v119, %v824
    %s828 = sld [smem:[#allocation6 + $0x54]]
    %v829 = vstv %s828
    %v830 = vmul.f32 %v180, %v829
    %v831 = vmul.f32 %v179, %v829
    %v832 = vmul.f32 %v178, %v829
    %v833 = vadd.f32 %v825, %v830
    %v834 = vadd.f32 %v826, %v831
    %v835 = vadd.f32 %v827, %v832
    %s836 = sld [smem:[#allocation6 + $0x24]]
    %v837 = vstv %s836
    %v838 = vmul.f32 %v131, %v837
    %v839 = vmul.f32 %v130, %v837
    %v840 = vmul.f32 %v129, %v837
    %s841 = sld [smem:[#allocation6 + $0x55]]
    %v842 = vstv %s841
    %v843 = vmul.f32 %v189, %v842
    %v844 = vmul.f32 %v188, %v842
    %v845 = vmul.f32 %v187, %v842
    %v846 = vadd.f32 %v838, %v843
    %v847 = vadd.f32 %v839, %v844
    %v848 = vadd.f32 %v840, %v845
    %v849 = vadd.f32 %v833, %v846
    %v850 = vadd.f32 %v834, %v847
    %v851 = vadd.f32 %v835, %v848
    %s852 = sld [smem:[#allocation6 + $0x25]]
    %v853 = vstv %s852
    %v854 = vmul.f32 %v141, %v853
    %v855 = vmul.f32 %v140, %v853
    %v856 = vmul.f32 %v139, %v853
    %s857 = sld [smem:[#allocation6 + $0x56]]
    %v858 = vstv %s857
    %v859 = vmul.f32 %v198, %v858
    %v860 = vmul.f32 %v197, %v858
    %v861 = vmul.f32 %v196, %v858
    %v862 = vadd.f32 %v854, %v859
    %v863 = vadd.f32 %v855, %v860
    %v864 = vadd.f32 %v856, %v861
    %v865 = vadd.f32 %v849, %v862
    %v866 = vadd.f32 %v850, %v863
    %v867 = vadd.f32 %v851, %v864
    %s868 = sld [smem:[#allocation6 + $0x26]]
    %v869 = vstv %s868
    %v870 = vmul.f32 %v70, %v869
    %v871 = vmul.f32 %v77, %v869
    %v872 = vmul.f32 %v84, %v869
    %s873 = sld [smem:[#allocation6 + $0x57]]
    %v874 = vstv %s873
    %v875 = vmul.f32 %v107, %v874
    %v876 = vmul.f32 %v108, %v874
    %v877 = vmul.f32 %v109, %v874
    %v878 = vadd.f32 %v870, %v875
    %v879 = vadd.f32 %v871, %v876
    %v880 = vadd.f32 %v872, %v877
    %v881 = vadd.f32 %v865, %v878
    %v882 = vadd.f32 %v866, %v879
    %v883 = vadd.f32 %v867, %v880
    %s884 = sld [smem:[#allocation6 + $0x27]]
    %v885 = vstv %s884
    %v886 = vmul.f32 %v150, %v885
    %v887 = vmul.f32 %v149, %v885
    %v888 = vmul.f32 %v151, %v885
    %s889 = sld [smem:[#allocation6 + $0x58]]
    %v890 = vstv %s889
    %v891 = vmul.f32 %v206, %v890
    %v892 = vmul.f32 %v205, %v890
    %v893 = vmul.f32 %v207, %v890
    %v894 = vadd.f32 %v886, %v891
    %v895 = vadd.f32 %v887, %v892
    %v896 = vadd.f32 %v888, %v893
    %v897 = vadd.f32 %v881, %v894
    %v898 = vadd.f32 %v882, %v895
    %v899 = vadd.f32 %v883, %v896
    %s900 = sld [smem:[#allocation6 + $0x28]]
    %v901 = vstv %s900
    %v902 = vmul.f32 %v160, %v901
    %v903 = vmul.f32 %v159, %v901
    %v904 = vmul.f32 %v161, %v901
    %s905 = sld [smem:[#allocation6 + $0x59]]
    %v906 = vstv %s905
    %v907 = vmul.f32 %v215, %v906
    %v908 = vmul.f32 %v214, %v906
    %v909 = vmul.f32 %v216, %v906
    %v910 = vadd.f32 %v902, %v907
    %v911 = vadd.f32 %v903, %v908
    %v912 = vadd.f32 %v904, %v909
    %v913 = vadd.f32 %v897, %v910
    %v914 = vadd.f32 %v898, %v911
    %v915 = vadd.f32 %v899, %v912
    %s916 = sld [smem:[#allocation6 + $0x29]]
    %v917 = vstv %s916
    %v918 = vmul.f32 %v170, %v917
    %v919 = vmul.f32 %v169, %v917
    %v920 = vmul.f32 %v171, %v917
    %s921 = sld [smem:[#allocation6 + $0x5a]]
    %v922 = vstv %s921
    %v923 = vmul.f32 %v224, %v922
    %v924 = vmul.f32 %v223, %v922
    %v925 = vmul.f32 %v225, %v922
    %v926 = vadd.f32 %v918, %v923
    %v927 = vadd.f32 %v919, %v924
    %v928 = vadd.f32 %v920, %v925
    %v929 = vadd.f32 %v913, %v926
    %v930 = vadd.f32 %v914, %v927
    %v931 = vadd.f32 %v915, %v928
    %932 = vrot.lane.b32.xlu0 %v929, 90
    %v933 = vpop.permute.xlu0 %932
    %934 = vrot.lane.b32.xlu0 %v930, 90
    %v935 = vpop.permute.xlu0 %934
    %936 = vrot.lane.b32.xlu0 %v931, 90
    %v937 = vpop.permute.xlu0 %936
    %vm938 = vcmp.lt.s32.totalorder %v117, 90
    %v939 = vsel %vm938, %v935, %v937
    %v940 = vsel %vm938, %v933, %v935
    %v941 = vsel %vm938, %v937, %v933
    %v942 = vadd.f32 %v820, %v940
    %v943 = vadd.f32 %v821, %v939
    %v944 = vadd.f32 %v822, %v941
    %s945 = sld [smem:[#allocation6 + $0x2a]]
    %v946 = vstv %s945
    %v947 = vmul.f32 %v121, %v946
    %v948 = vmul.f32 %v120, %v946
    %v949 = vmul.f32 %v119, %v946
    %s950 = sld [smem:[#allocation6 + $0x5b]]
    %v951 = vstv %s950
    %v952 = vmul.f32 %v180, %v951
    %v953 = vmul.f32 %v179, %v951
    %v954 = vmul.f32 %v178, %v951
    %v955 = vadd.f32 %v947, %v952
    %v956 = vadd.f32 %v948, %v953
    %v957 = vadd.f32 %v949, %v954
    %s958 = sld [smem:[#allocation6 + $0x2b]]
    %v959 = vstv %s958
    %v960 = vmul.f32 %v131, %v959
    %v961 = vmul.f32 %v130, %v959
    %v962 = vmul.f32 %v129, %v959
    %s963 = sld [smem:[#allocation6 + $0x5c]]
    %v964 = vstv %s963
    %v965 = vmul.f32 %v189, %v964
    %v966 = vmul.f32 %v188, %v964
    %v967 = vmul.f32 %v187, %v964
    %v968 = vadd.f32 %v960, %v965
    %v969 = vadd.f32 %v961, %v966
    %v970 = vadd.f32 %v962, %v967
    %v971 = vadd.f32 %v955, %v968
    %v972 = vadd.f32 %v956, %v969
    %v973 = vadd.f32 %v957, %v970
    %s974 = sld [smem:[#allocation6 + $0x2c]]
    %v975 = vstv %s974
    %v976 = vmul.f32 %v141, %v975
    %v977 = vmul.f32 %v140, %v975
    %v978 = vmul.f32 %v139, %v975
    %s979 = sld [smem:[#allocation6 + $0x5d]]
    %v980 = vstv %s979
    %v981 = vmul.f32 %v198, %v980
    %v982 = vmul.f32 %v197, %v980
    %v983 = vmul.f32 %v196, %v980
    %v984 = vadd.f32 %v976, %v981
    %v985 = vadd.f32 %v977, %v982
    %v986 = vadd.f32 %v978, %v983
    %v987 = vadd.f32 %v971, %v984
    %v988 = vadd.f32 %v972, %v985
    %v989 = vadd.f32 %v973, %v986
    %s990 = sld [smem:[#allocation6 + $0x2d]]
    %v991 = vstv %s990
    %v992 = vmul.f32 %v70, %v991
    %v993 = vmul.f32 %v77, %v991
    %v994 = vmul.f32 %v84, %v991
    %s995 = sld [smem:[#allocation6 + $0x5e]]
    %v996 = vstv %s995
    %v997 = vmul.f32 %v107, %v996
    %v998 = vmul.f32 %v108, %v996
    %v999 = vmul.f32 %v109, %v996
    %v1000 = vadd.f32 %v992, %v997
    %v1001 = vadd.f32 %v993, %v998
    %v1002 = vadd.f32 %v994, %v999
    %v1003 = vadd.f32 %v987, %v1000
    %v1004 = vadd.f32 %v988, %v1001
    %v1005 = vadd.f32 %v989, %v1002
    %s1006 = sld [smem:[#allocation6 + $0x2e]]
    %v1007 = vstv %s1006
    %v1008 = vmul.f32 %v150, %v1007
    %v1009 = vmul.f32 %v149, %v1007
    %v1010 = vmul.f32 %v151, %v1007
    %s1011 = sld [smem:[#allocation6 + $0x5f]]
    %v1012 = vstv %s1011
    %v1013 = vmul.f32 %v206, %v1012
    %v1014 = vmul.f32 %v205, %v1012
    %v1015 = vmul.f32 %v207, %v1012
    %v1016 = vadd.f32 %v1008, %v1013
    %v1017 = vadd.f32 %v1009, %v1014
    %v1018 = vadd.f32 %v1010, %v1015
    %v1019 = vadd.f32 %v1003, %v1016
    %v1020 = vadd.f32 %v1004, %v1017
    %v1021 = vadd.f32 %v1005, %v1018
    %s1022 = sld [smem:[#allocation6 + $0x2f]]
    %v1023 = vstv %s1022
    %v1024 = vmul.f32 %v160, %v1023
    %v1025 = vmul.f32 %v159, %v1023
    %v1026 = vmul.f32 %v161, %v1023
    %s1027 = sld [smem:[#allocation6 + $0x60]]
    %v1028 = vstv %s1027
    %v1029 = vmul.f32 %v215, %v1028
    %v1030 = vmul.f32 %v214, %v1028
    %v1031 = vmul.f32 %v216, %v1028
    %v1032 = vadd.f32 %v1024, %v1029
    %v1033 = vadd.f32 %v1025, %v1030
    %v1034 = vadd.f32 %v1026, %v1031
    %v1035 = vadd.f32 %v1019, %v1032
    %v1036 = vadd.f32 %v1020, %v1033
    %v1037 = vadd.f32 %v1021, %v1034
    %s1038 = sld [smem:[#allocation6 + $0x30]]
    %v1039 = vstv %s1038
    %v1040 = vmul.f32 %v170, %v1039
    %v1041 = vmul.f32 %v169, %v1039
    %v1042 = vmul.f32 %v171, %v1039
    %s1043 = sld [smem:[#allocation6 + $0x61]]
    %v1044 = vstv %s1043
    %v1045 = vmul.f32 %v224, %v1044
    %v1046 = vmul.f32 %v223, %v1044
    %v1047 = vmul.f32 %v225, %v1044
    %v1048 = vadd.f32 %v1040, %v1045
    %v1049 = vadd.f32 %v1041, %v1046
    %v1050 = vadd.f32 %v1042, %v1047
    %v1051 = vadd.f32 %v1035, %v1048
    %v1052 = vadd.f32 %v1036, %v1049
    %v1053 = vadd.f32 %v1037, %v1050
    %1054 = vrot.lane.b32.xlu0 %v1051, 71
    %v1055 = vpop.permute.xlu0 %1054
    %1056 = vrot.lane.b32.xlu0 %v1052, 71
    %v1057 = vpop.permute.xlu0 %1056
    %1058 = vrot.lane.b32.xlu0 %v1053, 71
    %v1059 = vpop.permute.xlu0 %1058
    %vm1060 = vcmp.lt.s32.totalorder %v117, 71
    %v1061 = vsel %vm1060, %v1057, %v1059
    %v1062 = vsel %vm1060, %v1055, %v1057
    %v1063 = vsel %vm1060, %v1059, %v1055
    %v1064 = vadd.f32 %v942, %v1062
    %v1065 = vadd.f32 %v943, %v1061
    %v1066 = vadd.f32 %v944, %v1063
    %v1068 = vlaneseq
    %v1069 = vshrl.u32 %v1068, 7
    %v1070 = vsub.s32 0, %v1069
    %v1071 = vrot.slane %v57, %v1070
    %v1072 = vlaneseq
    %v1073 = vshrl.u32 %v1072, 7
    %v1074 = vsub.s32 1, %v1073
    %v1075 = vrot.slane %v57, %v1074
    %v1076 = vlaneseq
    %v1077 = vshrl.u32 %v1076, 7
    %v1078 = vsub.s32 2, %v1077
    %v1079 = vrot.slane %v57, %v1078
    %v1083 = vmul.f32 %v1064, %v1071
    %v1084 = vmul.f32 %v1065, %v1075
    %v1085 = vmul.f32 %v1066, %v1079
    %vm1086 = vcmask 1040384
    %v1087 = vsel %vm1086, %v1083, 0.0
    %v1088 = vsel %vm1086, %v1084, 0.0
    %v1089 = vadd.f32 %v1087, %v1088
    %v1090 = vsel %vm1086, %v1085, 0.0
    %v1091 = vadd.f32 %v1089, %v1090
    %1092 = vadd.xlane.f32.xlu0 %v1091
    %v1093 = vpop.xlane.xlu0 %1092
    %v1094 = vrot.slane %v1093, 4
    %v1095 = vadd.f32 %v1093, %v1094
    %v1096 = vrot.slane %v1095, 2
    %v1097 = vadd.f32 %v1095, %v1096
    %v1098 = vrot.slane %v1097, 1
    %v1099 = vadd.f32 %v1097, %v1098
    %s1100 = vtos %v1099
    %s1101 = sadd.f32 %s1100, 0.0
    %s1102 = scalar_lea.vmem [#allocation2], 12
    %v1103 = vld [vmem:[%s1102] sm:$0xff]
    %v1104 = vld [vmem:[%s1102 + $0x8] sm:$0xf]
    %v1106 = vcombine.high %v1103, %v1103
    %v1108 = vsel %vm63, %v1103, -inf
    %v1109 = vrot.slane %v1108, 4
    %v1110 = vmax.f32 %v1108, %v1109
    %v1111 = vrot.slane %v1110, 2
    %v1112 = vmax.f32 %v1110, %v1111
    %v1113 = vrot.slane %v1112, 1
    %v1114 = vmax.f32 %v1112, %v1113
    %v1115 = vsel %vm63, %v1106, -inf
    %v1116 = vrot.slane %v1115, 4
    %v1117 = vmax.f32 %v1115, %v1116
    %v1118 = vrot.slane %v1117, 2
    %v1119 = vmax.f32 %v1117, %v1118
    %v1120 = vrot.slane %v1119, 1
    %v1121 = vmax.f32 %v1119, %v1120
    %v1122 = vsel %vm63, %v1104, -inf
    %v1123 = vrot.slane %v1122, 4
    %v1124 = vmax.f32 %v1122, %v1123
    %v1125 = vrot.slane %v1124, 2
    %v1126 = vmax.f32 %v1124, %v1125
    %v1127 = vrot.slane %v1126, 1
    %v1128 = vmax.f32 %v1126, %v1127
    %v1129 = vsel %vm63, %v1103, 0.0
    %v1130 = vrot.slane %v1129, 4
    %v1131 = vadd.f32 %v1129, %v1130
    %v1132 = vrot.slane %v1131, 2
    %v1133 = vadd.f32 %v1131, %v1132
    %v1134 = vrot.slane %v1133, 1
    %v1135 = vadd.f32 %v1133, %v1134
    %v1136 = vsel %vm63, %v1106, 0.0
    %v1137 = vrot.slane %v1136, 4
    %v1138 = vadd.f32 %v1136, %v1137
    %v1139 = vrot.slane %v1138, 2
    %v1140 = vadd.f32 %v1138, %v1139
    %v1141 = vrot.slane %v1140, 1
    %v1142 = vadd.f32 %v1140, %v1141
    %v1143 = vsel %vm63, %v1104, 0.0
    %v1144 = vrot.slane %v1143, 4
    %v1145 = vadd.f32 %v1143, %v1144
    %v1146 = vrot.slane %v1145, 2
    %v1147 = vadd.f32 %v1145, %v1146
    %v1148 = vrot.slane %v1147, 1
    %v1149 = vadd.f32 %v1147, %v1148
    %v1150 = vmul.f32 %v1135, %v106
    %v1151 = vmul.f32 %v1142, %v106
    %v1152 = vmul.f32 %v1149, %v106
    %1153 = vrot.lane.b32.xlu0 %v1114, 3
    %v1154 = vpop.permute.xlu0 %1153
    %1155 = vrot.lane.b32.xlu0 %v1121, 3
    %v1156 = vpop.permute.xlu0 %1155
    %1157 = vrot.lane.b32.xlu0 %v1128, 3
    %v1158 = vpop.permute.xlu0 %1157
    %v1159 = vsel %vm118, %v1156, %v1158
    %v1160 = vsel %vm118, %v1154, %v1156
    %v1161 = vsel %vm118, %v1158, %v1154
    %1162 = vrot.lane.b32.xlu0 %v1114, 2
    %v1163 = vpop.permute.xlu0 %1162
    %1164 = vrot.lane.b32.xlu0 %v1121, 2
    %v1165 = vpop.permute.xlu0 %1164
    %1166 = vrot.lane.b32.xlu0 %v1128, 2
    %v1167 = vpop.permute.xlu0 %1166
    %v1168 = vsel %vm128, %v1165, %v1167
    %v1169 = vsel %vm128, %v1163, %v1165
    %v1170 = vsel %vm128, %v1167, %v1163
    %1171 = vrot.lane.b32.xlu0 %v1114, 1
    %v1172 = vpop.permute.xlu0 %1171
    %1173 = vrot.lane.b32.xlu0 %v1121, 1
    %v1174 = vpop.permute.xlu0 %1173
    %1175 = vrot.lane.b32.xlu0 %v1128, 1
    %v1176 = vpop.permute.xlu0 %1175
    %v1177 = vsel %vm138, %v1174, %v1176
    %v1178 = vsel %vm138, %v1172, %v1174
    %v1179 = vsel %vm138, %v1176, %v1172
    %1180 = vrot.lane.b32.xlu0 %v1114, 127
    %v1181 = vpop.permute.xlu0 %1180
    %1182 = vrot.lane.b32.xlu0 %v1121, 127
    %v1183 = vpop.permute.xlu0 %1182
    %1184 = vrot.lane.b32.xlu0 %v1128, 127
    %v1185 = vpop.permute.xlu0 %1184
    %v1186 = vsel %vm148, %v1183, %v1185
    %v1187 = vsel %vm148, %v1181, %v1183
    %v1188 = vsel %vm148, %v1185, %v1181
    %1189 = vrot.lane.b32.xlu0 %v1114, 126
    %v1190 = vpop.permute.xlu0 %1189
    %1191 = vrot.lane.b32.xlu0 %v1121, 126
    %v1192 = vpop.permute.xlu0 %1191
    %1193 = vrot.lane.b32.xlu0 %v1128, 126
    %v1194 = vpop.permute.xlu0 %1193
    %v1195 = vsel %vm158, %v1192, %v1194
    %v1196 = vsel %vm158, %v1190, %v1192
    %v1197 = vsel %vm158, %v1194, %v1190
    %1198 = vrot.lane.b32.xlu0 %v1114, 125
    %v1199 = vpop.permute.xlu0 %1198
    %1200 = vrot.lane.b32.xlu0 %v1121, 125
    %v1201 = vpop.permute.xlu0 %1200
    %1202 = vrot.lane.b32.xlu0 %v1128, 125
    %v1203 = vpop.permute.xlu0 %1202
    %v1204 = vsel %vm168, %v1201, %v1203
    %v1205 = vsel %vm168, %v1199, %v1201
    %v1206 = vsel %vm168, %v1203, %v1199
    %1207 = vrot.lane.b32.xlu0 %v1150, 3
    %v1208 = vpop.permute.xlu0 %1207
    %1209 = vrot.lane.b32.xlu0 %v1151, 3
    %v1210 = vpop.permute.xlu0 %1209
    %1211 = vrot.lane.b32.xlu0 %v1152, 3
    %v1212 = vpop.permute.xlu0 %1211
    %v1213 = vsel %vm118, %v1210, %v1212
    %v1214 = vsel %vm118, %v1208, %v1210
    %v1215 = vsel %vm118, %v1212, %v1208
    %1216 = vrot.lane.b32.xlu0 %v1150, 2
    %v1217 = vpop.permute.xlu0 %1216
    %1218 = vrot.lane.b32.xlu0 %v1151, 2
    %v1219 = vpop.permute.xlu0 %1218
    %1220 = vrot.lane.b32.xlu0 %v1152, 2
    %v1221 = vpop.permute.xlu0 %1220
    %v1222 = vsel %vm128, %v1219, %v1221
    %v1223 = vsel %vm128, %v1217, %v1219
    %v1224 = vsel %vm128, %v1221, %v1217
    %1225 = vrot.lane.b32.xlu0 %v1150, 1
    %v1226 = vpop.permute.xlu0 %1225
    %1227 = vrot.lane.b32.xlu0 %v1151, 1
    %v1228 = vpop.permute.xlu0 %1227
    %1229 = vrot.lane.b32.xlu0 %v1152, 1
    %v1230 = vpop.permute.xlu0 %1229
    %v1231 = vsel %vm138, %v1228, %v1230
    %v1232 = vsel %vm138, %v1226, %v1228
    %v1233 = vsel %vm138, %v1230, %v1226
    %1234 = vrot.lane.b32.xlu0 %v1150, 127
    %v1235 = vpop.permute.xlu0 %1234
    %1236 = vrot.lane.b32.xlu0 %v1151, 127
    %v1237 = vpop.permute.xlu0 %1236
    %1238 = vrot.lane.b32.xlu0 %v1152, 127
    %v1239 = vpop.permute.xlu0 %1238
    %v1240 = vsel %vm148, %v1237, %v1239
    %v1241 = vsel %vm148, %v1235, %v1237
    %v1242 = vsel %vm148, %v1239, %v1235
    %1243 = vrot.lane.b32.xlu0 %v1150, 126
    %v1244 = vpop.permute.xlu0 %1243
    %1245 = vrot.lane.b32.xlu0 %v1151, 126
    %v1246 = vpop.permute.xlu0 %1245
    %1247 = vrot.lane.b32.xlu0 %v1152, 126
    %v1248 = vpop.permute.xlu0 %1247
    %v1249 = vsel %vm158, %v1246, %v1248
    %v1250 = vsel %vm158, %v1244, %v1246
    %v1251 = vsel %vm158, %v1248, %v1244
    %1252 = vrot.lane.b32.xlu0 %v1150, 125
    %v1253 = vpop.permute.xlu0 %1252
    %1254 = vrot.lane.b32.xlu0 %v1151, 125
    %v1255 = vpop.permute.xlu0 %1254
    %1256 = vrot.lane.b32.xlu0 %v1152, 125
    %v1257 = vpop.permute.xlu0 %1256
    %v1258 = vsel %vm168, %v1255, %v1257
    %v1259 = vsel %vm168, %v1253, %v1255
    %v1260 = vsel %vm168, %v1257, %v1253
    %v1261 = vmul.f32 %v1161, %v227
    %v1262 = vmul.f32 %v1160, %v227
    %v1263 = vmul.f32 %v1159, %v227
    %v1264 = vmul.f32 %v1215, %v232
    %v1265 = vmul.f32 %v1214, %v232
    %v1266 = vmul.f32 %v1213, %v232
    %v1267 = vadd.f32 %v1261, %v1264
    %v1268 = vadd.f32 %v1262, %v1265
    %v1269 = vadd.f32 %v1263, %v1266
    %v1270 = vmul.f32 %v1170, %v240
    %v1271 = vmul.f32 %v1169, %v240
    %v1272 = vmul.f32 %v1168, %v240
    %v1273 = vmul.f32 %v1224, %v245
    %v1274 = vmul.f32 %v1223, %v245
    %v1275 = vmul.f32 %v1222, %v245
    %v1276 = vadd.f32 %v1270, %v1273
    %v1277 = vadd.f32 %v1271, %v1274
    %v1278 = vadd.f32 %v1272, %v1275
    %v1279 = vadd.f32 %v1267, %v1276
    %v1280 = vadd.f32 %v1268, %v1277
    %v1281 = vadd.f32 %v1269, %v1278
    %v1282 = vmul.f32 %v1179, %v256
    %v1283 = vmul.f32 %v1178, %v256
    %v1284 = vmul.f32 %v1177, %v256
    %v1285 = vmul.f32 %v1233, %v261
    %v1286 = vmul.f32 %v1232, %v261
    %v1287 = vmul.f32 %v1231, %v261
    %v1288 = vadd.f32 %v1282, %v1285
    %v1289 = vadd.f32 %v1283, %v1286
    %v1290 = vadd.f32 %v1284, %v1287
    %v1291 = vadd.f32 %v1279, %v1288
    %v1292 = vadd.f32 %v1280, %v1289
    %v1293 = vadd.f32 %v1281, %v1290
    %v1294 = vmul.f32 %v1114, %v272
    %v1295 = vmul.f32 %v1121, %v272
    %v1296 = vmul.f32 %v1128, %v272
    %v1297 = vmul.f32 %v1150, %v277
    %v1298 = vmul.f32 %v1151, %v277
    %v1299 = vmul.f32 %v1152, %v277
    %v1300 = vadd.f32 %v1294, %v1297
    %v1301 = vadd.f32 %v1295, %v1298
    %v1302 = vadd.f32 %v1296, %v1299
    %v1303 = vadd.f32 %v1291, %v1300
    %v1304 = vadd.f32 %v1292, %v1301
    %v1305 = vadd.f32 %v1293, %v1302
    %v1306 = vmul.f32 %v1187, %v288
    %v1307 = vmul.f32 %v1186, %v288
    %v1308 = vmul.f32 %v1188, %v288
    %v1309 = vmul.f32 %v1241, %v293
    %v1310 = vmul.f32 %v1240, %v293
    %v1311 = vmul.f32 %v1242, %v293
    %v1312 = vadd.f32 %v1306, %v1309
    %v1313 = vadd.f32 %v1307, %v1310
    %v1314 = vadd.f32 %v1308, %v1311
    %v1315 = vadd.f32 %v1303, %v1312
    %v1316 = vadd.f32 %v1304, %v1313
    %v1317 = vadd.f32 %v1305, %v1314
    %v1318 = vmul.f32 %v1196, %v304
    %v1319 = vmul.f32 %v1195, %v304
    %v1320 = vmul.f32 %v1197, %v304
    %v1321 = vmul.f32 %v1250, %v309
    %v1322 = vmul.f32 %v1249, %v309
    %v1323 = vmul.f32 %v1251, %v309
    %v1324 = vadd.f32 %v1318, %v1321
    %v1325 = vadd.f32 %v1319, %v1322
    %v1326 = vadd.f32 %v1320, %v1323
    %v1327 = vadd.f32 %v1315, %v1324
    %v1328 = vadd.f32 %v1316, %v1325
    %v1329 = vadd.f32 %v1317, %v1326
    %v1330 = vmul.f32 %v1205, %v320
    %v1331 = vmul.f32 %v1204, %v320
    %v1332 = vmul.f32 %v1206, %v320
    %v1333 = vmul.f32 %v1259, %v325
    %v1334 = vmul.f32 %v1258, %v325
    %v1335 = vmul.f32 %v1260, %v325
    %v1336 = vadd.f32 %v1330, %v1333
    %v1337 = vadd.f32 %v1331, %v1334
    %v1338 = vadd.f32 %v1332, %v1335
    %v1339 = vadd.f32 %v1327, %v1336
    %v1340 = vadd.f32 %v1328, %v1337
    %v1341 = vadd.f32 %v1329, %v1338
    %1342 = vrot.lane.b32.xlu0 %v1339, 57
    %v1343 = vpop.permute.xlu0 %1342
    %1344 = vrot.lane.b32.xlu0 %v1340, 57
    %v1345 = vpop.permute.xlu0 %1344
    %1346 = vrot.lane.b32.xlu0 %v1341, 57
    %v1347 = vpop.permute.xlu0 %1346
    %v1348 = vsel %vm341, %v1345, %v1347
    %v1349 = vsel %vm341, %v1343, %v1345
    %v1350 = vsel %vm341, %v1347, %v1343
    %v1351 = vmul.f32 %v1161, %v346
    %v1352 = vmul.f32 %v1160, %v346
    %v1353 = vmul.f32 %v1159, %v346
    %v1354 = vmul.f32 %v1215, %v351
    %v1355 = vmul.f32 %v1214, %v351
    %v1356 = vmul.f32 %v1213, %v351
    %v1357 = vadd.f32 %v1351, %v1354
    %v1358 = vadd.f32 %v1352, %v1355
    %v1359 = vadd.f32 %v1353, %v1356
    %v1360 = vmul.f32 %v1170, %v359
    %v1361 = vmul.f32 %v1169, %v359
    %v1362 = vmul.f32 %v1168, %v359
    %v1363 = vmul.f32 %v1224, %v364
    %v1364 = vmul.f32 %v1223, %v364
    %v1365 = vmul.f32 %v1222, %v364
    %v1366 = vadd.f32 %v1360, %v1363
    %v1367 = vadd.f32 %v1361, %v1364
    %v1368 = vadd.f32 %v1362, %v1365
    %v1369 = vadd.f32 %v1357, %v1366
    %v1370 = vadd.f32 %v1358, %v1367
    %v1371 = vadd.f32 %v1359, %v1368
    %v1372 = vmul.f32 %v1179, %v375
    %v1373 = vmul.f32 %v1178, %v375
    %v1374 = vmul.f32 %v1177, %v375
    %v1375 = vmul.f32 %v1233, %v380
    %v1376 = vmul.f32 %v1232, %v380
    %v1377 = vmul.f32 %v1231, %v380
    %v1378 = vadd.f32 %v1372, %v1375
    %v1379 = vadd.f32 %v1373, %v1376
    %v1380 = vadd.f32 %v1374, %v1377
    %v1381 = vadd.f32 %v1369, %v1378
    %v1382 = vadd.f32 %v1370, %v1379
    %v1383 = vadd.f32 %v1371, %v1380
    %v1384 = vmul.f32 %v1114, %v391
    %v1385 = vmul.f32 %v1121, %v391
    %v1386 = vmul.f32 %v1128, %v391
    %v1387 = vmul.f32 %v1150, %v396
    %v1388 = vmul.f32 %v1151, %v396
    %v1389 = vmul.f32 %v1152, %v396
    %v1390 = vadd.f32 %v1384, %v1387
    %v1391 = vadd.f32 %v1385, %v1388
    %v1392 = vadd.f32 %v1386, %v1389
    %v1393 = vadd.f32 %v1381, %v1390
    %v1394 = vadd.f32 %v1382, %v1391
    %v1395 = vadd.f32 %v1383, %v1392
    %v1396 = vmul.f32 %v1187, %v407
    %v1397 = vmul.f32 %v1186, %v407
    %v1398 = vmul.f32 %v1188, %v407
    %v1399 = vmul.f32 %v1241, %v412
    %v1400 = vmul.f32 %v1240, %v412
    %v1401 = vmul.f32 %v1242, %v412
    %v1402 = vadd.f32 %v1396, %v1399
    %v1403 = vadd.f32 %v1397, %v1400
    %v1404 = vadd.f32 %v1398, %v1401
    %v1405 = vadd.f32 %v1393, %v1402
    %v1406 = vadd.f32 %v1394, %v1403
    %v1407 = vadd.f32 %v1395, %v1404
    %v1408 = vmul.f32 %v1196, %v423
    %v1409 = vmul.f32 %v1195, %v423
    %v1410 = vmul.f32 %v1197, %v423
    %v1411 = vmul.f32 %v1250, %v428
    %v1412 = vmul.f32 %v1249, %v428
    %v1413 = vmul.f32 %v1251, %v428
    %v1414 = vadd.f32 %v1408, %v1411
    %v1415 = vadd.f32 %v1409, %v1412
    %v1416 = vadd.f32 %v1410, %v1413
    %v1417 = vadd.f32 %v1405, %v1414
    %v1418 = vadd.f32 %v1406, %v1415
    %v1419 = vadd.f32 %v1407, %v1416
    %v1420 = vmul.f32 %v1205, %v439
    %v1421 = vmul.f32 %v1204, %v439
    %v1422 = vmul.f32 %v1206, %v439
    %v1423 = vmul.f32 %v1259, %v444
    %v1424 = vmul.f32 %v1258, %v444
    %v1425 = vmul.f32 %v1260, %v444
    %v1426 = vadd.f32 %v1420, %v1423
    %v1427 = vadd.f32 %v1421, %v1424
    %v1428 = vadd.f32 %v1422, %v1425
    %v1429 = vadd.f32 %v1417, %v1426
    %v1430 = vadd.f32 %v1418, %v1427
    %v1431 = vadd.f32 %v1419, %v1428
    %1432 = vrot.lane.b32.xlu0 %v1429, 38
    %v1433 = vpop.permute.xlu0 %1432
    %1434 = vrot.lane.b32.xlu0 %v1430, 38
    %v1435 = vpop.permute.xlu0 %1434
    %1436 = vrot.lane.b32.xlu0 %v1431, 38
    %v1437 = vpop.permute.xlu0 %1436
    %v1438 = vsel %vm460, %v1435, %v1437
    %v1439 = vsel %vm460, %v1433, %v1435
    %v1440 = vsel %vm460, %v1437, %v1433
    %v1441 = vadd.f32 %v1350, %v1440
    %v1442 = vadd.f32 %v1349, %v1439
    %v1443 = vadd.f32 %v1348, %v1438
    %v1444 = vmul.f32 %v1161, %v468
    %v1445 = vmul.f32 %v1160, %v468
    %v1446 = vmul.f32 %v1159, %v468
    %v1447 = vmul.f32 %v1215, %v473
    %v1448 = vmul.f32 %v1214, %v473
    %v1449 = vmul.f32 %v1213, %v473
    %v1450 = vadd.f32 %v1444, %v1447
    %v1451 = vadd.f32 %v1445, %v1448
    %v1452 = vadd.f32 %v1446, %v1449
    %v1453 = vmul.f32 %v1170, %v481
    %v1454 = vmul.f32 %v1169, %v481
    %v1455 = vmul.f32 %v1168, %v481
    %v1456 = vmul.f32 %v1224, %v486
    %v1457 = vmul.f32 %v1223, %v486
    %v1458 = vmul.f32 %v1222, %v486
    %v1459 = vadd.f32 %v1453, %v1456
    %v1460 = vadd.f32 %v1454, %v1457
    %v1461 = vadd.f32 %v1455, %v1458
    %v1462 = vadd.f32 %v1450, %v1459
    %v1463 = vadd.f32 %v1451, %v1460
    %v1464 = vadd.f32 %v1452, %v1461
    %v1465 = vmul.f32 %v1179, %v497
    %v1466 = vmul.f32 %v1178, %v497
    %v1467 = vmul.f32 %v1177, %v497
    %v1468 = vmul.f32 %v1233, %v502
    %v1469 = vmul.f32 %v1232, %v502
    %v1470 = vmul.f32 %v1231, %v502
    %v1471 = vadd.f32 %v1465, %v1468
    %v1472 = vadd.f32 %v1466, %v1469
    %v1473 = vadd.f32 %v1467, %v1470
    %v1474 = vadd.f32 %v1462, %v1471
    %v1475 = vadd.f32 %v1463, %v1472
    %v1476 = vadd.f32 %v1464, %v1473
    %v1477 = vmul.f32 %v1114, %v513
    %v1478 = vmul.f32 %v1121, %v513
    %v1479 = vmul.f32 %v1128, %v513
    %v1480 = vmul.f32 %v1150, %v518
    %v1481 = vmul.f32 %v1151, %v518
    %v1482 = vmul.f32 %v1152, %v518
    %v1483 = vadd.f32 %v1477, %v1480
    %v1484 = vadd.f32 %v1478, %v1481
    %v1485 = vadd.f32 %v1479, %v1482
    %v1486 = vadd.f32 %v1474, %v1483
    %v1487 = vadd.f32 %v1475, %v1484
    %v1488 = vadd.f32 %v1476, %v1485
    %v1489 = vmul.f32 %v1187, %v529
    %v1490 = vmul.f32 %v1186, %v529
    %v1491 = vmul.f32 %v1188, %v529
    %v1492 = vmul.f32 %v1241, %v534
    %v1493 = vmul.f32 %v1240, %v534
    %v1494 = vmul.f32 %v1242, %v534
    %v1495 = vadd.f32 %v1489, %v1492
    %v1496 = vadd.f32 %v1490, %v1493
    %v1497 = vadd.f32 %v1491, %v1494
    %v1498 = vadd.f32 %v1486, %v1495
    %v1499 = vadd.f32 %v1487, %v1496
    %v1500 = vadd.f32 %v1488, %v1497
    %v1501 = vmul.f32 %v1196, %v545
    %v1502 = vmul.f32 %v1195, %v545
    %v1503 = vmul.f32 %v1197, %v545
    %v1504 = vmul.f32 %v1250, %v550
    %v1505 = vmul.f32 %v1249, %v550
    %v1506 = vmul.f32 %v1251, %v550
    %v1507 = vadd.f32 %v1501, %v1504
    %v1508 = vadd.f32 %v1502, %v1505
    %v1509 = vadd.f32 %v1503, %v1506
    %v1510 = vadd.f32 %v1498, %v1507
    %v1511 = vadd.f32 %v1499, %v1508
    %v1512 = vadd.f32 %v1500, %v1509
    %v1513 = vmul.f32 %v1205, %v561
    %v1514 = vmul.f32 %v1204, %v561
    %v1515 = vmul.f32 %v1206, %v561
    %v1516 = vmul.f32 %v1259, %v566
    %v1517 = vmul.f32 %v1258, %v566
    %v1518 = vmul.f32 %v1260, %v566
    %v1519 = vadd.f32 %v1513, %v1516
    %v1520 = vadd.f32 %v1514, %v1517
    %v1521 = vadd.f32 %v1515, %v1518
    %v1522 = vadd.f32 %v1510, %v1519
    %v1523 = vadd.f32 %v1511, %v1520
    %v1524 = vadd.f32 %v1512, %v1521
    %1525 = vrot.lane.b32.xlu0 %v1522, 19
    %v1526 = vpop.permute.xlu0 %1525
    %1527 = vrot.lane.b32.xlu0 %v1523, 19
    %v1528 = vpop.permute.xlu0 %1527
    %1529 = vrot.lane.b32.xlu0 %v1524, 19
    %v1530 = vpop.permute.xlu0 %1529
    %v1531 = vsel %vm582, %v1528, %v1530
    %v1532 = vsel %vm582, %v1526, %v1528
    %v1533 = vsel %vm582, %v1530, %v1526
    %v1534 = vadd.f32 %v1441, %v1533
    %v1535 = vadd.f32 %v1442, %v1532
    %v1536 = vadd.f32 %v1443, %v1531
    %v1537 = vmul.f32 %v1161, %v590
    %v1538 = vmul.f32 %v1160, %v590
    %v1539 = vmul.f32 %v1159, %v590
    %v1540 = vmul.f32 %v1215, %v595
    %v1541 = vmul.f32 %v1214, %v595
    %v1542 = vmul.f32 %v1213, %v595
    %v1543 = vadd.f32 %v1537, %v1540
    %v1544 = vadd.f32 %v1538, %v1541
    %v1545 = vadd.f32 %v1539, %v1542
    %v1546 = vmul.f32 %v1170, %v603
    %v1547 = vmul.f32 %v1169, %v603
    %v1548 = vmul.f32 %v1168, %v603
    %v1549 = vmul.f32 %v1224, %v608
    %v1550 = vmul.f32 %v1223, %v608
    %v1551 = vmul.f32 %v1222, %v608
    %v1552 = vadd.f32 %v1546, %v1549
    %v1553 = vadd.f32 %v1547, %v1550
    %v1554 = vadd.f32 %v1548, %v1551
    %v1555 = vadd.f32 %v1543, %v1552
    %v1556 = vadd.f32 %v1544, %v1553
    %v1557 = vadd.f32 %v1545, %v1554
    %v1558 = vmul.f32 %v1179, %v619
    %v1559 = vmul.f32 %v1178, %v619
    %v1560 = vmul.f32 %v1177, %v619
    %v1561 = vmul.f32 %v1233, %v624
    %v1562 = vmul.f32 %v1232, %v624
    %v1563 = vmul.f32 %v1231, %v624
    %v1564 = vadd.f32 %v1558, %v1561
    %v1565 = vadd.f32 %v1559, %v1562
    %v1566 = vadd.f32 %v1560, %v1563
    %v1567 = vadd.f32 %v1555, %v1564
    %v1568 = vadd.f32 %v1556, %v1565
    %v1569 = vadd.f32 %v1557, %v1566
    %v1570 = vmul.f32 %v1114, %v635
    %v1571 = vmul.f32 %v1121, %v635
    %v1572 = vmul.f32 %v1128, %v635
    %v1573 = vmul.f32 %v1150, %v640
    %v1574 = vmul.f32 %v1151, %v640
    %v1575 = vmul.f32 %v1152, %v640
    %v1576 = vadd.f32 %v1570, %v1573
    %v1577 = vadd.f32 %v1571, %v1574
    %v1578 = vadd.f32 %v1572, %v1575
    %v1579 = vadd.f32 %v1567, %v1576
    %v1580 = vadd.f32 %v1568, %v1577
    %v1581 = vadd.f32 %v1569, %v1578
    %v1582 = vmul.f32 %v1187, %v651
    %v1583 = vmul.f32 %v1186, %v651
    %v1584 = vmul.f32 %v1188, %v651
    %v1585 = vmul.f32 %v1241, %v656
    %v1586 = vmul.f32 %v1240, %v656
    %v1587 = vmul.f32 %v1242, %v656
    %v1588 = vadd.f32 %v1582, %v1585
    %v1589 = vadd.f32 %v1583, %v1586
    %v1590 = vadd.f32 %v1584, %v1587
    %v1591 = vadd.f32 %v1579, %v1588
    %v1592 = vadd.f32 %v1580, %v1589
    %v1593 = vadd.f32 %v1581, %v1590
    %v1594 = vmul.f32 %v1196, %v667
    %v1595 = vmul.f32 %v1195, %v667
    %v1596 = vmul.f32 %v1197, %v667
    %v1597 = vmul.f32 %v1250, %v672
    %v1598 = vmul.f32 %v1249, %v672
    %v1599 = vmul.f32 %v1251, %v672
    %v1600 = vadd.f32 %v1594, %v1597
    %v1601 = vadd.f32 %v1595, %v1598
    %v1602 = vadd.f32 %v1596, %v1599
    %v1603 = vadd.f32 %v1591, %v1600
    %v1604 = vadd.f32 %v1592, %v1601
    %v1605 = vadd.f32 %v1593, %v1602
    %v1606 = vmul.f32 %v1205, %v683
    %v1607 = vmul.f32 %v1204, %v683
    %v1608 = vmul.f32 %v1206, %v683
    %v1609 = vmul.f32 %v1259, %v688
    %v1610 = vmul.f32 %v1258, %v688
    %v1611 = vmul.f32 %v1260, %v688
    %v1612 = vadd.f32 %v1606, %v1609
    %v1613 = vadd.f32 %v1607, %v1610
    %v1614 = vadd.f32 %v1608, %v1611
    %v1615 = vadd.f32 %v1603, %v1612
    %v1616 = vadd.f32 %v1604, %v1613
    %v1617 = vadd.f32 %v1605, %v1614
    %v1618 = vadd.f32 %v1534, %v1615
    %v1619 = vadd.f32 %v1535, %v1616
    %v1620 = vadd.f32 %v1536, %v1617
    %v1621 = vmul.f32 %v1161, %v702
    %v1622 = vmul.f32 %v1160, %v702
    %v1623 = vmul.f32 %v1159, %v702
    %v1624 = vmul.f32 %v1215, %v707
    %v1625 = vmul.f32 %v1214, %v707
    %v1626 = vmul.f32 %v1213, %v707
    %v1627 = vadd.f32 %v1621, %v1624
    %v1628 = vadd.f32 %v1622, %v1625
    %v1629 = vadd.f32 %v1623, %v1626
    %v1630 = vmul.f32 %v1170, %v715
    %v1631 = vmul.f32 %v1169, %v715
    %v1632 = vmul.f32 %v1168, %v715
    %v1633 = vmul.f32 %v1224, %v720
    %v1634 = vmul.f32 %v1223, %v720
    %v1635 = vmul.f32 %v1222, %v720
    %v1636 = vadd.f32 %v1630, %v1633
    %v1637 = vadd.f32 %v1631, %v1634
    %v1638 = vadd.f32 %v1632, %v1635
    %v1639 = vadd.f32 %v1627, %v1636
    %v1640 = vadd.f32 %v1628, %v1637
    %v1641 = vadd.f32 %v1629, %v1638
    %v1642 = vmul.f32 %v1179, %v731
    %v1643 = vmul.f32 %v1178, %v731
    %v1644 = vmul.f32 %v1177, %v731
    %v1645 = vmul.f32 %v1233, %v736
    %v1646 = vmul.f32 %v1232, %v736
    %v1647 = vmul.f32 %v1231, %v736
    %v1648 = vadd.f32 %v1642, %v1645
    %v1649 = vadd.f32 %v1643, %v1646
    %v1650 = vadd.f32 %v1644, %v1647
    %v1651 = vadd.f32 %v1639, %v1648
    %v1652 = vadd.f32 %v1640, %v1649
    %v1653 = vadd.f32 %v1641, %v1650
    %v1654 = vmul.f32 %v1114, %v747
    %v1655 = vmul.f32 %v1121, %v747
    %v1656 = vmul.f32 %v1128, %v747
    %v1657 = vmul.f32 %v1150, %v752
    %v1658 = vmul.f32 %v1151, %v752
    %v1659 = vmul.f32 %v1152, %v752
    %v1660 = vadd.f32 %v1654, %v1657
    %v1661 = vadd.f32 %v1655, %v1658
    %v1662 = vadd.f32 %v1656, %v1659
    %v1663 = vadd.f32 %v1651, %v1660
    %v1664 = vadd.f32 %v1652, %v1661
    %v1665 = vadd.f32 %v1653, %v1662
    %v1666 = vmul.f32 %v1187, %v763
    %v1667 = vmul.f32 %v1186, %v763
    %v1668 = vmul.f32 %v1188, %v763
    %v1669 = vmul.f32 %v1241, %v768
    %v1670 = vmul.f32 %v1240, %v768
    %v1671 = vmul.f32 %v1242, %v768
    %v1672 = vadd.f32 %v1666, %v1669
    %v1673 = vadd.f32 %v1667, %v1670
    %v1674 = vadd.f32 %v1668, %v1671
    %v1675 = vadd.f32 %v1663, %v1672
    %v1676 = vadd.f32 %v1664, %v1673
    %v1677 = vadd.f32 %v1665, %v1674
    %v1678 = vmul.f32 %v1196, %v779
    %v1679 = vmul.f32 %v1195, %v779
    %v1680 = vmul.f32 %v1197, %v779
    %v1681 = vmul.f32 %v1250, %v784
    %v1682 = vmul.f32 %v1249, %v784
    %v1683 = vmul.f32 %v1251, %v784
    %v1684 = vadd.f32 %v1678, %v1681
    %v1685 = vadd.f32 %v1679, %v1682
    %v1686 = vadd.f32 %v1680, %v1683
    %v1687 = vadd.f32 %v1675, %v1684
    %v1688 = vadd.f32 %v1676, %v1685
    %v1689 = vadd.f32 %v1677, %v1686
    %v1690 = vmul.f32 %v1205, %v795
    %v1691 = vmul.f32 %v1204, %v795
    %v1692 = vmul.f32 %v1206, %v795
    %v1693 = vmul.f32 %v1259, %v800
    %v1694 = vmul.f32 %v1258, %v800
    %v1695 = vmul.f32 %v1260, %v800
    %v1696 = vadd.f32 %v1690, %v1693
    %v1697 = vadd.f32 %v1691, %v1694
    %v1698 = vadd.f32 %v1692, %v1695
    %v1699 = vadd.f32 %v1687, %v1696
    %v1700 = vadd.f32 %v1688, %v1697
    %v1701 = vadd.f32 %v1689, %v1698
    %1702 = vrot.lane.b32.xlu0 %v1699, 109
    %v1703 = vpop.permute.xlu0 %1702
    %1704 = vrot.lane.b32.xlu0 %v1700, 109
    %v1705 = vpop.permute.xlu0 %1704
    %1706 = vrot.lane.b32.xlu0 %v1701, 109
    %v1707 = vpop.permute.xlu0 %1706
    %v1708 = vsel %vm816, %v1705, %v1707
    %v1709 = vsel %vm816, %v1703, %v1705
    %v1710 = vsel %vm816, %v1707, %v1703
    %v1711 = vadd.f32 %v1618, %v1709
    %v1712 = vadd.f32 %v1619, %v1708
    %v1713 = vadd.f32 %v1620, %v1710
    %v1714 = vmul.f32 %v1161, %v824
    %v1715 = vmul.f32 %v1160, %v824
    %v1716 = vmul.f32 %v1159, %v824
    %v1717 = vmul.f32 %v1215, %v829
    %v1718 = vmul.f32 %v1214, %v829
    %v1719 = vmul.f32 %v1213, %v829
    %v1720 = vadd.f32 %v1714, %v1717
    %v1721 = vadd.f32 %v1715, %v1718
    %v1722 = vadd.f32 %v1716, %v1719
    %v1723 = vmul.f32 %v1170, %v837
    %v1724 = vmul.f32 %v1169, %v837
    %v1725 = vmul.f32 %v1168, %v837
    %v1726 = vmul.f32 %v1224, %v842
    %v1727 = vmul.f32 %v1223, %v842
    %v1728 = vmul.f32 %v1222, %v842
    %v1729 = vadd.f32 %v1723, %v1726
    %v1730 = vadd.f32 %v1724, %v1727
    %v1731 = vadd.f32 %v1725, %v1728
    %v1732 = vadd.f32 %v1720, %v1729
    %v1733 = vadd.f32 %v1721, %v1730
    %v1734 = vadd.f32 %v1722, %v1731
    %v1735 = vmul.f32 %v1179, %v853
    %v1736 = vmul.f32 %v1178, %v853
    %v1737 = vmul.f32 %v1177, %v853
    %v1738 = vmul.f32 %v1233, %v858
    %v1739 = vmul.f32 %v1232, %v858
    %v1740 = vmul.f32 %v1231, %v858
    %v1741 = vadd.f32 %v1735, %v1738
    %v1742 = vadd.f32 %v1736, %v1739
    %v1743 = vadd.f32 %v1737, %v1740
    %v1744 = vadd.f32 %v1732, %v1741
    %v1745 = vadd.f32 %v1733, %v1742
    %v1746 = vadd.f32 %v1734, %v1743
    %v1747 = vmul.f32 %v1114, %v869
    %v1748 = vmul.f32 %v1121, %v869
    %v1749 = vmul.f32 %v1128, %v869
    %v1750 = vmul.f32 %v1150, %v874
    %v1751 = vmul.f32 %v1151, %v874
    %v1752 = vmul.f32 %v1152, %v874
    %v1753 = vadd.f32 %v1747, %v1750
    %v1754 = vadd.f32 %v1748, %v1751
    %v1755 = vadd.f32 %v1749, %v1752
    %v1756 = vadd.f32 %v1744, %v1753
    %v1757 = vadd.f32 %v1745, %v1754
    %v1758 = vadd.f32 %v1746, %v1755
    %v1759 = vmul.f32 %v1187, %v885
    %v1760 = vmul.f32 %v1186, %v885
    %v1761 = vmul.f32 %v1188, %v885
    %v1762 = vmul.f32 %v1241, %v890
    %v1763 = vmul.f32 %v1240, %v890
    %v1764 = vmul.f32 %v1242, %v890
    %v1765 = vadd.f32 %v1759, %v1762
    %v1766 = vadd.f32 %v1760, %v1763
    %v1767 = vadd.f32 %v1761, %v1764
    %v1768 = vadd.f32 %v1756, %v1765
    %v1769 = vadd.f32 %v1757, %v1766
    %v1770 = vadd.f32 %v1758, %v1767
    %v1771 = vmul.f32 %v1196, %v901
    %v1772 = vmul.f32 %v1195, %v901
    %v1773 = vmul.f32 %v1197, %v901
    %v1774 = vmul.f32 %v1250, %v906
    %v1775 = vmul.f32 %v1249, %v906
    %v1776 = vmul.f32 %v1251, %v906
    %v1777 = vadd.f32 %v1771, %v1774
    %v1778 = vadd.f32 %v1772, %v1775
    %v1779 = vadd.f32 %v1773, %v1776
    %v1780 = vadd.f32 %v1768, %v1777
    %v1781 = vadd.f32 %v1769, %v1778
    %v1782 = vadd.f32 %v1770, %v1779
    %v1783 = vmul.f32 %v1205, %v917
    %v1784 = vmul.f32 %v1204, %v917
    %v1785 = vmul.f32 %v1206, %v917
    %v1786 = vmul.f32 %v1259, %v922
    %v1787 = vmul.f32 %v1258, %v922
    %v1788 = vmul.f32 %v1260, %v922
    %v1789 = vadd.f32 %v1783, %v1786
    %v1790 = vadd.f32 %v1784, %v1787
    %v1791 = vadd.f32 %v1785, %v1788
    %v1792 = vadd.f32 %v1780, %v1789
    %v1793 = vadd.f32 %v1781, %v1790
    %v1794 = vadd.f32 %v1782, %v1791
    %1795 = vrot.lane.b32.xlu0 %v1792, 90
    %v1796 = vpop.permute.xlu0 %1795
    %1797 = vrot.lane.b32.xlu0 %v1793, 90
    %v1798 = vpop.permute.xlu0 %1797
    %1799 = vrot.lane.b32.xlu0 %v1794, 90
    %v1800 = vpop.permute.xlu0 %1799
    %v1801 = vsel %vm938, %v1798, %v1800
    %v1802 = vsel %vm938, %v1796, %v1798
    %v1803 = vsel %vm938, %v1800, %v1796
    %v1804 = vadd.f32 %v1711, %v1802
    %v1805 = vadd.f32 %v1712, %v1801
    %v1806 = vadd.f32 %v1713, %v1803
    %v1807 = vmul.f32 %v1161, %v946
    %v1808 = vmul.f32 %v1160, %v946
    %v1809 = vmul.f32 %v1159, %v946
    %v1810 = vmul.f32 %v1215, %v951
    %v1811 = vmul.f32 %v1214, %v951
    %v1812 = vmul.f32 %v1213, %v951
    %v1813 = vadd.f32 %v1807, %v1810
    %v1814 = vadd.f32 %v1808, %v1811
    %v1815 = vadd.f32 %v1809, %v1812
    %v1816 = vmul.f32 %v1170, %v959
    %v1817 = vmul.f32 %v1169, %v959
    %v1818 = vmul.f32 %v1168, %v959
    %v1819 = vmul.f32 %v1224, %v964
    %v1820 = vmul.f32 %v1223, %v964
    %v1821 = vmul.f32 %v1222, %v964
    %v1822 = vadd.f32 %v1816, %v1819
    %v1823 = vadd.f32 %v1817, %v1820
    %v1824 = vadd.f32 %v1818, %v1821
    %v1825 = vadd.f32 %v1813, %v1822
    %v1826 = vadd.f32 %v1814, %v1823
    %v1827 = vadd.f32 %v1815, %v1824
    %v1828 = vmul.f32 %v1179, %v975
    %v1829 = vmul.f32 %v1178, %v975
    %v1830 = vmul.f32 %v1177, %v975
    %v1831 = vmul.f32 %v1233, %v980
    %v1832 = vmul.f32 %v1232, %v980
    %v1833 = vmul.f32 %v1231, %v980
    %v1834 = vadd.f32 %v1828, %v1831
    %v1835 = vadd.f32 %v1829, %v1832
    %v1836 = vadd.f32 %v1830, %v1833
    %v1837 = vadd.f32 %v1825, %v1834
    %v1838 = vadd.f32 %v1826, %v1835
    %v1839 = vadd.f32 %v1827, %v1836
    %v1840 = vmul.f32 %v1114, %v991
    %v1841 = vmul.f32 %v1121, %v991
    %v1842 = vmul.f32 %v1128, %v991
    %v1843 = vmul.f32 %v1150, %v996
    %v1844 = vmul.f32 %v1151, %v996
    %v1845 = vmul.f32 %v1152, %v996
    %v1846 = vadd.f32 %v1840, %v1843
    %v1847 = vadd.f32 %v1841, %v1844
    %v1848 = vadd.f32 %v1842, %v1845
    %v1849 = vadd.f32 %v1837, %v1846
    %v1850 = vadd.f32 %v1838, %v1847
    %v1851 = vadd.f32 %v1839, %v1848
    %v1852 = vmul.f32 %v1187, %v1007
    %v1853 = vmul.f32 %v1186, %v1007
    %v1854 = vmul.f32 %v1188, %v1007
    %v1855 = vmul.f32 %v1241, %v1012
    %v1856 = vmul.f32 %v1240, %v1012
    %v1857 = vmul.f32 %v1242, %v1012
    %v1858 = vadd.f32 %v1852, %v1855
    %v1859 = vadd.f32 %v1853, %v1856
    %v1860 = vadd.f32 %v1854, %v1857
    %v1861 = vadd.f32 %v1849, %v1858
    %v1862 = vadd.f32 %v1850, %v1859
    %v1863 = vadd.f32 %v1851, %v1860
    %v1864 = vmul.f32 %v1196, %v1023
    %v1865 = vmul.f32 %v1195, %v1023
    %v1866 = vmul.f32 %v1197, %v1023
    %v1867 = vmul.f32 %v1250, %v1028
    %v1868 = vmul.f32 %v1249, %v1028
    %v1869 = vmul.f32 %v1251, %v1028
    %v1870 = vadd.f32 %v1864, %v1867
    %v1871 = vadd.f32 %v1865, %v1868
    %v1872 = vadd.f32 %v1866, %v1869
    %v1873 = vadd.f32 %v1861, %v1870
    %v1874 = vadd.f32 %v1862, %v1871
    %v1875 = vadd.f32 %v1863, %v1872
    %v1876 = vmul.f32 %v1205, %v1039
    %v1877 = vmul.f32 %v1204, %v1039
    %v1878 = vmul.f32 %v1206, %v1039
    %v1879 = vmul.f32 %v1259, %v1044
    %v1880 = vmul.f32 %v1258, %v1044
    %v1881 = vmul.f32 %v1260, %v1044
    %v1882 = vadd.f32 %v1876, %v1879
    %v1883 = vadd.f32 %v1877, %v1880
    %v1884 = vadd.f32 %v1878, %v1881
    %v1885 = vadd.f32 %v1873, %v1882
    %v1886 = vadd.f32 %v1874, %v1883
    %v1887 = vadd.f32 %v1875, %v1884
    %1888 = vrot.lane.b32.xlu0 %v1885, 71
    %v1889 = vpop.permute.xlu0 %1888
    %1890 = vrot.lane.b32.xlu0 %v1886, 71
    %v1891 = vpop.permute.xlu0 %1890
    %1892 = vrot.lane.b32.xlu0 %v1887, 71
    %v1893 = vpop.permute.xlu0 %1892
    %v1894 = vsel %vm1060, %v1891, %v1893
    %v1895 = vsel %vm1060, %v1889, %v1891
    %v1896 = vsel %vm1060, %v1893, %v1889
    %v1897 = vadd.f32 %v1804, %v1895
    %v1898 = vadd.f32 %v1805, %v1894
    %v1899 = vadd.f32 %v1806, %v1896
    %v1900 = vmul.f32 %v1897, %v1071
    %v1901 = vmul.f32 %v1898, %v1075
    %v1902 = vmul.f32 %v1899, %v1079
    %v1903 = vsel %vm1086, %v1900, 0.0
    %v1904 = vsel %vm1086, %v1901, 0.0
    %v1905 = vadd.f32 %v1903, %v1904
    %v1906 = vsel %vm1086, %v1902, 0.0
    %v1907 = vadd.f32 %v1905, %v1906
    %1908 = vadd.xlane.f32.xlu0 %v1907
    %v1909 = vpop.xlane.xlu0 %1908
    %v1910 = vrot.slane %v1909, 4
    %v1911 = vadd.f32 %v1909, %v1910
    %v1912 = vrot.slane %v1911, 2
    %v1913 = vadd.f32 %v1911, %v1912
    %v1914 = vrot.slane %v1913, 1
    %v1915 = vadd.f32 %v1913, %v1914
    %s1916 = vtos %v1915
    %s1917 = sadd.f32 %s1101, %s1916
    %s1918 = smul.f32 %s1917, 0.001953125
    %v1919 = vstv %s1918
    %v1920 = vsub.f32 %v1064, %v1919
    %v1921 = vsub.f32 %v1065, %v1919
    %v1922 = vsub.f32 %v1066, %v1919
    %v1923 = vmul.f32 %v1920, %v1071
    %v1924 = vmul.f32 %v1921, %v1075
    %v1925 = vmul.f32 %v1922, %v1079
    %v1926 = vmul.f32 %v1923, %v1923
    %v1927 = vmul.f32 %v1924, %v1924
    %v1928 = vmul.f32 %v1925, %v1925
    %v1929 = vsel %vm1086, %v1926, 0.0
    %v1930 = vsel %vm1086, %v1927, 0.0
    %v1931 = vadd.f32 %v1929, %v1930
    %v1932 = vsel %vm1086, %v1928, 0.0
    %v1933 = vadd.f32 %v1931, %v1932
    %1934 = vadd.xlane.f32.xlu0 %v1933
    %v1935 = vpop.xlane.xlu0 %1934
    %v1936 = vrot.slane %v1935, 4
    %v1937 = vadd.f32 %v1935, %v1936
    %v1938 = vrot.slane %v1937, 2
    %v1939 = vadd.f32 %v1937, %v1938
    %v1940 = vrot.slane %v1939, 1
    %v1941 = vadd.f32 %v1939, %v1940
    %s1942 = vtos %v1941
    %s1943 = sadd.f32 %s1942, 0.0
    %v1944 = vsub.f32 %v1897, %v1919
    %v1945 = vsub.f32 %v1898, %v1919
    %v1946 = vsub.f32 %v1899, %v1919
    %v1947 = vmul.f32 %v1944, %v1071
    %v1948 = vmul.f32 %v1945, %v1075
    %v1949 = vmul.f32 %v1946, %v1079
    %v1950 = vmul.f32 %v1947, %v1947
    %v1951 = vmul.f32 %v1948, %v1948
    %v1952 = vmul.f32 %v1949, %v1949
    %v1953 = vsel %vm1086, %v1950, 0.0
    %v1954 = vsel %vm1086, %v1951, 0.0
    %v1955 = vadd.f32 %v1953, %v1954
    %v1956 = vsel %vm1086, %v1952, 0.0
    %v1957 = vadd.f32 %v1955, %v1956
    %1958 = vadd.xlane.f32.xlu0 %v1957
    %v1959 = vpop.xlane.xlu0 %1958
    %v1960 = vrot.slane %v1959, 4
    %v1961 = vadd.f32 %v1959, %v1960
    %v1962 = vrot.slane %v1961, 2
    %v1963 = vadd.f32 %v1961, %v1962
    %v1964 = vrot.slane %v1963, 1
    %v1965 = vadd.f32 %v1963, %v1964
    %s1966 = vtos %v1965
    %s1967 = sadd.f32 %s1943, %s1966
    %s1968 = smul.f32 %s1967, 0.001953125
    %s1969 = sadd.f32 %s1968, 1e-05
    %v1970 = vstv %s1969
    %v1971 = vrsqrt.pop %v1970
    %s1972 = vtos %v1971
    %s1973 = sld [smem:[#allocation7]]
    %s1974 = smul.f32 %s1972, %s1973
    %s1975 = sld [smem:[#allocation7 + $0x1]]
    %v1976 = vstv %s1974
    %v1977 = vmul.f32 %v1920, %v1976
    %v1978 = vmul.f32 %v1921, %v1976
    %v1979 = vmul.f32 %v1922, %v1976
    %v1980 = vstv %s1975
    %v1981 = vadd.f32 %v1977, %v1980
    %v1982 = vadd.f32 %v1978, %v1980
    %v1983 = vadd.f32 %v1979, %v1980
    %v1984 = vxor.u32 %v1981, 2147483648
    %v1985 = vxor.u32 %v1982, 2147483648
    %v1986 = vxor.u32 %v1983, 2147483648
    %v1987 = vmul.f32 %v1984, 1.442695
    %v1988 = vpow.pop %v1987
    %v1989 = vmul.f32 %v1985, 1.442695
    %v1990 = vpow.pop %v1989
    %v1991 = vmul.f32 %v1986, 1.442695
    %v1992 = vpow.pop %v1991
    %v1993 = vadd.f32 %v1988, 1.0
    %v1994 = vadd.f32 %v1990, 1.0
    %v1995 = vadd.f32 %v1992, 1.0
    %v1996 = vrcp.pop %v1993
    %v1997 = vmul.f32 1.0, %v1996
    %v1998 = vrcp.pop %v1994
    %v1999 = vmul.f32 1.0, %v1998
    %v2000 = vrcp.pop %v1995
    %v2001 = vmul.f32 1.0, %v2000
    %v2002 = vlaneseq
    %v2003 = vshrl.u32 %v2002, 7
    %v2004 = vsub.s32 0, %v2003
    %v2005 = vrot.slane %v1997, %v2004
    %v2006 = vlaneseq
    %v2007 = vshrl.u32 %v2006, 7
    %v2008 = vsub.s32 0, %v2007
    %v2009 = vrot.slane %v1999, %v2008
    %v2010 = vlaneseq
    %v2011 = vshrl.u32 %v2010, 7
    %v2012 = vsub.s32 0, %v2011
    %v2013 = vrot.slane %v2001, %v2012
    %v2016 = vcombine.low %v2005, %v2009
    %v2018 = vmul.f32 %v58, %v2016
    %v2019 = vmul.f32 %v59, %v2013
    %2020 = vst [vmem:[#allocation9] sm:$0xff] %v2018
    %2021 = vst [vmem:[#allocation9 + $0x8] sm:$0xf] %v2019
    %v2022 = vmul.f32 %v1944, %v1976
    %v2023 = vmul.f32 %v1945, %v1976
    %v2024 = vmul.f32 %v1946, %v1976
    %v2025 = vadd.f32 %v2022, %v1980
    %v2026 = vadd.f32 %v2023, %v1980
    %v2027 = vadd.f32 %v2024, %v1980
    %v2028 = vxor.u32 %v2025, 2147483648
    %v2029 = vxor.u32 %v2026, 2147483648
    %v2030 = vxor.u32 %v2027, 2147483648
    %v2031 = vmul.f32 %v2028, 1.442695
    %v2032 = vpow.pop %v2031
    %v2033 = vmul.f32 %v2029, 1.442695
    %v2034 = vpow.pop %v2033
    %v2035 = vmul.f32 %v2030, 1.442695
    %v2036 = vpow.pop %v2035
    %v2037 = vadd.f32 %v2032, 1.0
    %v2038 = vadd.f32 %v2034, 1.0
    %v2039 = vadd.f32 %v2036, 1.0
    %v2040 = vrcp.pop %v2037
    %v2041 = vmul.f32 1.0, %v2040
    %v2042 = vrcp.pop %v2038
    %v2043 = vmul.f32 1.0, %v2042
    %v2044 = vrcp.pop %v2039
    %v2045 = vmul.f32 1.0, %v2044
    %v2046 = vld [vmem:[%s1102] sm:$0xff]
    %v2047 = vld [vmem:[%s1102 + $0x8] sm:$0xf]
    %v2048 = vlaneseq
    %v2049 = vshrl.u32 %v2048, 7
    %v2050 = vsub.s32 0, %v2049
    %v2051 = vrot.slane %v2041, %v2050
    %v2052 = vlaneseq
    %v2053 = vshrl.u32 %v2052, 7
    %v2054 = vsub.s32 0, %v2053
    %v2055 = vrot.slane %v2043, %v2054
    %v2056 = vlaneseq
    %v2057 = vshrl.u32 %v2056, 7
    %v2058 = vsub.s32 0, %v2057
    %v2059 = vrot.slane %v2045, %v2058
    %v2062 = vcombine.low %v2051, %v2055
    %v2064 = vmul.f32 %v2046, %v2062
    %v2065 = vmul.f32 %v2047, %v2059
    %s2066 = scalar_lea.vmem [#allocation9], 12
    %2067 = vst [vmem:[%s2066] sm:$0xff] %v2064
    %2068 = vst [vmem:[%s2066 + $0x8] sm:$0xf] %v2065
    // Predicated region
    $region30: #{tpu_custom_call.1} parent=1 // pred_check
      _
    $region31: #{tpu_custom_call.1} parent=1 // pred_check_branch
      %2070 = sbr.rel (0) target = $region33
    $region32: #{tpu_custom_call.1} parent=1 // pred_region
      %s2072 = ssub.s32 384, 384
      %2073 = vsyncadd [#allocation4], %s2072
      %s2074 = sshll.u32 [#allocation9], 4
      %s2075 = int_to_ptr.vmem [resolvable:$true] %s2074
      %2080 = dma.vmem_to_hbm [thread:$0]  %s2075, 384, %s4, [#allocation4], 192, 192, 12
    $region33: #{tpu_custom_call.1} parent=1 // pred_fallthru
      _
    // Predicated region
    $region34: #{tpu_custom_call.1} parent=1 // pred_check
      _
    $region35: #{tpu_custom_call.1} parent=1 // pred_check_branch
      %2082 = sbr.rel (0) target = $region37
    $region36: #{tpu_custom_call.1} parent=1 // pred_region
      %2083 = dma.done [#allocation4], 384
    $region37: #{tpu_custom_call.1} parent=1 // pred_fallthru
      _
    %2084 = vsyncpa [#allocation3], 1
    %2085 = vsyncpa [#allocation4], 1
    %2086 = vsyncpa [#allocation5], 1
    %2087 = vsyncpa [#allocation8], 1

</llo_original>
